<compile_context>
chip_gen: v7x
topology: tpu7x:2x2x1
jax: 0.10.0
libtpu: 0.0.40
codegen_flags: <defaults>
</compile_context>

<pallas_src>
import functools

import numpy as np
import jax
import jax.numpy as jnp
from jax import lax
from jax.experimental import pallas as pl
from jax.experimental.pallas import tpu as pltpu

D_IN = 500        # fixed by nn.Linear(500, 1000)
H = 1000          # fixed by nn.Linear(1000, 1000)
D_IN_PAD = 512    # 500 -> 512  (multiple of 128)
H_PAD = 1024      # 1000 -> 1024
LANE = 128
SUBLANE = 16      # bf16 sublane packing
MAX_BATCH_TILE = 512


def _rup(v, m):
    return ((v + m - 1) // m) * m


def _pad2(a, rows, cols, dtype=None):
    a = jnp.asarray(a)
    out = jnp.pad(a, ((0, rows - a.shape[0]), (0, cols - a.shape[1])))
    return out.astype(dtype) if dtype is not None else out


# --------------------------------------------------------------------------------------
# Kernel 1: batch-tiled MLP  (x -> z),  bf16 weights resident in VMEM, f32 accumulation.
# --------------------------------------------------------------------------------------
def mlp_kernel(x_ref, w1_ref, b1_ref, w2_ref, b2_ref, w3_ref, b3_ref, z_ref):
    # TODO(synk): Dropout(0.1) is stochastic at train time; implemented as eval-mode identity.
    x = x_ref[...]                                                     # (TB, 512) bf16
    h1 = jnp.dot(x, w1_ref[...], preferred_element_type=jnp.float32) + b1_ref[...]
    h1 = jnp.maximum(h1, 0.0)                                          # f32 elementwise (v5e-safe)
    h2 = jnp.dot(h1.astype(jnp.bfloat16), w2_ref[...],
                 preferred_element_type=jnp.float32) + b2_ref[...]
    h2 = jnp.maximum(h2, 0.0)
    z_ref[...] = (jnp.dot(h2.astype(jnp.bfloat16), w3_ref[...],
                          preferred_element_type=jnp.float32) + b3_ref[...])


# --------------------------------------------------------------------------------------
# Kernel 2: attention + inference head on the full batch (softmax is over the batch axis).
# --------------------------------------------------------------------------------------
def head_kernel(z_ref, wq_ref, bq_ref, k_ref, m_ref, nbn_ref, ci_ref, out_ref,
                *, inv_sqrt_dw, valid_rows):
    z = z_ref[...]                                                     # (Bp, Dp) f32
    q = jnp.dot(z, wq_ref[...], preferred_element_type=jnp.float32) + bq_ref[...]
    logits = lax.dot_general(q, k_ref[...], (((1,), (1,)), ((), ())),
                             preferred_element_type=jnp.float32) * inv_sqrt_dw  # (Bp, Dp)
    # softmax over axis 0 (the batch dim), exactly as in the PyTorch code; padded batch
    # rows are masked out so they do not perturb the per-column normalization.
    row = lax.broadcasted_iota(jnp.int32, logits.shape, 0)
    logits = jnp.where(row < valid_rows, logits, jnp.float32(-1e30))
    m = jnp.max(logits, axis=0, keepdims=True)
    e = jnp.exp(logits - m)                                            # EUP (free slot)
    alpha = e * pl.reciprocal(jnp.sum(e, axis=0, keepdims=True), approx=True)
    out_ref[...] = (jnp.dot(z, m_ref[...], preferred_element_type=jnp.float32)
                    + jnp.dot(alpha, nbn_ref[...], preferred_element_type=jnp.float32)
                    + ci_ref[...])


# --------------------------------------------------------------------------------------
# Wrapper
# --------------------------------------------------------------------------------------
def dnn2word_semantic(x, params, word2vec_base, word2vec_novel, dw):
    """params: dict of (in,out)-layout weights and (1,out) biases (PyTorch weight.T)."""
    B = x.shape[0]
    Nb, D = word2vec_base.shape
    Nn = word2vec_novel.shape[0]
    # The PyTorch forward only type-checks when word2vec_base is square.
    assert Nb == D, "DNN2Word_Semantic forward requires Nb == word2vecDIM"

    f32 = jnp.float32
    Dp = _rup(D, LANE)
    dwp = _rup(dw, LANE)
    Nnp = _rup(Nn, LANE)

    Bp = _rup(B, SUBLANE)
    tb = min(MAX_BATCH_TILE, Bp)
    Bp = _rup(Bp, tb)

    # ---- kernel 1 inputs: zero-padded, bf16 weights / bf16 x / f32 biases ------------
    xp = _pad2(x, Bp, D_IN_PAD, jnp.bfloat16)
    w1p = _pad2(params["w1"], D_IN_PAD, H_PAD, jnp.bfloat16)
    b1p = _pad2(params["b1"], 1, H_PAD)
    w2p = _pad2(params["w2"], H_PAD, H_PAD, jnp.bfloat16)
    b2p = _pad2(params["b2"], 1, H_PAD)
    w3p = _pad2(params["w3"], H_PAD, Dp, jnp.bfloat16)
    b3p = _pad2(params["b3"], 1, Dp)

    const = lambda i: (0, 0)
    z = pl.pallas_call(
        mlp_kernel,
        out_shape=jax.ShapeDtypeStruct((Bp, Dp), f32),
        grid_spec=pltpu.PrefetchScalarGridSpec(
            num_scalar_prefetch=0,
            grid=(Bp // tb,),
            in_specs=[
                pl.BlockSpec((tb, D_IN_PAD), lambda i: (i, 0)),   # x tile
                pl.BlockSpec((D_IN_PAD, H_PAD), const),           # w1 (resident)
                pl.BlockSpec((1, H_PAD), const),                  # b1
                pl.BlockSpec((H_PAD, H_PAD), const),              # w2 (resident)
                pl.BlockSpec((1, H_PAD), const),                  # b2
                pl.BlockSpec((H_PAD, Dp), const),                 # w3 (resident)
                pl.BlockSpec((1, Dp), const),                     # b3
            ],
            out_specs=pl.BlockSpec((tb, Dp), lambda i: (i, 0)),
        ),
        compiler_params=pltpu.CompilerParams(
            dimension_semantics=("parallel",),
            vmem_limit_bytes=32 * 1024 * 1024,
        ),
    )(xp, w1p, b1p, w2p, b2p, w3p, b3p)

    # ---- host-side prefold of constant weight-only products (exact reassociation) ----
    base_t = word2vec_base.T.astype(f32)                                # (D, D)
    novel_t = word2vec_novel.T.astype(f32)                              # (D, Nn)
    k_mat = base_t @ params["wk"] + params["bk"]                        # (D, dw)
    m_total = base_t @ (base_t @ (params["wi"] @ novel_t)) + novel_t    # (D, Nn)
    n_bn = base_t @ novel_t                                             # (D, Nn)
    c_i = params["bi"] @ novel_t                                        # (1, Nn)

    wqp = _pad2(params["wq"], Dp, dwp)
    bqp = _pad2(params["bq"], 1, dwp)
    kp = _pad2(k_mat, Dp, dwp)
    mp = _pad2(m_total, Dp, Nnp)
    nbnp = _pad2(n_bn, Dp, Nnp)
    cip = _pad2(c_i, 1, Nnp)

    vmem = pl.BlockSpec(memory_space=pltpu.MemorySpace.VMEM)
    out_p = pl.pallas_call(
        functools.partial(head_kernel,
                          inv_sqrt_dw=1.0 / float(np.sqrt(dw)),
                          valid_rows=B),
        out_shape=jax.ShapeDtypeStruct((Bp, Nnp), f32),
        in_specs=[vmem] * 7,
        out_specs=vmem,
        compiler_params=pltpu.CompilerParams(
            vmem_limit_bytes=64 * 1024 * 1024,
        ),
    )(z, wqp, bqp, kp, mp, nbnp, cip)

    # Lane-dense padded slab -> the real (B, Nn) result.
    return out_p[:B, :Nn]


# --------------------------------------------------------------------------------------
# Pure-JAX reference (f32 everywhere, mirrors the PyTorch forward line by line)
# --------------------------------------------------------------------------------------
def reference(x, p, base, novel, dw):
    relu = lambda a: jnp.maximum(a, 0.0)
    z = relu(x @ p["w1"] + p["b1"])
    z = relu(z @ p["w2"] + p["b2"])
    z = z @ p["w3"] + p["b3"]
    p_b = z @ base.T
    p_i1 = p_b @ base.T
    p_i2 = p_i1 @ p["wi"] + p["bi"]
    p_i = p_i2 @ novel.T
    q = z @ p["wq"] + p["bq"]
    k = base.T @ p["wk"] + p["bk"]
    logits = (q @ k.T) / np.sqrt(dw)
    alpha = jax.nn.softmax(logits, axis=0)
    s = alpha @ base.T + z
    p_a = s @ novel.T
    return p_i + p_a


if __name__ == "__main__":
    # small, self-consistent shapes
    B = 2          # batch
    D = 32         # params.word2vecDIM
    DW = 16        # params.dw
    NB = D         # number of base classes (must equal D for the reference forward to type-check)
    NN = 16        # number of novel classes

    key = jax.random.PRNGKey(0)
    ks = jax.random.split(key, 16)

    def lin(kw, kb, fan_in, fan_out):
        w = (jax.random.normal(kw, (fan_in, fan_out), jnp.float32)
             / np.sqrt(fan_in)).astype(jnp.float32)
        b = (0.01 * jax.random.normal(kb, (1, fan_out), jnp.float32)).astype(jnp.float32)
        return w, b

    params = {}
    params["w1"], params["b1"] = lin(ks[0], ks[1], D_IN, H)
    params["w2"], params["b2"] = lin(ks[2], ks[3], H, H)
    params["w3"], params["b3"] = lin(ks[4], ks[5], H, D)
    params["wq"], params["bq"] = lin(ks[6], ks[7], D, DW)
    params["wk"], params["bk"] = lin(ks[8], ks[9], D, DW)
    params["wi"], params["bi"] = lin(ks[10], ks[11], D, D)

    x = jax.random.normal(ks[12], (B, D_IN), jnp.float32)
    word2vec_base = (jax.random.normal(ks[13], (NB, D), jnp.float32) / np.sqrt(D)).astype(jnp.float32)
    word2vec_novel = (jax.random.normal(ks[14], (NN, D), jnp.float32) / np.sqrt(D)).astype(jnp.float32)

    out = dnn2word_semantic(x, params, word2vec_base, word2vec_novel, DW)
    out = jax.block_until_ready(out)

    ref = jax.block_until_ready(reference(x, params, word2vec_base, word2vec_novel, DW))
    # bf16 MXU weights/activations (f32 accumulation) -> slightly looser tolerance vs f32 reference
    np.testing.assert_allclose(np.asarray(out), np.asarray(ref), rtol=5e-2, atol=1e-1)
    assert out.shape == (B, NN) and out.dtype == jnp.float32

    print("KERNEL_OK")
</pallas_src>

<mosaic_0001>
module attributes {stable_mosaic.version = 11 : i64} {
  func.func @mlp_kernel(%arg0: i32, %arg1: memref<16x512xbf16, #tpu.memory_space<vmem>>, %arg2: memref<512x1024xbf16, #tpu.memory_space<vmem>>, %arg3: memref<1x1024xf32, #tpu.memory_space<vmem>>, %arg4: memref<1024x1024xbf16, #tpu.memory_space<vmem>>, %arg5: memref<1x1024xf32, #tpu.memory_space<vmem>>, %arg6: memref<1024x128xbf16, #tpu.memory_space<vmem>>, %arg7: memref<1x128xf32, #tpu.memory_space<vmem>>, %arg8: memref<16x128xf32, #tpu.memory_space<vmem>>) attributes {dimension_semantics = [#tpu.dimension_semantics<parallel>], iteration_bounds = array<i64: 1>, scalar_prefetch = 0 : i64, scratch_operands = 0 : i64, tpu.core_type = #tpu.core_type<tc>, window_params = [{transform_indices = @transform_0, window_bounds = array<i64: 16, 512>}, {pipeline_mode = #tpu.pipeline_mode<synchronous>, transform_indices = @transform_1, window_bounds = array<i64: 512, 1024>}, {pipeline_mode = #tpu.pipeline_mode<synchronous>, transform_indices = @transform_2, window_bounds = array<i64: 1, 1024>}, {pipeline_mode = #tpu.pipeline_mode<synchronous>, transform_indices = @transform_3, window_bounds = array<i64: 1024, 1024>}, {pipeline_mode = #tpu.pipeline_mode<synchronous>, transform_indices = @transform_4, window_bounds = array<i64: 1, 1024>}, {pipeline_mode = #tpu.pipeline_mode<synchronous>, transform_indices = @transform_5, window_bounds = array<i64: 1024, 128>}, {pipeline_mode = #tpu.pipeline_mode<synchronous>, transform_indices = @transform_6, window_bounds = array<i64: 1, 128>}, {transform_indices = @transform_7, window_bounds = array<i64: 16, 128>}]} {
    %c0 = arith.constant 0 : index
    %c0_0 = arith.constant 0 : index
    %0 = vector.load %arg1[%c0, %c0_0] : memref<16x512xbf16, #tpu.memory_space<vmem>>, vector<16x512xbf16>
    %c0_1 = arith.constant 0 : index
    %c0_2 = arith.constant 0 : index
    %1 = vector.load %arg2[%c0_1, %c0_2] : memref<512x1024xbf16, #tpu.memory_space<vmem>>, vector<512x1024xbf16>
    %cst = arith.constant dense<0.000000e+00> : vector<16x1024xf32>
    %2 = tpu.matmul %0, %1, %cst {dimension_numbers = #tpu.dot_dimension_numbers<[1], [0], [0], [1], [0, 0, 1, 1], [], []>} : vector<16x512xbf16>, vector<512x1024xbf16>, vector<16x1024xf32> -> vector<16x1024xf32>
    %c0_3 = arith.constant 0 : index
    %c0_4 = arith.constant 0 : index
    %3 = vector.load %arg3[%c0_3, %c0_4] : memref<1x1024xf32, #tpu.memory_space<vmem>>, vector<1x1024xf32>
    %4 = vector.broadcast %3 : vector<1x1024xf32> to vector<16x1024xf32>
    %5 = arith.addf %2, %4 : vector<16x1024xf32>
    %cst_5 = arith.constant 0.000000e+00 : f32
    %6 = vector.broadcast %cst_5 : f32 to vector<16x1024xf32>
    %7 = arith.maximumf %5, %6 : vector<16x1024xf32>
    %8 = arith.truncf %7 : vector<16x1024xf32> to vector<16x1024xbf16>
    %c0_6 = arith.constant 0 : index
    %c0_7 = arith.constant 0 : index
    %9 = vector.load %arg4[%c0_6, %c0_7] : memref<1024x1024xbf16, #tpu.memory_space<vmem>>, vector<1024x1024xbf16>
    %cst_8 = arith.constant dense<0.000000e+00> : vector<16x1024xf32>
    %10 = tpu.matmul %8, %9, %cst_8 {dimension_numbers = #tpu.dot_dimension_numbers<[1], [0], [0], [1], [0, 0, 1, 1], [], []>} : vector<16x1024xbf16>, vector<1024x1024xbf16>, vector<16x1024xf32> -> vector<16x1024xf32>
    %c0_9 = arith.constant 0 : index
    %c0_10 = arith.constant 0 : index
    %11 = vector.load %arg5[%c0_9, %c0_10] : memref<1x1024xf32, #tpu.memory_space<vmem>>, vector<1x1024xf32>
    %12 = vector.broadcast %11 : vector<1x1024xf32> to vector<16x1024xf32>
    %13 = arith.addf %10, %12 : vector<16x1024xf32>
    %cst_11 = arith.constant 0.000000e+00 : f32
    %14 = vector.broadcast %cst_11 : f32 to vector<16x1024xf32>
    %15 = arith.maximumf %13, %14 : vector<16x1024xf32>
    %16 = arith.truncf %15 : vector<16x1024xf32> to vector<16x1024xbf16>
    %c0_12 = arith.constant 0 : index
    %c0_13 = arith.constant 0 : index
    %17 = vector.load %arg6[%c0_12, %c0_13] : memref<1024x128xbf16, #tpu.memory_space<vmem>>, vector<1024x128xbf16>
    %cst_14 = arith.constant dense<0.000000e+00> : vector<16x128xf32>
    %18 = tpu.matmul %16, %17, %cst_14 {dimension_numbers = #tpu.dot_dimension_numbers<[1], [0], [0], [1], [0, 0, 1, 1], [], []>} : vector<16x1024xbf16>, vector<1024x128xbf16>, vector<16x128xf32> -> vector<16x128xf32>
    %c0_15 = arith.constant 0 : index
    %c0_16 = arith.constant 0 : index
    %19 = vector.load %arg7[%c0_15, %c0_16] : memref<1x128xf32, #tpu.memory_space<vmem>>, vector<1x128xf32>
    %20 = vector.broadcast %19 : vector<1x128xf32> to vector<16x128xf32>
    %21 = arith.addf %18, %20 : vector<16x128xf32>
    %c0_17 = arith.constant 0 : index
    %c0_18 = arith.constant 0 : index
    %22 = vector.load %arg8[%c0_17, %c0_18] : memref<16x128xf32, #tpu.memory_space<vmem>>, vector<16x128xf32>
    tpu.vector_store %arg8[%c0_17, %c0_18], %21 {strides = array<i32>} : memref<16x128xf32, #tpu.memory_space<vmem>>, vector<16x128xf32>,
    return
  }
  func.func @transform_0(%arg0: i32) -> (i32, i32) {
    %c0_i32 = arith.constant 0 : i32
    %c0_i32_0 = arith.constant 0 : i32
    return %arg0, %c0_i32 : i32, i32
  }
  func.func @transform_1(%arg0: i32) -> (i32, i32) {
    %c0_i32 = arith.constant 0 : i32
    %c0_i32_0 = arith.constant 0 : i32
    %c0_i32_1 = arith.constant 0 : i32
    return %c0_i32, %c0_i32_0 : i32, i32
  }
  func.func @transform_2(%arg0: i32) -> (i32, i32) {
    %c0_i32 = arith.constant 0 : i32
    %c0_i32_0 = arith.constant 0 : i32
    %c0_i32_1 = arith.constant 0 : i32
    return %c0_i32, %c0_i32_0 : i32, i32
  }
  func.func @transform_3(%arg0: i32) -> (i32, i32) {
    %c0_i32 = arith.constant 0 : i32
    %c0_i32_0 = arith.constant 0 : i32
    %c0_i32_1 = arith.constant 0 : i32
    return %c0_i32, %c0_i32_0 : i32, i32
  }
  func.func @transform_4(%arg0: i32) -> (i32, i32) {
    %c0_i32 = arith.constant 0 : i32
    %c0_i32_0 = arith.constant 0 : i32
    %c0_i32_1 = arith.constant 0 : i32
    return %c0_i32, %c0_i32_0 : i32, i32
  }
  func.func @transform_5(%arg0: i32) -> (i32, i32) {
    %c0_i32 = arith.constant 0 : i32
    %c0_i32_0 = arith.constant 0 : i32
    %c0_i32_1 = arith.constant 0 : i32
    return %c0_i32, %c0_i32_0 : i32, i32
  }
  func.func @transform_6(%arg0: i32) -> (i32, i32) {
    %c0_i32 = arith.constant 0 : i32
    %c0_i32_0 = arith.constant 0 : i32
    %c0_i32_1 = arith.constant 0 : i32
    return %c0_i32, %c0_i32_0 : i32, i32
  }
  func.func @transform_7(%arg0: i32) -> (i32, i32) {
    %c0_i32 = arith.constant 0 : i32
    %c0_i32_0 = arith.constant 0 : i32
    return %arg0, %c0_i32 : i32, i32
  }
}

</mosaic_0001>

<llo_original>
// kernel: tpu_custom_call.1
$region0: #{tpu_custom_call.1}
  #allocation0 [shape = 'u32[]', space=smem, size = 0x4, offset = 0x4, fixed_abs, tag = 'smem constant byte address 0x4 - core index']
  #allocation1 [shape = 'u32[144,128]{1,0:T(1,128)}', space=vmem, size = 0x12000, scoped, tag = 'internal scratch']
  %s0 = inlined_call_operand.hbm [shape: bf16[16,512], index: 0, kind: input, shape index: {}]
  %s1 = inlined_call_operand.hbm [shape: bf16[512,1024], index: 1, kind: input, shape index: {}]
  %s2 = inlined_call_operand.hbm [shape: f32[1,1024], index: 2, kind: input, shape index: {}]
  %s3 = inlined_call_operand.hbm [shape: bf16[1024,1024], index: 3, kind: input, shape index: {}]
  %s4 = inlined_call_operand.hbm [shape: f32[1,1024], index: 4, kind: input, shape index: {}]
  %s5 = inlined_call_operand.hbm [shape: bf16[1024,128], index: 5, kind: input, shape index: {}]
  %s6 = inlined_call_operand.hbm [shape: f32[1,128], index: 6, kind: input, shape index: {}]
  %s7 = inlined_call_operand.hbm [shape: f32[16,128], index: 7, kind: output, shape index: {}]
  %s8 = sld [smem:[#allocation0]]
  $region66: #{tpu_custom_call.1} parent=0
    _
  %s10 = ssub.s32 1, %s8
  %s11 = scalar_select 0, %s10, %s8
  $region1: #{tpu_custom_call.1} parent=0
    #allocation2 [shape = 'u8[16384]{0}', space=vmem, size = 0x4000, scoped, tag = 'input window, operand 0, single buffered']
    #allocation3 [shape = 's32[1]{0}', space=sflag, size = 0x4, scoped, tag = 'scoped memory for tpu_custom_call.1']
    #allocation4 [shape = 's32[1]{0}', space=sflag, size = 0x4, scoped, tag = 'scoped memory for tpu_custom_call.1']
    #allocation5 [shape = 'u8[1048576]{0}', space=vmem, size = 0x100000, scoped, tag = 'input window, operand 1, single buffered']
    #allocation6 [shape = 's32[1]{0}', space=sflag, size = 0x4, scoped, tag = 'scoped memory for tpu_custom_call.1']
    #allocation7 [shape = 'u8[4096]{0}', space=vmem, size = 0x1000, scoped, tag = 'input window, operand 2, single buffered']
    #allocation8 [shape = 'u8[2097152]{0}', space=vmem, size = 0x200000, scoped, tag = 'input window, operand 3, single buffered']
    #allocation9 [shape = 's32[1]{0}', space=sflag, size = 0x4, scoped, tag = 'scoped memory for tpu_custom_call.1']
    #allocation10 [shape = 'u8[4096]{0}', space=vmem, size = 0x1000, scoped, tag = 'input window, operand 4, single buffered']
    #allocation11 [shape = 'u8[262144]{0}', space=vmem, size = 0x40000, scoped, tag = 'input window, operand 5, single buffered']
    #allocation12 [shape = 's32[1]{0}', space=sflag, size = 0x4, scoped, tag = 'scoped memory for tpu_custom_call.1']
    #allocation13 [shape = 'u8[512]{0}', space=vmem, size = 0x400, scoped, tag = 'input window, operand 6, single buffered']
    #allocation14 [shape = 'u8[8192]{0}', space=vmem, size = 0x2000, scoped, tag = 'output window, operand 0, single buffered']
    %12 = vsyncpa [#allocation3], 0
    %13 = vsyncpa [#allocation6], 0
    %14 = vsyncpa [#allocation9], 0
    %15 = vsyncpa [#allocation12], 0
    %16 = vsyncpa [#allocation4], 0
    // Predicated region
    $region2: #{tpu_custom_call.1} parent=1 // pred_check
      _
    $region3: #{tpu_custom_call.1} parent=1 // pred_check_branch
      %18 = sbr.rel (0) target = $region5
    $region4: #{tpu_custom_call.1} parent=1 // pred_region
      %s20 = ssub.s32 512, 512
      %21 = vsyncadd [#allocation3], %s20
      %s22 = sshll.u32 [#allocation2], 4
      %s23 = int_to_ptr.vmem [resolvable:$true] %s22
      %28 = dma.hbm_to_vmem [thread:$0]  %s0, 512, %s23, [#allocation3], 256, 256, 16
    $region5: #{tpu_custom_call.1} parent=1 // pred_fallthru
      _
    // Predicated region
    $region6: #{tpu_custom_call.1} parent=1 // pred_check
      _
    $region7: #{tpu_custom_call.1} parent=1 // pred_check_branch
      %30 = sbr.rel (0) target = $region9
    $region8: #{tpu_custom_call.1} parent=1 // pred_region
      %s32 = ssub.s32 32768, 32768
      %33 = vsyncadd [#allocation6], %s32
      %s34 = sshll.u32 [#allocation5], 4
      %s35 = int_to_ptr.vmem [resolvable:$true] %s34
      %40 = dma.hbm_to_vmem [thread:$0]  %s1, 32768, %s35, [#allocation6], 512, 512, 32
    $region9: #{tpu_custom_call.1} parent=1 // pred_fallthru
      _
    // Predicated region
    $region10: #{tpu_custom_call.1} parent=1 // pred_check
      _
    $region11: #{tpu_custom_call.1} parent=1 // pred_check_branch
      %42 = sbr.rel (0) target = $region13
    $region12: #{tpu_custom_call.1} parent=1 // pred_region
      %s44 = ssub.s32 128, 128
      %45 = vsyncadd [#allocation6], %s44
      %s47 = sshll.u32 [#allocation7], 4
      %s48 = int_to_ptr.vmem [resolvable:$true] %s47
      %50 = dma.hbm_to_vmem [thread:$0]  %s2, 128, %s48, [#allocation6]
    $region13: #{tpu_custom_call.1} parent=1 // pred_fallthru
      _
    // Predicated region
    $region14: #{tpu_custom_call.1} parent=1 // pred_check
      _
    $region15: #{tpu_custom_call.1} parent=1 // pred_check_branch
      %52 = sbr.rel (0) target = $region17
    $region16: #{tpu_custom_call.1} parent=1 // pred_region
      %s54 = ssub.s32 65536, 65536
      %55 = vsyncadd [#allocation9], %s54
      %s56 = sshll.u32 [#allocation8], 4
      %s57 = int_to_ptr.vmem [resolvable:$true] %s56
      %62 = dma.hbm_to_vmem [thread:$0]  %s3, 65536, %s57, [#allocation9], 512, 512, 32
    $region17: #{tpu_custom_call.1} parent=1 // pred_fallthru
      _
    // Predicated region
    $region18: #{tpu_custom_call.1} parent=1 // pred_check
      _
    $region19: #{tpu_custom_call.1} parent=1 // pred_check_branch
      %64 = sbr.rel (0) target = $region21
    $region20: #{tpu_custom_call.1} parent=1 // pred_region
      %s66 = ssub.s32 128, 128
      %67 = vsyncadd [#allocation9], %s66
      %s69 = sshll.u32 [#allocation10], 4
      %s70 = int_to_ptr.vmem [resolvable:$true] %s69
      %72 = dma.hbm_to_vmem [thread:$0]  %s4, 128, %s70, [#allocation9]
    $region21: #{tpu_custom_call.1} parent=1 // pred_fallthru
      _
    // Predicated region
    $region22: #{tpu_custom_call.1} parent=1 // pred_check
      _
    $region23: #{tpu_custom_call.1} parent=1 // pred_check_branch
      %74 = sbr.rel (0) target = $region25
    $region24: #{tpu_custom_call.1} parent=1 // pred_region
      %s76 = ssub.s32 8192, 8192
      %77 = vsyncadd [#allocation12], %s76
      %s78 = sshll.u32 [#allocation11], 4
      %s79 = int_to_ptr.vmem [resolvable:$true] %s78
      %84 = dma.hbm_to_vmem [thread:$0]  %s5, 8192, %s79, [#allocation12], 64, 64, 4
    $region25: #{tpu_custom_call.1} parent=1 // pred_fallthru
      _
    // Predicated region
    $region26: #{tpu_custom_call.1} parent=1 // pred_check
      _
    $region27: #{tpu_custom_call.1} parent=1 // pred_check_branch
      %86 = sbr.rel (0) target = $region29
    $region28: #{tpu_custom_call.1} parent=1 // pred_region
      %s88 = ssub.s32 16, 16
      %89 = vsyncadd [#allocation12], %s88
      %s91 = sshll.u32 [#allocation13], 4
      %s92 = int_to_ptr.vmem [resolvable:$true] %s91
      %94 = dma.hbm_to_vmem [thread:$0]  %s6, 16, %s92, [#allocation12]
    $region29: #{tpu_custom_call.1} parent=1 // pred_fallthru
      _
    // Predicated region
    $region30: #{tpu_custom_call.1} parent=1 // pred_check
      _
    $region31: #{tpu_custom_call.1} parent=1 // pred_check_branch
      %96 = sbr.rel (0) target = $region33
    $region32: #{tpu_custom_call.1} parent=1 // pred_region
      %97 = dma.done [#allocation3], 512
    $region33: #{tpu_custom_call.1} parent=1 // pred_fallthru
      _
    // Predicated region
    $region34: #{tpu_custom_call.1} parent=1 // pred_check
      _
    $region35: #{tpu_custom_call.1} parent=1 // pred_check_branch
      %99 = sbr.rel (0) target = $region37
    $region36: #{tpu_custom_call.1} parent=1 // pred_region
      %100 = dma.done [#allocation6], 32768
    $region37: #{tpu_custom_call.1} parent=1 // pred_fallthru
      _
    // Predicated region
    $region38: #{tpu_custom_call.1} parent=1 // pred_check
      _
    $region39: #{tpu_custom_call.1} parent=1 // pred_check_branch
      %102 = sbr.rel (0) target = $region41
    $region40: #{tpu_custom_call.1} parent=1 // pred_region
      %103 = dma.done [#allocation6], 128
    $region41: #{tpu_custom_call.1} parent=1 // pred_fallthru
      _
    // Predicated region
    $region42: #{tpu_custom_call.1} parent=1 // pred_check
      _
    $region43: #{tpu_custom_call.1} parent=1 // pred_check_branch
      %105 = sbr.rel (0) target = $region45
    $region44: #{tpu_custom_call.1} parent=1 // pred_region
      %106 = dma.done [#allocation9], 65536
    $region45: #{tpu_custom_call.1} parent=1 // pred_fallthru
      _
    // Predicated region
    $region46: #{tpu_custom_call.1} parent=1 // pred_check
      _
    $region47: #{tpu_custom_call.1} parent=1 // pred_check_branch
      %108 = sbr.rel (0) target = $region49
    $region48: #{tpu_custom_call.1} parent=1 // pred_region
      %109 = dma.done [#allocation9], 128
    $region49: #{tpu_custom_call.1} parent=1 // pred_fallthru
      _
    // Predicated region
    $region50: #{tpu_custom_call.1} parent=1 // pred_check
      _
    $region51: #{tpu_custom_call.1} parent=1 // pred_check_branch
      %111 = sbr.rel (0) target = $region53
    $region52: #{tpu_custom_call.1} parent=1 // pred_region
      %112 = dma.done [#allocation12], 8192
    $region53: #{tpu_custom_call.1} parent=1 // pred_fallthru
      _
    // Predicated region
    $region54: #{tpu_custom_call.1} parent=1 // pred_check
      _
    $region55: #{tpu_custom_call.1} parent=1 // pred_check_branch
      %114 = sbr.rel (0) target = $region57
    $region56: #{tpu_custom_call.1} parent=1 // pred_region
      %115 = dma.done [#allocation12], 16
    $region57: #{tpu_custom_call.1} parent=1 // pred_fallthru
      _
    %v117 = vld [vmem:[#allocation2] sm:$0xff]
    %v118 = vld [vmem:[#allocation2 + $0x8] sm:$0xff]
    %v119 = vld [vmem:[#allocation2 + $0x10] sm:$0xff]
    %v120 = vld [vmem:[#allocation2 + $0x18] sm:$0xff]
    %v121 = vld [vmem:[#allocation5] sm:$0xff]
    %v122 = vld [vmem:[#allocation5 + $0x8] sm:$0xff]
    %v123 = vld [vmem:[#allocation5 + $0x10] sm:$0xff]
    %v124 = vld [vmem:[#allocation5 + $0x18] sm:$0xff]
    %v125 = vld [vmem:[#allocation5 + $0x20] sm:$0xff]
    %v126 = vld [vmem:[#allocation5 + $0x28] sm:$0xff]
    %v127 = vld [vmem:[#allocation5 + $0x30] sm:$0xff]
    %v128 = vld [vmem:[#allocation5 + $0x38] sm:$0xff]
    %v129 = vld [vmem:[#allocation5 + $0x40] sm:$0xff]
    %v130 = vld [vmem:[#allocation5 + $0x48] sm:$0xff]
    %v131 = vld [vmem:[#allocation5 + $0x50] sm:$0xff]
    %v132 = vld [vmem:[#allocation5 + $0x58] sm:$0xff]
    %v133 = vld [vmem:[#allocation5 + $0x60] sm:$0xff]
    %v134 = vld [vmem:[#allocation5 + $0x68] sm:$0xff]
    %v135 = vld [vmem:[#allocation5 + $0x70] sm:$0xff]
    %v136 = vld [vmem:[#allocation5 + $0x78] sm:$0xff]
    %v137 = vld [vmem:[#allocation5 + $0x80] sm:$0xff]
    %v138 = vld [vmem:[#allocation5 + $0x88] sm:$0xff]
    %v139 = vld [vmem:[#allocation5 + $0x90] sm:$0xff]
    %v140 = vld [vmem:[#allocation5 + $0x98] sm:$0xff]
    %v141 = vld [vmem:[#allocation5 + $0xa0] sm:$0xff]
    %v142 = vld [vmem:[#allocation5 + $0xa8] sm:$0xff]
    %v143 = vld [vmem:[#allocation5 + $0xb0] sm:$0xff]
    %v144 = vld [vmem:[#allocation5 + $0xb8] sm:$0xff]
    %v145 = vld [vmem:[#allocation5 + $0xc0] sm:$0xff]
    %v146 = vld [vmem:[#allocation5 + $0xc8] sm:$0xff]
    %v147 = vld [vmem:[#allocation5 + $0xd0] sm:$0xff]
    %v148 = vld [vmem:[#allocation5 + $0xd8] sm:$0xff]
    %v149 = vld [vmem:[#allocation5 + $0xe0] sm:$0xff]
    %v150 = vld [vmem:[#allocation5 + $0xe8] sm:$0xff]
    %v151 = vld [vmem:[#allocation5 + $0xf0] sm:$0xff]
    %v152 = vld [vmem:[#allocation5 + $0xf8] sm:$0xff]
    %v153 = vld [vmem:[#allocation5 + $0x100] sm:$0xff]
    %v154 = vld [vmem:[#allocation5 + $0x108] sm:$0xff]
    %v155 = vld [vmem:[#allocation5 + $0x110] sm:$0xff]
    %v156 = vld [vmem:[#allocation5 + $0x118] sm:$0xff]
    %v157 = vld [vmem:[#allocation5 + $0x120] sm:$0xff]
    %v158 = vld [vmem:[#allocation5 + $0x128] sm:$0xff]
    %v159 = vld [vmem:[#allocation5 + $0x130] sm:$0xff]
    %v160 = vld [vmem:[#allocation5 + $0x138] sm:$0xff]
    %v161 = vld [vmem:[#allocation5 + $0x140] sm:$0xff]
    %v162 = vld [vmem:[#allocation5 + $0x148] sm:$0xff]
    %v163 = vld [vmem:[#allocation5 + $0x150] sm:$0xff]
    %v164 = vld [vmem:[#allocation5 + $0x158] sm:$0xff]
    %v165 = vld [vmem:[#allocation5 + $0x160] sm:$0xff]
    %v166 = vld [vmem:[#allocation5 + $0x168] sm:$0xff]
    %v167 = vld [vmem:[#allocation5 + $0x170] sm:$0xff]
    %v168 = vld [vmem:[#allocation5 + $0x178] sm:$0xff]
    %v169 = vld [vmem:[#allocation5 + $0x180] sm:$0xff]
    %v170 = vld [vmem:[#allocation5 + $0x188] sm:$0xff]
    %v171 = vld [vmem:[#allocation5 + $0x190] sm:$0xff]
    %v172 = vld [vmem:[#allocation5 + $0x198] sm:$0xff]
    %v173 = vld [vmem:[#allocation5 + $0x1a0] sm:$0xff]
    %v174 = vld [vmem:[#allocation5 + $0x1a8] sm:$0xff]
    %v175 = vld [vmem:[#allocation5 + $0x1b0] sm:$0xff]
    %v176 = vld [vmem:[#allocation5 + $0x1b8] sm:$0xff]
    %v177 = vld [vmem:[#allocation5 + $0x1c0] sm:$0xff]
    %v178 = vld [vmem:[#allocation5 + $0x1c8] sm:$0xff]
    %v179 = vld [vmem:[#allocation5 + $0x1d0] sm:$0xff]
    %v180 = vld [vmem:[#allocation5 + $0x1d8] sm:$0xff]
    %v181 = vld [vmem:[#allocation5 + $0x1e0] sm:$0xff]
    %v182 = vld [vmem:[#allocation5 + $0x1e8] sm:$0xff]
    %v183 = vld [vmem:[#allocation5 + $0x1f0] sm:$0xff]
    %v184 = vld [vmem:[#allocation5 + $0x1f8] sm:$0xff]
    %v185 = vld [vmem:[#allocation5 + $0x200] sm:$0xff]
    %v186 = vld [vmem:[#allocation5 + $0x208] sm:$0xff]
    %v187 = vld [vmem:[#allocation5 + $0x210] sm:$0xff]
    %v188 = vld [vmem:[#allocation5 + $0x218] sm:$0xff]
    %v189 = vld [vmem:[#allocation5 + $0x220] sm:$0xff]
    %v190 = vld [vmem:[#allocation5 + $0x228] sm:$0xff]
    %v191 = vld [vmem:[#allocation5 + $0x230] sm:$0xff]
    %v192 = vld [vmem:[#allocation5 + $0x238] sm:$0xff]
    %v193 = vld [vmem:[#allocation5 + $0x240] sm:$0xff]
    %v194 = vld [vmem:[#allocation5 + $0x248] sm:$0xff]
    %v195 = vld [vmem:[#allocation5 + $0x250] sm:$0xff]
    %v196 = vld [vmem:[#allocation5 + $0x258] sm:$0xff]
    %v197 = vld [vmem:[#allocation5 + $0x260] sm:$0xff]
    %v198 = vld [vmem:[#allocation5 + $0x268] sm:$0xff]
    %v199 = vld [vmem:[#allocation5 + $0x270] sm:$0xff]
    %v200 = vld [vmem:[#allocation5 + $0x278] sm:$0xff]
    %v201 = vld [vmem:[#allocation5 + $0x280] sm:$0xff]
    %v202 = vld [vmem:[#allocation5 + $0x288] sm:$0xff]
    %v203 = vld [vmem:[#allocation5 + $0x290] sm:$0xff]
    %v204 = vld [vmem:[#allocation5 + $0x298] sm:$0xff]
    %v205 = vld [vmem:[#allocation5 + $0x2a0] sm:$0xff]
    %v206 = vld [vmem:[#allocation5 + $0x2a8] sm:$0xff]
    %v207 = vld [vmem:[#allocation5 + $0x2b0] sm:$0xff]
    %v208 = vld [vmem:[#allocation5 + $0x2b8] sm:$0xff]
    %v209 = vld [vmem:[#allocation5 + $0x2c0] sm:$0xff]
    %v210 = vld [vmem:[#allocation5 + $0x2c8] sm:$0xff]
    %v211 = vld [vmem:[#allocation5 + $0x2d0] sm:$0xff]
    %v212 = vld [vmem:[#allocation5 + $0x2d8] sm:$0xff]
    %v213 = vld [vmem:[#allocation5 + $0x2e0] sm:$0xff]
    %v214 = vld [vmem:[#allocation5 + $0x2e8] sm:$0xff]
    %v215 = vld [vmem:[#allocation5 + $0x2f0] sm:$0xff]
    %v216 = vld [vmem:[#allocation5 + $0x2f8] sm:$0xff]
    %v217 = vld [vmem:[#allocation5 + $0x300] sm:$0xff]
    %v218 = vld [vmem:[#allocation5 + $0x308] sm:$0xff]
    %v219 = vld [vmem:[#allocation5 + $0x310] sm:$0xff]
    %v220 = vld [vmem:[#allocation5 + $0x318] sm:$0xff]
    %v221 = vld [vmem:[#allocation5 + $0x320] sm:$0xff]
    %v222 = vld [vmem:[#allocation5 + $0x328] sm:$0xff]
    %v223 = vld [vmem:[#allocation5 + $0x330] sm:$0xff]
    %v224 = vld [vmem:[#allocation5 + $0x338] sm:$0xff]
    %v225 = vld [vmem:[#allocation5 + $0x340] sm:$0xff]
    %v226 = vld [vmem:[#allocation5 + $0x348] sm:$0xff]
    %v227 = vld [vmem:[#allocation5 + $0x350] sm:$0xff]
    %v228 = vld [vmem:[#allocation5 + $0x358] sm:$0xff]
    %v229 = vld [vmem:[#allocation5 + $0x360] sm:$0xff]
    %v230 = vld [vmem:[#allocation5 + $0x368] sm:$0xff]
    %v231 = vld [vmem:[#allocation5 + $0x370] sm:$0xff]
    %v232 = vld [vmem:[#allocation5 + $0x378] sm:$0xff]
    %v233 = vld [vmem:[#allocation5 + $0x380] sm:$0xff]
    %v234 = vld [vmem:[#allocation5 + $0x388] sm:$0xff]
    %v235 = vld [vmem:[#allocation5 + $0x390] sm:$0xff]
    %v236 = vld [vmem:[#allocation5 + $0x398] sm:$0xff]
    %v237 = vld [vmem:[#allocation5 + $0x3a0] sm:$0xff]
    %v238 = vld [vmem:[#allocation5 + $0x3a8] sm:$0xff]
    %v239 = vld [vmem:[#allocation5 + $0x3b0] sm:$0xff]
    %v240 = vld [vmem:[#allocation5 + $0x3b8] sm:$0xff]
    %v241 = vld [vmem:[#allocation5 + $0x3c0] sm:$0xff]
    %v242 = vld [vmem:[#allocation5 + $0x3c8] sm:$0xff]
    %v243 = vld [vmem:[#allocation5 + $0x3d0] sm:$0xff]
    %v244 = vld [vmem:[#allocation5 + $0x3d8] sm:$0xff]
    %v245 = vld [vmem:[#allocation5 + $0x3e0] sm:$0xff]
    %v246 = vld [vmem:[#allocation5 + $0x3e8] sm:$0xff]
    %v247 = vld [vmem:[#allocation5 + $0x3f0] sm:$0xff]
    %v248 = vld [vmem:[#allocation5 + $0x3f8] sm:$0xff]
    %v249 = vld [vmem:[#allocation5 + $0x400] sm:$0xff]
    %v250 = vld [vmem:[#allocation5 + $0x408] sm:$0xff]
    %v251 = vld [vmem:[#allocation5 + $0x410] sm:$0xff]
    %v252 = vld [vmem:[#allocation5 + $0x418] sm:$0xff]
    %v253 = vld [vmem:[#allocation5 + $0x420] sm:$0xff]
    %v254 = vld [vmem:[#allocation5 + $0x428] sm:$0xff]
    %v255 = vld [vmem:[#allocation5 + $0x430] sm:$0xff]
    %v256 = vld [vmem:[#allocation5 + $0x438] sm:$0xff]
    %v257 = vld [vmem:[#allocation5 + $0x440] sm:$0xff]
    %v258 = vld [vmem:[#allocation5 + $0x448] sm:$0xff]
    %v259 = vld [vmem:[#allocation5 + $0x450] sm:$0xff]
    %v260 = vld [vmem:[#allocation5 + $0x458] sm:$0xff]
    %v261 = vld [vmem:[#allocation5 + $0x460] sm:$0xff]
    %v262 = vld [vmem:[#allocation5 + $0x468] sm:$0xff]
    %v263 = vld [vmem:[#allocation5 + $0x470] sm:$0xff]
    %v264 = vld [vmem:[#allocation5 + $0x478] sm:$0xff]
    %v265 = vld [vmem:[#allocation5 + $0x480] sm:$0xff]
    %v266 = vld [vmem:[#allocation5 + $0x488] sm:$0xff]
    %v267 = vld [vmem:[#allocation5 + $0x490] sm:$0xff]
    %v268 = vld [vmem:[#allocation5 + $0x498] sm:$0xff]
    %v269 = vld [vmem:[#allocation5 + $0x4a0] sm:$0xff]
    %v270 = vld [vmem:[#allocation5 + $0x4a8] sm:$0xff]
    %v271 = vld [vmem:[#allocation5 + $0x4b0] sm:$0xff]
    %v272 = vld [vmem:[#allocation5 + $0x4b8] sm:$0xff]
    %v273 = vld [vmem:[#allocation5 + $0x4c0] sm:$0xff]
    %v274 = vld [vmem:[#allocation5 + $0x4c8] sm:$0xff]
    %v275 = vld [vmem:[#allocation5 + $0x4d0] sm:$0xff]
    %v276 = vld [vmem:[#allocation5 + $0x4d8] sm:$0xff]
    %v277 = vld [vmem:[#allocation5 + $0x4e0] sm:$0xff]
    %v278 = vld [vmem:[#allocation5 + $0x4e8] sm:$0xff]
    %v279 = vld [vmem:[#allocation5 + $0x4f0] sm:$0xff]
    %v280 = vld [vmem:[#allocation5 + $0x4f8] sm:$0xff]
    %v281 = vld [vmem:[#allocation5 + $0x500] sm:$0xff]
    %v282 = vld [vmem:[#allocation5 + $0x508] sm:$0xff]
    %v283 = vld [vmem:[#allocation5 + $0x510] sm:$0xff]
    %v284 = vld [vmem:[#allocation5 + $0x518] sm:$0xff]
    %v285 = vld [vmem:[#allocation5 + $0x520] sm:$0xff]
    %v286 = vld [vmem:[#allocation5 + $0x528] sm:$0xff]
    %v287 = vld [vmem:[#allocation5 + $0x530] sm:$0xff]
    %v288 = vld [vmem:[#allocation5 + $0x538] sm:$0xff]
    %v289 = vld [vmem:[#allocation5 + $0x540] sm:$0xff]
    %v290 = vld [vmem:[#allocation5 + $0x548] sm:$0xff]
    %v291 = vld [vmem:[#allocation5 + $0x550] sm:$0xff]
    %v292 = vld [vmem:[#allocation5 + $0x558] sm:$0xff]
    %v293 = vld [vmem:[#allocation5 + $0x560] sm:$0xff]
    %v294 = vld [vmem:[#allocation5 + $0x568] sm:$0xff]
    %v295 = vld [vmem:[#allocation5 + $0x570] sm:$0xff]
    %v296 = vld [vmem:[#allocation5 + $0x578] sm:$0xff]
    %v297 = vld [vmem:[#allocation5 + $0x580] sm:$0xff]
    %v298 = vld [vmem:[#allocation5 + $0x588] sm:$0xff]
    %v299 = vld [vmem:[#allocation5 + $0x590] sm:$0xff]
    %v300 = vld [vmem:[#allocation5 + $0x598] sm:$0xff]
    %v301 = vld [vmem:[#allocation5 + $0x5a0] sm:$0xff]
    %v302 = vld [vmem:[#allocation5 + $0x5a8] sm:$0xff]
    %v303 = vld [vmem:[#allocation5 + $0x5b0] sm:$0xff]
    %v304 = vld [vmem:[#allocation5 + $0x5b8] sm:$0xff]
    %v305 = vld [vmem:[#allocation5 + $0x5c0] sm:$0xff]
    %v306 = vld [vmem:[#allocation5 + $0x5c8] sm:$0xff]
    %v307 = vld [vmem:[#allocation5 + $0x5d0] sm:$0xff]
    %v308 = vld [vmem:[#allocation5 + $0x5d8] sm:$0xff]
    %v309 = vld [vmem:[#allocation5 + $0x5e0] sm:$0xff]
    %v310 = vld [vmem:[#allocation5 + $0x5e8] sm:$0xff]
    %v311 = vld [vmem:[#allocation5 + $0x5f0] sm:$0xff]
    %v312 = vld [vmem:[#allocation5 + $0x5f8] sm:$0xff]
    %v313 = vld [vmem:[#allocation5 + $0x600] sm:$0xff]
    %v314 = vld [vmem:[#allocation5 + $0x608] sm:$0xff]
    %v315 = vld [vmem:[#allocation5 + $0x610] sm:$0xff]
    %v316 = vld [vmem:[#allocation5 + $0x618] sm:$0xff]
    %v317 = vld [vmem:[#allocation5 + $0x620] sm:$0xff]
    %v318 = vld [vmem:[#allocation5 + $0x628] sm:$0xff]
    %v319 = vld [vmem:[#allocation5 + $0x630] sm:$0xff]
    %v320 = vld [vmem:[#allocation5 + $0x638] sm:$0xff]
    %v321 = vld [vmem:[#allocation5 + $0x640] sm:$0xff]
    %v322 = vld [vmem:[#allocation5 + $0x648] sm:$0xff]
    %v323 = vld [vmem:[#allocation5 + $0x650] sm:$0xff]
    %v324 = vld [vmem:[#allocation5 + $0x658] sm:$0xff]
    %v325 = vld [vmem:[#allocation5 + $0x660] sm:$0xff]
    %v326 = vld [vmem:[#allocation5 + $0x668] sm:$0xff]
    %v327 = vld [vmem:[#allocation5 + $0x670] sm:$0xff]
    %v328 = vld [vmem:[#allocation5 + $0x678] sm:$0xff]
    %v329 = vld [vmem:[#allocation5 + $0x680] sm:$0xff]
    %v330 = vld [vmem:[#allocation5 + $0x688] sm:$0xff]
    %v331 = vld [vmem:[#allocation5 + $0x690] sm:$0xff]
    %v332 = vld [vmem:[#allocation5 + $0x698] sm:$0xff]
    %v333 = vld [vmem:[#allocation5 + $0x6a0] sm:$0xff]
    %v334 = vld [vmem:[#allocation5 + $0x6a8] sm:$0xff]
    %v335 = vld [vmem:[#allocation5 + $0x6b0] sm:$0xff]
    %v336 = vld [vmem:[#allocation5 + $0x6b8] sm:$0xff]
    %v337 = vld [vmem:[#allocation5 + $0x6c0] sm:$0xff]
    %v338 = vld [vmem:[#allocation5 + $0x6c8] sm:$0xff]
    %v339 = vld [vmem:[#allocation5 + $0x6d0] sm:$0xff]
    %v340 = vld [vmem:[#allocation5 + $0x6d8] sm:$0xff]
    %v341 = vld [vmem:[#allocation5 + $0x6e0] sm:$0xff]
    %v342 = vld [vmem:[#allocation5 + $0x6e8] sm:$0xff]
    %v343 = vld [vmem:[#allocation5 + $0x6f0] sm:$0xff]
    %v344 = vld [vmem:[#allocation5 + $0x6f8] sm:$0xff]
    %v345 = vld [vmem:[#allocation5 + $0x700] sm:$0xff]
    %v346 = vld [vmem:[#allocation5 + $0x708] sm:$0xff]
    %v347 = vld [vmem:[#allocation5 + $0x710] sm:$0xff]
    %v348 = vld [vmem:[#allocation5 + $0x718] sm:$0xff]
    %v349 = vld [vmem:[#allocation5 + $0x720] sm:$0xff]
    %v350 = vld [vmem:[#allocation5 + $0x728] sm:$0xff]
    %v351 = vld [vmem:[#allocation5 + $0x730] sm:$0xff]
    %v352 = vld [vmem:[#allocation5 + $0x738] sm:$0xff]
    %v353 = vld [vmem:[#allocation5 + $0x740] sm:$0xff]
    %v354 = vld [vmem:[#allocation5 + $0x748] sm:$0xff]
    %v355 = vld [vmem:[#allocation5 + $0x750] sm:$0xff]
    %v356 = vld [vmem:[#allocation5 + $0x758] sm:$0xff]
    %v357 = vld [vmem:[#allocation5 + $0x760] sm:$0xff]
    %v358 = vld [vmem:[#allocation5 + $0x768] sm:$0xff]
    %v359 = vld [vmem:[#allocation5 + $0x770] sm:$0xff]
    %v360 = vld [vmem:[#allocation5 + $0x778] sm:$0xff]
    %v361 = vld [vmem:[#allocation5 + $0x780] sm:$0xff]
    %v362 = vld [vmem:[#allocation5 + $0x788] sm:$0xff]
    %v363 = vld [vmem:[#allocation5 + $0x790] sm:$0xff]
    %v364 = vld [vmem:[#allocation5 + $0x798] sm:$0xff]
    %v365 = vld [vmem:[#allocation5 + $0x7a0] sm:$0xff]
    %v366 = vld [vmem:[#allocation5 + $0x7a8] sm:$0xff]
    %v367 = vld [vmem:[#allocation5 + $0x7b0] sm:$0xff]
    %v368 = vld [vmem:[#allocation5 + $0x7b8] sm:$0xff]
    %v369 = vld [vmem:[#allocation5 + $0x7c0] sm:$0xff]
    %v370 = vld [vmem:[#allocation5 + $0x7c8] sm:$0xff]
    %v371 = vld [vmem:[#allocation5 + $0x7d0] sm:$0xff]
    %v372 = vld [vmem:[#allocation5 + $0x7d8] sm:$0xff]
    %v373 = vld [vmem:[#allocation5 + $0x7e0] sm:$0xff]
    %v374 = vld [vmem:[#allocation5 + $0x7e8] sm:$0xff]
    %v375 = vld [vmem:[#allocation5 + $0x7f0] sm:$0xff]
    %v376 = vld [vmem:[#allocation5 + $0x7f8] sm:$0xff]
    %v377 = vld [vmem:[#allocation7] sm:$0xff]
    %v379 = vlaneseq
    %v380 = vshrl.u32 %v379, 7
    %v381 = vsub.s32 0, %v380
    %v382 = vrot.slane %v377, %v381
    %v383 = vlaneseq
    %v384 = vshrl.u32 %v383, 7
    %v385 = vsub.s32 1, %v384
    %v386 = vrot.slane %v377, %v385
    %v387 = vlaneseq
    %v388 = vshrl.u32 %v387, 7
    %v389 = vsub.s32 2, %v388
    %v390 = vrot.slane %v377, %v389
    %v391 = vlaneseq
    %v392 = vshrl.u32 %v391, 7
    %v393 = vsub.s32 3, %v392
    %v394 = vrot.slane %v377, %v393
    %v395 = vlaneseq
    %v396 = vshrl.u32 %v395, 7
    %v397 = vsub.s32 4, %v396
    %v398 = vrot.slane %v377, %v397
    %v399 = vlaneseq
    %v400 = vshrl.u32 %v399, 7
    %v401 = vsub.s32 5, %v400
    %v402 = vrot.slane %v377, %v401
    %v403 = vlaneseq
    %v404 = vshrl.u32 %v403, 7
    %v405 = vsub.s32 6, %v404
    %v406 = vrot.slane %v377, %v405
    %v407 = vlaneseq
    %v408 = vshrl.u32 %v407, 7
    %v409 = vsub.s32 7, %v408
    %v410 = vrot.slane %v377, %v409
    %v423 = vunpack.c.l.b16 %v117
    %v424 = vunpack.c.h.b16 %v117
    %v425 = vunpack.c.l.b16 %v118
    %v426 = vunpack.c.h.b16 %v118
    %v427 = vunpack.c.l.b16 %v119
    %v428 = vunpack.c.h.b16 %v119
    %v429 = vunpack.c.l.b16 %v120
    %v430 = vunpack.c.h.b16 %v120
    %v431 = vpack.c.b16 %v427, %v423
    %v432 = vpack.c.b16 %v428, %v424
    %v433 = vpack.c.b16 %v429, %v425
    %v434 = vpack.c.b16 %v430, %v426
    %v695 = vunpack.c.l.b16 %v121
    %v696 = vunpack.c.h.b16 %v121
    %v697 = vunpack.c.l.b16 %v122
    %v698 = vunpack.c.h.b16 %v122
    %v699 = vunpack.c.l.b16 %v123
    %v700 = vunpack.c.h.b16 %v123
    %v701 = vunpack.c.l.b16 %v124
    %v702 = vunpack.c.h.b16 %v124
    %v703 = vunpack.c.l.b16 %v125
    %v704 = vunpack.c.h.b16 %v125
    %v705 = vunpack.c.l.b16 %v126
    %v706 = vunpack.c.h.b16 %v126
    %v707 = vunpack.c.l.b16 %v127
    %v708 = vunpack.c.h.b16 %v127
    %v709 = vunpack.c.l.b16 %v128
    %v710 = vunpack.c.h.b16 %v128
    %v711 = vunpack.c.l.b16 %v129
    %v712 = vunpack.c.h.b16 %v129
    %v713 = vunpack.c.l.b16 %v130
    %v714 = vunpack.c.h.b16 %v130
    %v715 = vunpack.c.l.b16 %v131
    %v716 = vunpack.c.h.b16 %v131
    %v717 = vunpack.c.l.b16 %v132
    %v718 = vunpack.c.h.b16 %v132
    %v719 = vunpack.c.l.b16 %v133
    %v720 = vunpack.c.h.b16 %v133
    %v721 = vunpack.c.l.b16 %v134
    %v722 = vunpack.c.h.b16 %v134
    %v723 = vunpack.c.l.b16 %v135
    %v724 = vunpack.c.h.b16 %v135
    %v725 = vunpack.c.l.b16 %v136
    %v726 = vunpack.c.h.b16 %v136
    %v727 = vunpack.c.l.b16 %v137
    %v728 = vunpack.c.h.b16 %v137
    %v729 = vunpack.c.l.b16 %v138
    %v730 = vunpack.c.h.b16 %v138
    %v731 = vunpack.c.l.b16 %v139
    %v732 = vunpack.c.h.b16 %v139
    %v733 = vunpack.c.l.b16 %v140
    %v734 = vunpack.c.h.b16 %v140
    %v735 = vunpack.c.l.b16 %v141
    %v736 = vunpack.c.h.b16 %v141
    %v737 = vunpack.c.l.b16 %v142
    %v738 = vunpack.c.h.b16 %v142
    %v739 = vunpack.c.l.b16 %v143
    %v740 = vunpack.c.h.b16 %v143
    %v741 = vunpack.c.l.b16 %v144
    %v742 = vunpack.c.h.b16 %v144
    %v743 = vunpack.c.l.b16 %v145
    %v744 = vunpack.c.h.b16 %v145
    %v745 = vunpack.c.l.b16 %v146
    %v746 = vunpack.c.h.b16 %v146
    %v747 = vunpack.c.l.b16 %v147
    %v748 = vunpack.c.h.b16 %v147
    %v749 = vunpack.c.l.b16 %v148
    %v750 = vunpack.c.h.b16 %v148
    %v751 = vunpack.c.l.b16 %v149
    %v752 = vunpack.c.h.b16 %v149
    %v753 = vunpack.c.l.b16 %v150
    %v754 = vunpack.c.h.b16 %v150
    %v755 = vunpack.c.l.b16 %v151
    %v756 = vunpack.c.h.b16 %v151
    %v757 = vunpack.c.l.b16 %v152
    %v758 = vunpack.c.h.b16 %v152
    %v759 = vunpack.c.l.b16 %v153
    %v760 = vunpack.c.h.b16 %v153
    %v761 = vunpack.c.l.b16 %v154
    %v762 = vunpack.c.h.b16 %v154
    %v763 = vunpack.c.l.b16 %v155
    %v764 = vunpack.c.h.b16 %v155
    %v765 = vunpack.c.l.b16 %v156
    %v766 = vunpack.c.h.b16 %v156
    %v767 = vunpack.c.l.b16 %v157
    %v768 = vunpack.c.h.b16 %v157
    %v769 = vunpack.c.l.b16 %v158
    %v770 = vunpack.c.h.b16 %v158
    %v771 = vunpack.c.l.b16 %v159
    %v772 = vunpack.c.h.b16 %v159
    %v773 = vunpack.c.l.b16 %v160
    %v774 = vunpack.c.h.b16 %v160
    %v775 = vunpack.c.l.b16 %v161
    %v776 = vunpack.c.h.b16 %v161
    %v777 = vunpack.c.l.b16 %v162
    %v778 = vunpack.c.h.b16 %v162
    %v779 = vunpack.c.l.b16 %v163
    %v780 = vunpack.c.h.b16 %v163
    %v781 = vunpack.c.l.b16 %v164
    %v782 = vunpack.c.h.b16 %v164
    %v783 = vunpack.c.l.b16 %v165
    %v784 = vunpack.c.h.b16 %v165
    %v785 = vunpack.c.l.b16 %v166
    %v786 = vunpack.c.h.b16 %v166
    %v787 = vunpack.c.l.b16 %v167
    %v788 = vunpack.c.h.b16 %v167
    %v789 = vunpack.c.l.b16 %v168
    %v790 = vunpack.c.h.b16 %v168
    %v791 = vunpack.c.l.b16 %v169
    %v792 = vunpack.c.h.b16 %v169
    %v793 = vunpack.c.l.b16 %v170
    %v794 = vunpack.c.h.b16 %v170
    %v795 = vunpack.c.l.b16 %v171
    %v796 = vunpack.c.h.b16 %v171
    %v797 = vunpack.c.l.b16 %v172
    %v798 = vunpack.c.h.b16 %v172
    %v799 = vunpack.c.l.b16 %v173
    %v800 = vunpack.c.h.b16 %v173
    %v801 = vunpack.c.l.b16 %v174
    %v802 = vunpack.c.h.b16 %v174
    %v803 = vunpack.c.l.b16 %v175
    %v804 = vunpack.c.h.b16 %v175
    %v805 = vunpack.c.l.b16 %v176
    %v806 = vunpack.c.h.b16 %v176
    %v807 = vunpack.c.l.b16 %v177
    %v808 = vunpack.c.h.b16 %v177
    %v809 = vunpack.c.l.b16 %v178
    %v810 = vunpack.c.h.b16 %v178
    %v811 = vunpack.c.l.b16 %v179
    %v812 = vunpack.c.h.b16 %v179
    %v813 = vunpack.c.l.b16 %v180
    %v814 = vunpack.c.h.b16 %v180
    %v815 = vunpack.c.l.b16 %v181
    %v816 = vunpack.c.h.b16 %v181
    %v817 = vunpack.c.l.b16 %v182
    %v818 = vunpack.c.h.b16 %v182
    %v819 = vunpack.c.l.b16 %v183
    %v820 = vunpack.c.h.b16 %v183
    %v821 = vunpack.c.l.b16 %v184
    %v822 = vunpack.c.h.b16 %v184
    %v823 = vunpack.c.l.b16 %v185
    %v824 = vunpack.c.h.b16 %v185
    %v825 = vunpack.c.l.b16 %v186
    %v826 = vunpack.c.h.b16 %v186
    %v827 = vunpack.c.l.b16 %v187
    %v828 = vunpack.c.h.b16 %v187
    %v829 = vunpack.c.l.b16 %v188
    %v830 = vunpack.c.h.b16 %v188
    %v831 = vunpack.c.l.b16 %v189
    %v832 = vunpack.c.h.b16 %v189
    %v833 = vunpack.c.l.b16 %v190
    %v834 = vunpack.c.h.b16 %v190
    %v835 = vunpack.c.l.b16 %v191
    %v836 = vunpack.c.h.b16 %v191
    %v837 = vunpack.c.l.b16 %v192
    %v838 = vunpack.c.h.b16 %v192
    %v839 = vunpack.c.l.b16 %v193
    %v840 = vunpack.c.h.b16 %v193
    %v841 = vunpack.c.l.b16 %v194
    %v842 = vunpack.c.h.b16 %v194
    %v843 = vunpack.c.l.b16 %v195
    %v844 = vunpack.c.h.b16 %v195
    %v845 = vunpack.c.l.b16 %v196
    %v846 = vunpack.c.h.b16 %v196
    %v847 = vunpack.c.l.b16 %v197
    %v848 = vunpack.c.h.b16 %v197
    %v849 = vunpack.c.l.b16 %v198
    %v850 = vunpack.c.h.b16 %v198
    %v851 = vunpack.c.l.b16 %v199
    %v852 = vunpack.c.h.b16 %v199
    %v853 = vunpack.c.l.b16 %v200
    %v854 = vunpack.c.h.b16 %v200
    %v855 = vunpack.c.l.b16 %v201
    %v856 = vunpack.c.h.b16 %v201
    %v857 = vunpack.c.l.b16 %v202
    %v858 = vunpack.c.h.b16 %v202
    %v859 = vunpack.c.l.b16 %v203
    %v860 = vunpack.c.h.b16 %v203
    %v861 = vunpack.c.l.b16 %v204
    %v862 = vunpack.c.h.b16 %v204
    %v863 = vunpack.c.l.b16 %v205
    %v864 = vunpack.c.h.b16 %v205
    %v865 = vunpack.c.l.b16 %v206
    %v866 = vunpack.c.h.b16 %v206
    %v867 = vunpack.c.l.b16 %v207
    %v868 = vunpack.c.h.b16 %v207
    %v869 = vunpack.c.l.b16 %v208
    %v870 = vunpack.c.h.b16 %v208
    %v871 = vunpack.c.l.b16 %v209
    %v872 = vunpack.c.h.b16 %v209
    %v873 = vunpack.c.l.b16 %v210
    %v874 = vunpack.c.h.b16 %v210
    %v875 = vunpack.c.l.b16 %v211
    %v876 = vunpack.c.h.b16 %v211
    %v877 = vunpack.c.l.b16 %v212
    %v878 = vunpack.c.h.b16 %v212
    %v879 = vunpack.c.l.b16 %v213
    %v880 = vunpack.c.h.b16 %v213
    %v881 = vunpack.c.l.b16 %v214
    %v882 = vunpack.c.h.b16 %v214
    %v883 = vunpack.c.l.b16 %v215
    %v884 = vunpack.c.h.b16 %v215
    %v885 = vunpack.c.l.b16 %v216
    %v886 = vunpack.c.h.b16 %v216
    %v887 = vunpack.c.l.b16 %v217
    %v888 = vunpack.c.h.b16 %v217
    %v889 = vunpack.c.l.b16 %v218
    %v890 = vunpack.c.h.b16 %v218
    %v891 = vunpack.c.l.b16 %v219
    %v892 = vunpack.c.h.b16 %v219
    %v893 = vunpack.c.l.b16 %v220
    %v894 = vunpack.c.h.b16 %v220
    %v895 = vunpack.c.l.b16 %v221
    %v896 = vunpack.c.h.b16 %v221
    %v897 = vunpack.c.l.b16 %v222
    %v898 = vunpack.c.h.b16 %v222
    %v899 = vunpack.c.l.b16 %v223
    %v900 = vunpack.c.h.b16 %v223
    %v901 = vunpack.c.l.b16 %v224
    %v902 = vunpack.c.h.b16 %v224
    %v903 = vunpack.c.l.b16 %v225
    %v904 = vunpack.c.h.b16 %v225
    %v905 = vunpack.c.l.b16 %v226
    %v906 = vunpack.c.h.b16 %v226
    %v907 = vunpack.c.l.b16 %v227
    %v908 = vunpack.c.h.b16 %v227
    %v909 = vunpack.c.l.b16 %v228
    %v910 = vunpack.c.h.b16 %v228
    %v911 = vunpack.c.l.b16 %v229
    %v912 = vunpack.c.h.b16 %v229
    %v913 = vunpack.c.l.b16 %v230
    %v914 = vunpack.c.h.b16 %v230
    %v915 = vunpack.c.l.b16 %v231
    %v916 = vunpack.c.h.b16 %v231
    %v917 = vunpack.c.l.b16 %v232
    %v918 = vunpack.c.h.b16 %v232
    %v919 = vunpack.c.l.b16 %v233
    %v920 = vunpack.c.h.b16 %v233
    %v921 = vunpack.c.l.b16 %v234
    %v922 = vunpack.c.h.b16 %v234
    %v923 = vunpack.c.l.b16 %v235
    %v924 = vunpack.c.h.b16 %v235
    %v925 = vunpack.c.l.b16 %v236
    %v926 = vunpack.c.h.b16 %v236
    %v927 = vunpack.c.l.b16 %v237
    %v928 = vunpack.c.h.b16 %v237
    %v929 = vunpack.c.l.b16 %v238
    %v930 = vunpack.c.h.b16 %v238
    %v931 = vunpack.c.l.b16 %v239
    %v932 = vunpack.c.h.b16 %v239
    %v933 = vunpack.c.l.b16 %v240
    %v934 = vunpack.c.h.b16 %v240
    %v935 = vunpack.c.l.b16 %v241
    %v936 = vunpack.c.h.b16 %v241
    %v937 = vunpack.c.l.b16 %v242
    %v938 = vunpack.c.h.b16 %v242
    %v939 = vunpack.c.l.b16 %v243
    %v940 = vunpack.c.h.b16 %v243
    %v941 = vunpack.c.l.b16 %v244
    %v942 = vunpack.c.h.b16 %v244
    %v943 = vunpack.c.l.b16 %v245
    %v944 = vunpack.c.h.b16 %v245
    %v945 = vunpack.c.l.b16 %v246
    %v946 = vunpack.c.h.b16 %v246
    %v947 = vunpack.c.l.b16 %v247
    %v948 = vunpack.c.h.b16 %v247
    %v949 = vunpack.c.l.b16 %v248
    %v950 = vunpack.c.h.b16 %v248
    %v951 = vunpack.c.l.b16 %v249
    %v952 = vunpack.c.h.b16 %v249
    %v953 = vunpack.c.l.b16 %v250
    %v954 = vunpack.c.h.b16 %v250
    %v955 = vunpack.c.l.b16 %v251
    %v956 = vunpack.c.h.b16 %v251
    %v957 = vunpack.c.l.b16 %v252
    %v958 = vunpack.c.h.b16 %v252
    %v959 = vunpack.c.l.b16 %v253
    %v960 = vunpack.c.h.b16 %v253
    %v961 = vunpack.c.l.b16 %v254
    %v962 = vunpack.c.h.b16 %v254
    %v963 = vunpack.c.l.b16 %v255
    %v964 = vunpack.c.h.b16 %v255
    %v965 = vunpack.c.l.b16 %v256
    %v966 = vunpack.c.h.b16 %v256
    %v967 = vunpack.c.l.b16 %v257
    %v968 = vunpack.c.h.b16 %v257
    %v969 = vunpack.c.l.b16 %v258
    %v970 = vunpack.c.h.b16 %v258
    %v971 = vunpack.c.l.b16 %v259
    %v972 = vunpack.c.h.b16 %v259
    %v973 = vunpack.c.l.b16 %v260
    %v974 = vunpack.c.h.b16 %v260
    %v975 = vunpack.c.l.b16 %v261
    %v976 = vunpack.c.h.b16 %v261
    %v977 = vunpack.c.l.b16 %v262
    %v978 = vunpack.c.h.b16 %v262
    %v979 = vunpack.c.l.b16 %v263
    %v980 = vunpack.c.h.b16 %v263
    %v981 = vunpack.c.l.b16 %v264
    %v982 = vunpack.c.h.b16 %v264
    %v983 = vunpack.c.l.b16 %v265
    %v984 = vunpack.c.h.b16 %v265
    %v985 = vunpack.c.l.b16 %v266
    %v986 = vunpack.c.h.b16 %v266
    %v987 = vunpack.c.l.b16 %v267
    %v988 = vunpack.c.h.b16 %v267
    %v989 = vunpack.c.l.b16 %v268
    %v990 = vunpack.c.h.b16 %v268
    %v991 = vunpack.c.l.b16 %v269
    %v992 = vunpack.c.h.b16 %v269
    %v993 = vunpack.c.l.b16 %v270
    %v994 = vunpack.c.h.b16 %v270
    %v995 = vunpack.c.l.b16 %v271
    %v996 = vunpack.c.h.b16 %v271
    %v997 = vunpack.c.l.b16 %v272
    %v998 = vunpack.c.h.b16 %v272
    %v999 = vunpack.c.l.b16 %v273
    %v1000 = vunpack.c.h.b16 %v273
    %v1001 = vunpack.c.l.b16 %v274
    %v1002 = vunpack.c.h.b16 %v274
    %v1003 = vunpack.c.l.b16 %v275
    %v1004 = vunpack.c.h.b16 %v275
    %v1005 = vunpack.c.l.b16 %v276
    %v1006 = vunpack.c.h.b16 %v276
    %v1007 = vunpack.c.l.b16 %v277
    %v1008 = vunpack.c.h.b16 %v277
    %v1009 = vunpack.c.l.b16 %v278
    %v1010 = vunpack.c.h.b16 %v278
    %v1011 = vunpack.c.l.b16 %v279
    %v1012 = vunpack.c.h.b16 %v279
    %v1013 = vunpack.c.l.b16 %v280
    %v1014 = vunpack.c.h.b16 %v280
    %v1015 = vunpack.c.l.b16 %v281
    %v1016 = vunpack.c.h.b16 %v281
    %v1017 = vunpack.c.l.b16 %v282
    %v1018 = vunpack.c.h.b16 %v282
    %v1019 = vunpack.c.l.b16 %v283
    %v1020 = vunpack.c.h.b16 %v283
    %v1021 = vunpack.c.l.b16 %v284
    %v1022 = vunpack.c.h.b16 %v284
    %v1023 = vunpack.c.l.b16 %v285
    %v1024 = vunpack.c.h.b16 %v285
    %v1025 = vunpack.c.l.b16 %v286
    %v1026 = vunpack.c.h.b16 %v286
    %v1027 = vunpack.c.l.b16 %v287
    %v1028 = vunpack.c.h.b16 %v287
    %v1029 = vunpack.c.l.b16 %v288
    %v1030 = vunpack.c.h.b16 %v288
    %v1031 = vunpack.c.l.b16 %v289
    %v1032 = vunpack.c.h.b16 %v289
    %v1033 = vunpack.c.l.b16 %v290
    %v1034 = vunpack.c.h.b16 %v290
    %v1035 = vunpack.c.l.b16 %v291
    %v1036 = vunpack.c.h.b16 %v291
    %v1037 = vunpack.c.l.b16 %v292
    %v1038 = vunpack.c.h.b16 %v292
    %v1039 = vunpack.c.l.b16 %v293
    %v1040 = vunpack.c.h.b16 %v293
    %v1041 = vunpack.c.l.b16 %v294
    %v1042 = vunpack.c.h.b16 %v294
    %v1043 = vunpack.c.l.b16 %v295
    %v1044 = vunpack.c.h.b16 %v295
    %v1045 = vunpack.c.l.b16 %v296
    %v1046 = vunpack.c.h.b16 %v296
    %v1047 = vunpack.c.l.b16 %v297
    %v1048 = vunpack.c.h.b16 %v297
    %v1049 = vunpack.c.l.b16 %v298
    %v1050 = vunpack.c.h.b16 %v298
    %v1051 = vunpack.c.l.b16 %v299
    %v1052 = vunpack.c.h.b16 %v299
    %v1053 = vunpack.c.l.b16 %v300
    %v1054 = vunpack.c.h.b16 %v300
    %v1055 = vunpack.c.l.b16 %v301
    %v1056 = vunpack.c.h.b16 %v301
    %v1057 = vunpack.c.l.b16 %v302
    %v1058 = vunpack.c.h.b16 %v302
    %v1059 = vunpack.c.l.b16 %v303
    %v1060 = vunpack.c.h.b16 %v303
    %v1061 = vunpack.c.l.b16 %v304
    %v1062 = vunpack.c.h.b16 %v304
    %v1063 = vunpack.c.l.b16 %v305
    %v1064 = vunpack.c.h.b16 %v305
    %v1065 = vunpack.c.l.b16 %v306
    %v1066 = vunpack.c.h.b16 %v306
    %v1067 = vunpack.c.l.b16 %v307
    %v1068 = vunpack.c.h.b16 %v307
    %v1069 = vunpack.c.l.b16 %v308
    %v1070 = vunpack.c.h.b16 %v308
    %v1071 = vunpack.c.l.b16 %v309
    %v1072 = vunpack.c.h.b16 %v309
    %v1073 = vunpack.c.l.b16 %v310
    %v1074 = vunpack.c.h.b16 %v310
    %v1075 = vunpack.c.l.b16 %v311
    %v1076 = vunpack.c.h.b16 %v311
    %v1077 = vunpack.c.l.b16 %v312
    %v1078 = vunpack.c.h.b16 %v312
    %v1079 = vunpack.c.l.b16 %v313
    %v1080 = vunpack.c.h.b16 %v313
    %v1081 = vunpack.c.l.b16 %v314
    %v1082 = vunpack.c.h.b16 %v314
    %v1083 = vunpack.c.l.b16 %v315
    %v1084 = vunpack.c.h.b16 %v315
    %v1085 = vunpack.c.l.b16 %v316
    %v1086 = vunpack.c.h.b16 %v316
    %v1087 = vunpack.c.l.b16 %v317
    %v1088 = vunpack.c.h.b16 %v317
    %v1089 = vunpack.c.l.b16 %v318
    %v1090 = vunpack.c.h.b16 %v318
    %v1091 = vunpack.c.l.b16 %v319
    %v1092 = vunpack.c.h.b16 %v319
    %v1093 = vunpack.c.l.b16 %v320
    %v1094 = vunpack.c.h.b16 %v320
    %v1095 = vunpack.c.l.b16 %v321
    %v1096 = vunpack.c.h.b16 %v321
    %v1097 = vunpack.c.l.b16 %v322
    %v1098 = vunpack.c.h.b16 %v322
    %v1099 = vunpack.c.l.b16 %v323
    %v1100 = vunpack.c.h.b16 %v323
    %v1101 = vunpack.c.l.b16 %v324
    %v1102 = vunpack.c.h.b16 %v324
    %v1103 = vunpack.c.l.b16 %v325
    %v1104 = vunpack.c.h.b16 %v325
    %v1105 = vunpack.c.l.b16 %v326
    %v1106 = vunpack.c.h.b16 %v326
    %v1107 = vunpack.c.l.b16 %v327
    %v1108 = vunpack.c.h.b16 %v327
    %v1109 = vunpack.c.l.b16 %v328
    %v1110 = vunpack.c.h.b16 %v328
    %v1111 = vunpack.c.l.b16 %v329
    %v1112 = vunpack.c.h.b16 %v329
    %v1113 = vunpack.c.l.b16 %v330
    %v1114 = vunpack.c.h.b16 %v330
    %v1115 = vunpack.c.l.b16 %v331
    %v1116 = vunpack.c.h.b16 %v331
    %v1117 = vunpack.c.l.b16 %v332
    %v1118 = vunpack.c.h.b16 %v332
    %v1119 = vunpack.c.l.b16 %v333
    %v1120 = vunpack.c.h.b16 %v333
    %v1121 = vunpack.c.l.b16 %v334
    %v1122 = vunpack.c.h.b16 %v334
    %v1123 = vunpack.c.l.b16 %v335
    %v1124 = vunpack.c.h.b16 %v335
    %v1125 = vunpack.c.l.b16 %v336
    %v1126 = vunpack.c.h.b16 %v336
    %v1127 = vunpack.c.l.b16 %v337
    %v1128 = vunpack.c.h.b16 %v337
    %v1129 = vunpack.c.l.b16 %v338
    %v1130 = vunpack.c.h.b16 %v338
    %v1131 = vunpack.c.l.b16 %v339
    %v1132 = vunpack.c.h.b16 %v339
    %v1133 = vunpack.c.l.b16 %v340
    %v1134 = vunpack.c.h.b16 %v340
    %v1135 = vunpack.c.l.b16 %v341
    %v1136 = vunpack.c.h.b16 %v341
    %v1137 = vunpack.c.l.b16 %v342
    %v1138 = vunpack.c.h.b16 %v342
    %v1139 = vunpack.c.l.b16 %v343
    %v1140 = vunpack.c.h.b16 %v343
    %v1141 = vunpack.c.l.b16 %v344
    %v1142 = vunpack.c.h.b16 %v344
    %v1143 = vunpack.c.l.b16 %v345
    %v1144 = vunpack.c.h.b16 %v345
    %v1145 = vunpack.c.l.b16 %v346
    %v1146 = vunpack.c.h.b16 %v346
    %v1147 = vunpack.c.l.b16 %v347
    %v1148 = vunpack.c.h.b16 %v347
    %v1149 = vunpack.c.l.b16 %v348
    %v1150 = vunpack.c.h.b16 %v348
    %v1151 = vunpack.c.l.b16 %v349
    %v1152 = vunpack.c.h.b16 %v349
    %v1153 = vunpack.c.l.b16 %v350
    %v1154 = vunpack.c.h.b16 %v350
    %v1155 = vunpack.c.l.b16 %v351
    %v1156 = vunpack.c.h.b16 %v351
    %v1157 = vunpack.c.l.b16 %v352
    %v1158 = vunpack.c.h.b16 %v352
    %v1159 = vunpack.c.l.b16 %v353
    %v1160 = vunpack.c.h.b16 %v353
    %v1161 = vunpack.c.l.b16 %v354
    %v1162 = vunpack.c.h.b16 %v354
    %v1163 = vunpack.c.l.b16 %v355
    %v1164 = vunpack.c.h.b16 %v355
    %v1165 = vunpack.c.l.b16 %v356
    %v1166 = vunpack.c.h.b16 %v356
    %v1167 = vunpack.c.l.b16 %v357
    %v1168 = vunpack.c.h.b16 %v357
    %v1169 = vunpack.c.l.b16 %v358
    %v1170 = vunpack.c.h.b16 %v358
    %v1171 = vunpack.c.l.b16 %v359
    %v1172 = vunpack.c.h.b16 %v359
    %v1173 = vunpack.c.l.b16 %v360
    %v1174 = vunpack.c.h.b16 %v360
    %v1175 = vunpack.c.l.b16 %v361
    %v1176 = vunpack.c.h.b16 %v361
    %v1177 = vunpack.c.l.b16 %v362
    %v1178 = vunpack.c.h.b16 %v362
    %v1179 = vunpack.c.l.b16 %v363
    %v1180 = vunpack.c.h.b16 %v363
    %v1181 = vunpack.c.l.b16 %v364
    %v1182 = vunpack.c.h.b16 %v364
    %v1183 = vunpack.c.l.b16 %v365
    %v1184 = vunpack.c.h.b16 %v365
    %v1185 = vunpack.c.l.b16 %v366
    %v1186 = vunpack.c.h.b16 %v366
    %v1187 = vunpack.c.l.b16 %v367
    %v1188 = vunpack.c.h.b16 %v367
    %v1189 = vunpack.c.l.b16 %v368
    %v1190 = vunpack.c.h.b16 %v368
    %v1191 = vunpack.c.l.b16 %v369
    %v1192 = vunpack.c.h.b16 %v369
    %v1193 = vunpack.c.l.b16 %v370
    %v1194 = vunpack.c.h.b16 %v370
    %v1195 = vunpack.c.l.b16 %v371
    %v1196 = vunpack.c.h.b16 %v371
    %v1197 = vunpack.c.l.b16 %v372
    %v1198 = vunpack.c.h.b16 %v372
    %v1199 = vunpack.c.l.b16 %v373
    %v1200 = vunpack.c.h.b16 %v373
    %v1201 = vunpack.c.l.b16 %v374
    %v1202 = vunpack.c.h.b16 %v374
    %v1203 = vunpack.c.l.b16 %v375
    %v1204 = vunpack.c.h.b16 %v375
    %v1205 = vunpack.c.l.b16 %v376
    %v1206 = vunpack.c.h.b16 %v376
    %v1207 = vpack.c.b16 %v703, %v695
    %v1208 = vpack.c.b16 %v704, %v696
    %v1209 = vpack.c.b16 %v705, %v697
    %v1210 = vpack.c.b16 %v706, %v698
    %v1211 = vpack.c.b16 %v707, %v699
    %v1212 = vpack.c.b16 %v708, %v700
    %v1213 = vpack.c.b16 %v709, %v701
    %v1214 = vpack.c.b16 %v710, %v702
    %v1215 = vpack.c.b16 %v719, %v711
    %v1216 = vpack.c.b16 %v720, %v712
    %v1217 = vpack.c.b16 %v721, %v713
    %v1218 = vpack.c.b16 %v722, %v714
    %v1219 = vpack.c.b16 %v723, %v715
    %v1220 = vpack.c.b16 %v724, %v716
    %v1221 = vpack.c.b16 %v725, %v717
    %v1222 = vpack.c.b16 %v726, %v718
    %v1223 = vpack.c.b16 %v735, %v727
    %v1224 = vpack.c.b16 %v736, %v728
    %v1225 = vpack.c.b16 %v737, %v729
    %v1226 = vpack.c.b16 %v738, %v730
    %v1227 = vpack.c.b16 %v739, %v731
    %v1228 = vpack.c.b16 %v740, %v732
    %v1229 = vpack.c.b16 %v741, %v733
    %v1230 = vpack.c.b16 %v742, %v734
    %v1231 = vpack.c.b16 %v751, %v743
    %v1232 = vpack.c.b16 %v752, %v744
    %v1233 = vpack.c.b16 %v753, %v745
    %v1234 = vpack.c.b16 %v754, %v746
    %v1235 = vpack.c.b16 %v755, %v747
    %v1236 = vpack.c.b16 %v756, %v748
    %v1237 = vpack.c.b16 %v757, %v749
    %v1238 = vpack.c.b16 %v758, %v750
    %v1239 = vpack.c.b16 %v767, %v759
    %v1240 = vpack.c.b16 %v768, %v760
    %v1241 = vpack.c.b16 %v769, %v761
    %v1242 = vpack.c.b16 %v770, %v762
    %v1243 = vpack.c.b16 %v771, %v763
    %v1244 = vpack.c.b16 %v772, %v764
    %v1245 = vpack.c.b16 %v773, %v765
    %v1246 = vpack.c.b16 %v774, %v766
    %v1247 = vpack.c.b16 %v783, %v775
    %v1248 = vpack.c.b16 %v784, %v776
    %v1249 = vpack.c.b16 %v785, %v777
    %v1250 = vpack.c.b16 %v786, %v778
    %v1251 = vpack.c.b16 %v787, %v779
    %v1252 = vpack.c.b16 %v788, %v780
    %v1253 = vpack.c.b16 %v789, %v781
    %v1254 = vpack.c.b16 %v790, %v782
    %v1255 = vpack.c.b16 %v799, %v791
    %v1256 = vpack.c.b16 %v800, %v792
    %v1257 = vpack.c.b16 %v801, %v793
    %v1258 = vpack.c.b16 %v802, %v794
    %v1259 = vpack.c.b16 %v803, %v795
    %v1260 = vpack.c.b16 %v804, %v796
    %v1261 = vpack.c.b16 %v805, %v797
    %v1262 = vpack.c.b16 %v806, %v798
    %v1263 = vpack.c.b16 %v815, %v807
    %v1264 = vpack.c.b16 %v816, %v808
    %v1265 = vpack.c.b16 %v817, %v809
    %v1266 = vpack.c.b16 %v818, %v810
    %v1267 = vpack.c.b16 %v819, %v811
    %v1268 = vpack.c.b16 %v820, %v812
    %v1269 = vpack.c.b16 %v821, %v813
    %v1270 = vpack.c.b16 %v822, %v814
    %v1271 = vpack.c.b16 %v831, %v823
    %v1272 = vpack.c.b16 %v832, %v824
    %v1273 = vpack.c.b16 %v833, %v825
    %v1274 = vpack.c.b16 %v834, %v826
    %v1275 = vpack.c.b16 %v835, %v827
    %v1276 = vpack.c.b16 %v836, %v828
    %v1277 = vpack.c.b16 %v837, %v829
    %v1278 = vpack.c.b16 %v838, %v830
    %v1279 = vpack.c.b16 %v847, %v839
    %v1280 = vpack.c.b16 %v848, %v840
    %v1281 = vpack.c.b16 %v849, %v841
    %v1282 = vpack.c.b16 %v850, %v842
    %v1283 = vpack.c.b16 %v851, %v843
    %v1284 = vpack.c.b16 %v852, %v844
    %v1285 = vpack.c.b16 %v853, %v845
    %v1286 = vpack.c.b16 %v854, %v846
    %v1287 = vpack.c.b16 %v863, %v855
    %v1288 = vpack.c.b16 %v864, %v856
    %v1289 = vpack.c.b16 %v865, %v857
    %v1290 = vpack.c.b16 %v866, %v858
    %v1291 = vpack.c.b16 %v867, %v859
    %v1292 = vpack.c.b16 %v868, %v860
    %v1293 = vpack.c.b16 %v869, %v861
    %v1294 = vpack.c.b16 %v870, %v862
    %v1295 = vpack.c.b16 %v879, %v871
    %v1296 = vpack.c.b16 %v880, %v872
    %v1297 = vpack.c.b16 %v881, %v873
    %v1298 = vpack.c.b16 %v882, %v874
    %v1299 = vpack.c.b16 %v883, %v875
    %v1300 = vpack.c.b16 %v884, %v876
    %v1301 = vpack.c.b16 %v885, %v877
    %v1302 = vpack.c.b16 %v886, %v878
    %v1303 = vpack.c.b16 %v895, %v887
    %v1304 = vpack.c.b16 %v896, %v888
    %v1305 = vpack.c.b16 %v897, %v889
    %v1306 = vpack.c.b16 %v898, %v890
    %v1307 = vpack.c.b16 %v899, %v891
    %v1308 = vpack.c.b16 %v900, %v892
    %v1309 = vpack.c.b16 %v901, %v893
    %v1310 = vpack.c.b16 %v902, %v894
    %v1311 = vpack.c.b16 %v911, %v903
    %v1312 = vpack.c.b16 %v912, %v904
    %v1313 = vpack.c.b16 %v913, %v905
    %v1314 = vpack.c.b16 %v914, %v906
    %v1315 = vpack.c.b16 %v915, %v907
    %v1316 = vpack.c.b16 %v916, %v908
    %v1317 = vpack.c.b16 %v917, %v909
    %v1318 = vpack.c.b16 %v918, %v910
    %v1319 = vpack.c.b16 %v927, %v919
    %v1320 = vpack.c.b16 %v928, %v920
    %v1321 = vpack.c.b16 %v929, %v921
    %v1322 = vpack.c.b16 %v930, %v922
    %v1323 = vpack.c.b16 %v931, %v923
    %v1324 = vpack.c.b16 %v932, %v924
    %v1325 = vpack.c.b16 %v933, %v925
    %v1326 = vpack.c.b16 %v934, %v926
    %v1327 = vpack.c.b16 %v943, %v935
    %v1328 = vpack.c.b16 %v944, %v936
    %v1329 = vpack.c.b16 %v945, %v937
    %v1330 = vpack.c.b16 %v946, %v938
    %v1331 = vpack.c.b16 %v947, %v939
    %v1332 = vpack.c.b16 %v948, %v940
    %v1333 = vpack.c.b16 %v949, %v941
    %v1334 = vpack.c.b16 %v950, %v942
    %v1335 = vpack.c.b16 %v959, %v951
    %v1336 = vpack.c.b16 %v960, %v952
    %v1337 = vpack.c.b16 %v961, %v953
    %v1338 = vpack.c.b16 %v962, %v954
    %v1339 = vpack.c.b16 %v963, %v955
    %v1340 = vpack.c.b16 %v964, %v956
    %v1341 = vpack.c.b16 %v965, %v957
    %v1342 = vpack.c.b16 %v966, %v958
    %v1343 = vpack.c.b16 %v975, %v967
    %v1344 = vpack.c.b16 %v976, %v968
    %v1345 = vpack.c.b16 %v977, %v969
    %v1346 = vpack.c.b16 %v978, %v970
    %v1347 = vpack.c.b16 %v979, %v971
    %v1348 = vpack.c.b16 %v980, %v972
    %v1349 = vpack.c.b16 %v981, %v973
    %v1350 = vpack.c.b16 %v982, %v974
    %v1351 = vpack.c.b16 %v991, %v983
    %v1352 = vpack.c.b16 %v992, %v984
    %v1353 = vpack.c.b16 %v993, %v985
    %v1354 = vpack.c.b16 %v994, %v986
    %v1355 = vpack.c.b16 %v995, %v987
    %v1356 = vpack.c.b16 %v996, %v988
    %v1357 = vpack.c.b16 %v997, %v989
    %v1358 = vpack.c.b16 %v998, %v990
    %v1359 = vpack.c.b16 %v1007, %v999
    %v1360 = vpack.c.b16 %v1008, %v1000
    %v1361 = vpack.c.b16 %v1009, %v1001
    %v1362 = vpack.c.b16 %v1010, %v1002
    %v1363 = vpack.c.b16 %v1011, %v1003
    %v1364 = vpack.c.b16 %v1012, %v1004
    %v1365 = vpack.c.b16 %v1013, %v1005
    %v1366 = vpack.c.b16 %v1014, %v1006
    %v1367 = vpack.c.b16 %v1023, %v1015
    %v1368 = vpack.c.b16 %v1024, %v1016
    %v1369 = vpack.c.b16 %v1025, %v1017
    %v1370 = vpack.c.b16 %v1026, %v1018
    %v1371 = vpack.c.b16 %v1027, %v1019
    %v1372 = vpack.c.b16 %v1028, %v1020
    %v1373 = vpack.c.b16 %v1029, %v1021
    %v1374 = vpack.c.b16 %v1030, %v1022
    %v1375 = vpack.c.b16 %v1039, %v1031
    %v1376 = vpack.c.b16 %v1040, %v1032
    %v1377 = vpack.c.b16 %v1041, %v1033
    %v1378 = vpack.c.b16 %v1042, %v1034
    %v1379 = vpack.c.b16 %v1043, %v1035
    %v1380 = vpack.c.b16 %v1044, %v1036
    %v1381 = vpack.c.b16 %v1045, %v1037
    %v1382 = vpack.c.b16 %v1046, %v1038
    %v1383 = vpack.c.b16 %v1055, %v1047
    %v1384 = vpack.c.b16 %v1056, %v1048
    %v1385 = vpack.c.b16 %v1057, %v1049
    %v1386 = vpack.c.b16 %v1058, %v1050
    %v1387 = vpack.c.b16 %v1059, %v1051
    %v1388 = vpack.c.b16 %v1060, %v1052
    %v1389 = vpack.c.b16 %v1061, %v1053
    %v1390 = vpack.c.b16 %v1062, %v1054
    %v1391 = vpack.c.b16 %v1071, %v1063
    %v1392 = vpack.c.b16 %v1072, %v1064
    %v1393 = vpack.c.b16 %v1073, %v1065
    %v1394 = vpack.c.b16 %v1074, %v1066
    %v1395 = vpack.c.b16 %v1075, %v1067
    %v1396 = vpack.c.b16 %v1076, %v1068
    %v1397 = vpack.c.b16 %v1077, %v1069
    %v1398 = vpack.c.b16 %v1078, %v1070
    %v1399 = vpack.c.b16 %v1087, %v1079
    %v1400 = vpack.c.b16 %v1088, %v1080
    %v1401 = vpack.c.b16 %v1089, %v1081
    %v1402 = vpack.c.b16 %v1090, %v1082
    %v1403 = vpack.c.b16 %v1091, %v1083
    %v1404 = vpack.c.b16 %v1092, %v1084
    %v1405 = vpack.c.b16 %v1093, %v1085
    %v1406 = vpack.c.b16 %v1094, %v1086
    %v1407 = vpack.c.b16 %v1103, %v1095
    %v1408 = vpack.c.b16 %v1104, %v1096
    %v1409 = vpack.c.b16 %v1105, %v1097
    %v1410 = vpack.c.b16 %v1106, %v1098
    %v1411 = vpack.c.b16 %v1107, %v1099
    %v1412 = vpack.c.b16 %v1108, %v1100
    %v1413 = vpack.c.b16 %v1109, %v1101
    %v1414 = vpack.c.b16 %v1110, %v1102
    %v1415 = vpack.c.b16 %v1119, %v1111
    %v1416 = vpack.c.b16 %v1120, %v1112
    %v1417 = vpack.c.b16 %v1121, %v1113
    %v1418 = vpack.c.b16 %v1122, %v1114
    %v1419 = vpack.c.b16 %v1123, %v1115
    %v1420 = vpack.c.b16 %v1124, %v1116
    %v1421 = vpack.c.b16 %v1125, %v1117
    %v1422 = vpack.c.b16 %v1126, %v1118
    %v1423 = vpack.c.b16 %v1135, %v1127
    %v1424 = vpack.c.b16 %v1136, %v1128
    %v1425 = vpack.c.b16 %v1137, %v1129
    %v1426 = vpack.c.b16 %v1138, %v1130
    %v1427 = vpack.c.b16 %v1139, %v1131
    %v1428 = vpack.c.b16 %v1140, %v1132
    %v1429 = vpack.c.b16 %v1141, %v1133
    %v1430 = vpack.c.b16 %v1142, %v1134
    %v1431 = vpack.c.b16 %v1151, %v1143
    %v1432 = vpack.c.b16 %v1152, %v1144
    %v1433 = vpack.c.b16 %v1153, %v1145
    %v1434 = vpack.c.b16 %v1154, %v1146
    %v1435 = vpack.c.b16 %v1155, %v1147
    %v1436 = vpack.c.b16 %v1156, %v1148
    %v1437 = vpack.c.b16 %v1157, %v1149
    %v1438 = vpack.c.b16 %v1158, %v1150
    %v1439 = vpack.c.b16 %v1167, %v1159
    %v1440 = vpack.c.b16 %v1168, %v1160
    %v1441 = vpack.c.b16 %v1169, %v1161
    %v1442 = vpack.c.b16 %v1170, %v1162
    %v1443 = vpack.c.b16 %v1171, %v1163
    %v1444 = vpack.c.b16 %v1172, %v1164
    %v1445 = vpack.c.b16 %v1173, %v1165
    %v1446 = vpack.c.b16 %v1174, %v1166
    %v1447 = vpack.c.b16 %v1183, %v1175
    %v1448 = vpack.c.b16 %v1184, %v1176
    %v1449 = vpack.c.b16 %v1185, %v1177
    %v1450 = vpack.c.b16 %v1186, %v1178
    %v1451 = vpack.c.b16 %v1187, %v1179
    %v1452 = vpack.c.b16 %v1188, %v1180
    %v1453 = vpack.c.b16 %v1189, %v1181
    %v1454 = vpack.c.b16 %v1190, %v1182
    %v1455 = vpack.c.b16 %v1199, %v1191
    %v1456 = vpack.c.b16 %v1200, %v1192
    %v1457 = vpack.c.b16 %v1201, %v1193
    %v1458 = vpack.c.b16 %v1202, %v1194
    %v1459 = vpack.c.b16 %v1203, %v1195
    %v1460 = vpack.c.b16 %v1204, %v1196
    %v1461 = vpack.c.b16 %v1205, %v1197
    %v1462 = vpack.c.b16 %v1206, %v1198
    %1719 = vmatprep.subr.bf16.mxu0 %v1208
    %1720 = vmatpush1.bf16.msra.mxu0 %v1207
    %1721 = vmatprep.subr.bf16.mxu0 %v1216
    %1722 = vmatpush1.bf16.msra.mxu0 %v1215
    %1723 = vmatprep.subr.bf16.mxu0 %v1224
    %1724 = vmatpush1.bf16.msra.mxu0 %v1223
    %1725 = vmatprep.subr.bf16.mxu0 %v1232
    %1726 = vmatpush1.bf16.msra.mxu0 %v1231
    %1727 = vmatprep.subr.bf16.mxu0 %v1240
    %1728 = vmatpush1.bf16.msra.mxu0 %v1239
    %1729 = vmatprep.subr.bf16.mxu0 %v1248
    %1730 = vmatpush1.bf16.msra.mxu0 %v1247
    %1731 = vmatprep.subr.bf16.mxu0 %v1256
    %1732 = vmatpush1.bf16.msra.mxu0 %v1255
    %1733 = vmatprep.subr.bf16.mxu0 %v1264
    %1734 = vmatpush1.bf16.msra.mxu0 %v1263
    %1735 = vmatprep.subr.bf16.mxu0 %v1272
    %1736 = vmatpush1.bf16.msra.mxu0 %v1271
    %1737 = vmatprep.subr.bf16.mxu0 %v1280
    %1738 = vmatpush1.bf16.msra.mxu0 %v1279
    %1739 = vmatprep.subr.bf16.mxu0 %v1288
    %1740 = vmatpush1.bf16.msra.mxu0 %v1287
    %1741 = vmatprep.subr.bf16.mxu0 %v1296
    %1742 = vmatpush1.bf16.msra.mxu0 %v1295
    %1743 = vmatprep.subr.bf16.mxu0 %v1304
    %1744 = vmatpush1.bf16.msra.mxu0 %v1303
    %1745 = vmatprep.subr.bf16.mxu0 %v1312
    %1746 = vmatpush1.bf16.msra.mxu0 %v1311
    %1747 = vmatprep.subr.bf16.mxu0 %v1320
    %1748 = vmatpush1.bf16.msra.mxu0 %v1319
    %1749 = vmatprep.subr.bf16.mxu0 %v1328
    %1750 = vmatpush1.bf16.msra.mxu0 %v1327
    %1751 = vmatprep.mubr.bf16.mxu0 %v432
    %1752 = vmatmul.mubr.bf16.gmra.mrb[0].mxu0 %v431
    %v1753 = vpop.f32.mrb[0].mxu0
    %v1754 = vadd.f32 %v382, %v1753
    %v1755 = vpop.f32.mrb[0].mxu0
    %v1756 = vadd.f32 %v386, %v1755
    %v1757 = vpop.f32.mrb[0].mxu0
    %v1758 = vadd.f32 %v382, %v1757
    %v1759 = vpop.f32.mrb[0].mxu0
    %v1760 = vadd.f32 %v386, %v1759
    %1761 = vdwg.mxu0
    %1762 = vmatprep.subr.bf16.mxu0 %v1336
    %1763 = vmatpush1.bf16.msra.mxu0 %v1335
    %1764 = vmatprep.subr.bf16.mxu0 %v1344
    %1765 = vmatpush1.bf16.msra.mxu0 %v1343
    %1766 = vmatprep.subr.bf16.mxu0 %v1352
    %1767 = vmatpush1.bf16.msra.mxu0 %v1351
    %1768 = vmatprep.subr.bf16.mxu0 %v1360
    %1769 = vmatpush1.bf16.msra.mxu0 %v1359
    %1770 = vmatprep.subr.bf16.mxu0 %v1368
    %1771 = vmatpush1.bf16.msra.mxu0 %v1367
    %1772 = vmatprep.subr.bf16.mxu0 %v1376
    %1773 = vmatpush1.bf16.msra.mxu0 %v1375
    %1774 = vmatprep.subr.bf16.mxu0 %v1384
    %1775 = vmatpush1.bf16.msra.mxu0 %v1383
    %1776 = vmatprep.subr.bf16.mxu0 %v1392
    %1777 = vmatpush1.bf16.msra.mxu0 %v1391
    %1778 = vmatprep.subr.bf16.mxu0 %v1400
    %1779 = vmatpush1.bf16.msra.mxu0 %v1399
    %1780 = vmatprep.subr.bf16.mxu0 %v1408
    %1781 = vmatpush1.bf16.msra.mxu0 %v1407
    %1782 = vmatprep.subr.bf16.mxu0 %v1416
    %1783 = vmatpush1.bf16.msra.mxu0 %v1415
    %1784 = vmatprep.subr.bf16.mxu0 %v1424
    %1785 = vmatpush1.bf16.msra.mxu0 %v1423
    %1786 = vmatprep.subr.bf16.mxu0 %v1432
    %1787 = vmatpush1.bf16.msra.mxu0 %v1431
    %1788 = vmatprep.subr.bf16.mxu0 %v1440
    %1789 = vmatpush1.bf16.msra.mxu0 %v1439
    %1790 = vmatprep.subr.bf16.mxu0 %v1448
    %1791 = vmatpush1.bf16.msra.mxu0 %v1447
    %1792 = vmatprep.subr.bf16.mxu0 %v1456
    %1793 = vmatpush1.bf16.msra.mxu0 %v1455
    %1794 = vmatprep.mubr.bf16.mxu0 %v434
    %1795 = vmatmul.mubr.bf16.gmra.mrb[0].mxu0 %v433
    %v1796 = vpop.f32.mrb[0].mxu0
    %v1797 = vadd.f32 %v1754, %v1796
    %v1798 = vpop.f32.mrb[0].mxu0
    %v1799 = vadd.f32 %v1756, %v1798
    %v1800 = vpop.f32.mrb[0].mxu0
    %v1801 = vadd.f32 %v1758, %v1800
    %v1802 = vpop.f32.mrb[0].mxu0
    %v1803 = vadd.f32 %v1760, %v1802
    %1804 = vdwg.mxu0
    %1805 = vmatprep.subr.bf16.mxu0 %v1210
    %1806 = vmatpush1.bf16.msra.mxu0 %v1209
    %1807 = vmatprep.subr.bf16.mxu0 %v1218
    %1808 = vmatpush1.bf16.msra.mxu0 %v1217
    %1809 = vmatprep.subr.bf16.mxu0 %v1226
    %1810 = vmatpush1.bf16.msra.mxu0 %v1225
    %1811 = vmatprep.subr.bf16.mxu0 %v1234
    %1812 = vmatpush1.bf16.msra.mxu0 %v1233
    %1813 = vmatprep.subr.bf16.mxu0 %v1242
    %1814 = vmatpush1.bf16.msra.mxu0 %v1241
    %1815 = vmatprep.subr.bf16.mxu0 %v1250
    %1816 = vmatpush1.bf16.msra.mxu0 %v1249
    %1817 = vmatprep.subr.bf16.mxu0 %v1258
    %1818 = vmatpush1.bf16.msra.mxu0 %v1257
    %1819 = vmatprep.subr.bf16.mxu0 %v1266
    %1820 = vmatpush1.bf16.msra.mxu0 %v1265
    %1821 = vmatprep.subr.bf16.mxu0 %v1274
    %1822 = vmatpush1.bf16.msra.mxu0 %v1273
    %1823 = vmatprep.subr.bf16.mxu0 %v1282
    %1824 = vmatpush1.bf16.msra.mxu0 %v1281
    %1825 = vmatprep.subr.bf16.mxu0 %v1290
    %1826 = vmatpush1.bf16.msra.mxu0 %v1289
    %1827 = vmatprep.subr.bf16.mxu0 %v1298
    %1828 = vmatpush1.bf16.msra.mxu0 %v1297
    %1829 = vmatprep.subr.bf16.mxu0 %v1306
    %1830 = vmatpush1.bf16.msra.mxu0 %v1305
    %1831 = vmatprep.subr.bf16.mxu0 %v1314
    %1832 = vmatpush1.bf16.msra.mxu0 %v1313
    %1833 = vmatprep.subr.bf16.mxu0 %v1322
    %1834 = vmatpush1.bf16.msra.mxu0 %v1321
    %1835 = vmatprep.subr.bf16.mxu0 %v1330
    %1836 = vmatpush1.bf16.msra.mxu0 %v1329
    %1837 = vmatprep.mubr.bf16.mxu0 %v432
    %1838 = vmatmul.mubr.bf16.gmra.mrb[0].mxu0 %v431
    %v1839 = vpop.f32.mrb[0].mxu0
    %v1840 = vadd.f32 %v390, %v1839
    %v1841 = vpop.f32.mrb[0].mxu0
    %v1842 = vadd.f32 %v394, %v1841
    %v1843 = vpop.f32.mrb[0].mxu0
    %v1844 = vadd.f32 %v390, %v1843
    %v1845 = vpop.f32.mrb[0].mxu0
    %v1846 = vadd.f32 %v394, %v1845
    %1847 = vdwg.mxu0
    %1848 = vmatprep.subr.bf16.mxu0 %v1338
    %1849 = vmatpush1.bf16.msra.mxu0 %v1337
    %1850 = vmatprep.subr.bf16.mxu0 %v1346
    %1851 = vmatpush1.bf16.msra.mxu0 %v1345
    %1852 = vmatprep.subr.bf16.mxu0 %v1354
    %1853 = vmatpush1.bf16.msra.mxu0 %v1353
    %1854 = vmatprep.subr.bf16.mxu0 %v1362
    %1855 = vmatpush1.bf16.msra.mxu0 %v1361
    %1856 = vmatprep.subr.bf16.mxu0 %v1370
    %1857 = vmatpush1.bf16.msra.mxu0 %v1369
    %1858 = vmatprep.subr.bf16.mxu0 %v1378
    %1859 = vmatpush1.bf16.msra.mxu0 %v1377
    %1860 = vmatprep.subr.bf16.mxu0 %v1386
    %1861 = vmatpush1.bf16.msra.mxu0 %v1385
    %1862 = vmatprep.subr.bf16.mxu0 %v1394
    %1863 = vmatpush1.bf16.msra.mxu0 %v1393
    %1864 = vmatprep.subr.bf16.mxu0 %v1402
    %1865 = vmatpush1.bf16.msra.mxu0 %v1401
    %1866 = vmatprep.subr.bf16.mxu0 %v1410
    %1867 = vmatpush1.bf16.msra.mxu0 %v1409
    %1868 = vmatprep.subr.bf16.mxu0 %v1418
    %1869 = vmatpush1.bf16.msra.mxu0 %v1417
    %1870 = vmatprep.subr.bf16.mxu0 %v1426
    %1871 = vmatpush1.bf16.msra.mxu0 %v1425
    %1872 = vmatprep.subr.bf16.mxu0 %v1434
    %1873 = vmatpush1.bf16.msra.mxu0 %v1433
    %1874 = vmatprep.subr.bf16.mxu0 %v1442
    %1875 = vmatpush1.bf16.msra.mxu0 %v1441
    %1876 = vmatprep.subr.bf16.mxu0 %v1450
    %1877 = vmatpush1.bf16.msra.mxu0 %v1449
    %1878 = vmatprep.subr.bf16.mxu0 %v1458
    %1879 = vmatpush1.bf16.msra.mxu0 %v1457
    %1880 = vmatprep.mubr.bf16.mxu0 %v434
    %1881 = vmatmul.mubr.bf16.gmra.mrb[0].mxu0 %v433
    %v1882 = vpop.f32.mrb[0].mxu0
    %v1883 = vadd.f32 %v1840, %v1882
    %v1884 = vpop.f32.mrb[0].mxu0
    %v1885 = vadd.f32 %v1842, %v1884
    %v1886 = vpop.f32.mrb[0].mxu0
    %v1887 = vadd.f32 %v1844, %v1886
    %v1888 = vpop.f32.mrb[0].mxu0
    %v1889 = vadd.f32 %v1846, %v1888
    %1890 = vdwg.mxu0
    %1891 = vmatprep.subr.bf16.mxu0 %v1212
    %1892 = vmatpush1.bf16.msra.mxu0 %v1211
    %1893 = vmatprep.subr.bf16.mxu0 %v1220
    %1894 = vmatpush1.bf16.msra.mxu0 %v1219
    %1895 = vmatprep.subr.bf16.mxu0 %v1228
    %1896 = vmatpush1.bf16.msra.mxu0 %v1227
    %1897 = vmatprep.subr.bf16.mxu0 %v1236
    %1898 = vmatpush1.bf16.msra.mxu0 %v1235
    %1899 = vmatprep.subr.bf16.mxu0 %v1244
    %1900 = vmatpush1.bf16.msra.mxu0 %v1243
    %1901 = vmatprep.subr.bf16.mxu0 %v1252
    %1902 = vmatpush1.bf16.msra.mxu0 %v1251
    %1903 = vmatprep.subr.bf16.mxu0 %v1260
    %1904 = vmatpush1.bf16.msra.mxu0 %v1259
    %1905 = vmatprep.subr.bf16.mxu0 %v1268
    %1906 = vmatpush1.bf16.msra.mxu0 %v1267
    %1907 = vmatprep.subr.bf16.mxu0 %v1276
    %1908 = vmatpush1.bf16.msra.mxu0 %v1275
    %1909 = vmatprep.subr.bf16.mxu0 %v1284
    %1910 = vmatpush1.bf16.msra.mxu0 %v1283
    %1911 = vmatprep.subr.bf16.mxu0 %v1292
    %1912 = vmatpush1.bf16.msra.mxu0 %v1291
    %1913 = vmatprep.subr.bf16.mxu0 %v1300
    %1914 = vmatpush1.bf16.msra.mxu0 %v1299
    %1915 = vmatprep.subr.bf16.mxu0 %v1308
    %1916 = vmatpush1.bf16.msra.mxu0 %v1307
    %1917 = vmatprep.subr.bf16.mxu0 %v1316
    %1918 = vmatpush1.bf16.msra.mxu0 %v1315
    %1919 = vmatprep.subr.bf16.mxu0 %v1324
    %1920 = vmatpush1.bf16.msra.mxu0 %v1323
    %1921 = vmatprep.subr.bf16.mxu0 %v1332
    %1922 = vmatpush1.bf16.msra.mxu0 %v1331
    %1923 = vmatprep.mubr.bf16.mxu0 %v432
    %1924 = vmatmul.mubr.bf16.gmra.mrb[0].mxu0 %v431
    %v1925 = vpop.f32.mrb[0].mxu0
    %v1926 = vadd.f32 %v398, %v1925
    %v1927 = vpop.f32.mrb[0].mxu0
    %v1928 = vadd.f32 %v402, %v1927
    %v1929 = vpop.f32.mrb[0].mxu0
    %v1930 = vadd.f32 %v398, %v1929
    %v1931 = vpop.f32.mrb[0].mxu0
    %v1932 = vadd.f32 %v402, %v1931
    %1933 = vdwg.mxu0
    %1934 = vmatprep.subr.bf16.mxu0 %v1340
    %1935 = vmatpush1.bf16.msra.mxu0 %v1339
    %1936 = vmatprep.subr.bf16.mxu0 %v1348
    %1937 = vmatpush1.bf16.msra.mxu0 %v1347
    %1938 = vmatprep.subr.bf16.mxu0 %v1356
    %1939 = vmatpush1.bf16.msra.mxu0 %v1355
    %1940 = vmatprep.subr.bf16.mxu0 %v1364
    %1941 = vmatpush1.bf16.msra.mxu0 %v1363
    %1942 = vmatprep.subr.bf16.mxu0 %v1372
    %1943 = vmatpush1.bf16.msra.mxu0 %v1371
    %1944 = vmatprep.subr.bf16.mxu0 %v1380
    %1945 = vmatpush1.bf16.msra.mxu0 %v1379
    %1946 = vmatprep.subr.bf16.mxu0 %v1388
    %1947 = vmatpush1.bf16.msra.mxu0 %v1387
    %1948 = vmatprep.subr.bf16.mxu0 %v1396
    %1949 = vmatpush1.bf16.msra.mxu0 %v1395
    %1950 = vmatprep.subr.bf16.mxu0 %v1404
    %1951 = vmatpush1.bf16.msra.mxu0 %v1403
    %1952 = vmatprep.subr.bf16.mxu0 %v1412
    %1953 = vmatpush1.bf16.msra.mxu0 %v1411
    %1954 = vmatprep.subr.bf16.mxu0 %v1420
    %1955 = vmatpush1.bf16.msra.mxu0 %v1419
    %1956 = vmatprep.subr.bf16.mxu0 %v1428
    %1957 = vmatpush1.bf16.msra.mxu0 %v1427
    %1958 = vmatprep.subr.bf16.mxu0 %v1436
    %1959 = vmatpush1.bf16.msra.mxu0 %v1435
    %1960 = vmatprep.subr.bf16.mxu0 %v1444
    %1961 = vmatpush1.bf16.msra.mxu0 %v1443
    %1962 = vmatprep.subr.bf16.mxu0 %v1452
    %1963 = vmatpush1.bf16.msra.mxu0 %v1451
    %1964 = vmatprep.subr.bf16.mxu0 %v1460
    %1965 = vmatpush1.bf16.msra.mxu0 %v1459
    %1966 = vmatprep.mubr.bf16.mxu0 %v434
    %1967 = vmatmul.mubr.bf16.gmra.mrb[0].mxu0 %v433
    %v1968 = vpop.f32.mrb[0].mxu0
    %v1969 = vadd.f32 %v1926, %v1968
    %v1970 = vpop.f32.mrb[0].mxu0
    %v1971 = vadd.f32 %v1928, %v1970
    %v1972 = vpop.f32.mrb[0].mxu0
    %v1973 = vadd.f32 %v1930, %v1972
    %v1974 = vpop.f32.mrb[0].mxu0
    %v1975 = vadd.f32 %v1932, %v1974
    %1976 = vdwg.mxu0
    %1977 = vmatprep.subr.bf16.mxu0 %v1214
    %1978 = vmatpush1.bf16.msra.mxu0 %v1213
    %1979 = vmatprep.subr.bf16.mxu0 %v1222
    %1980 = vmatpush1.bf16.msra.mxu0 %v1221
    %1981 = vmatprep.subr.bf16.mxu0 %v1230
    %1982 = vmatpush1.bf16.msra.mxu0 %v1229
    %1983 = vmatprep.subr.bf16.mxu0 %v1238
    %1984 = vmatpush1.bf16.msra.mxu0 %v1237
    %1985 = vmatprep.subr.bf16.mxu0 %v1246
    %1986 = vmatpush1.bf16.msra.mxu0 %v1245
    %1987 = vmatprep.subr.bf16.mxu0 %v1254
    %1988 = vmatpush1.bf16.msra.mxu0 %v1253
    %1989 = vmatprep.subr.bf16.mxu0 %v1262
    %1990 = vmatpush1.bf16.msra.mxu0 %v1261
    %1991 = vmatprep.subr.bf16.mxu0 %v1270
    %1992 = vmatpush1.bf16.msra.mxu0 %v1269
    %1993 = vmatprep.subr.bf16.mxu0 %v1278
    %1994 = vmatpush1.bf16.msra.mxu0 %v1277
    %1995 = vmatprep.subr.bf16.mxu0 %v1286
    %1996 = vmatpush1.bf16.msra.mxu0 %v1285
    %1997 = vmatprep.subr.bf16.mxu0 %v1294
    %1998 = vmatpush1.bf16.msra.mxu0 %v1293
    %1999 = vmatprep.subr.bf16.mxu0 %v1302
    %2000 = vmatpush1.bf16.msra.mxu0 %v1301
    %2001 = vmatprep.subr.bf16.mxu0 %v1310
    %2002 = vmatpush1.bf16.msra.mxu0 %v1309
    %2003 = vmatprep.subr.bf16.mxu0 %v1318
    %2004 = vmatpush1.bf16.msra.mxu0 %v1317
    %2005 = vmatprep.subr.bf16.mxu0 %v1326
    %2006 = vmatpush1.bf16.msra.mxu0 %v1325
    %2007 = vmatprep.subr.bf16.mxu0 %v1334
    %2008 = vmatpush1.bf16.msra.mxu0 %v1333
    %2009 = vmatprep.mubr.bf16.mxu0 %v432
    %2010 = vmatmul.mubr.bf16.gmra.mrb[0].mxu0 %v431
    %v2011 = vpop.f32.mrb[0].mxu0
    %v2012 = vadd.f32 %v406, %v2011
    %v2013 = vpop.f32.mrb[0].mxu0
    %v2014 = vadd.f32 %v410, %v2013
    %v2015 = vpop.f32.mrb[0].mxu0
    %v2016 = vadd.f32 %v406, %v2015
    %v2017 = vpop.f32.mrb[0].mxu0
    %v2018 = vadd.f32 %v410, %v2017
    %2019 = vdwg.mxu0
    %2020 = vmatprep.subr.bf16.mxu0 %v1342
    %2021 = vmatpush1.bf16.msra.mxu0 %v1341
    %2022 = vmatprep.subr.bf16.mxu0 %v1350
    %2023 = vmatpush1.bf16.msra.mxu0 %v1349
    %2024 = vmatprep.subr.bf16.mxu0 %v1358
    %2025 = vmatpush1.bf16.msra.mxu0 %v1357
    %2026 = vmatprep.subr.bf16.mxu0 %v1366
    %2027 = vmatpush1.bf16.msra.mxu0 %v1365
    %2028 = vmatprep.subr.bf16.mxu0 %v1374
    %2029 = vmatpush1.bf16.msra.mxu0 %v1373
    %2030 = vmatprep.subr.bf16.mxu0 %v1382
    %2031 = vmatpush1.bf16.msra.mxu0 %v1381
    %2032 = vmatprep.subr.bf16.mxu0 %v1390
    %2033 = vmatpush1.bf16.msra.mxu0 %v1389
    %2034 = vmatprep.subr.bf16.mxu0 %v1398
    %2035 = vmatpush1.bf16.msra.mxu0 %v1397
    %2036 = vmatprep.subr.bf16.mxu0 %v1406
    %2037 = vmatpush1.bf16.msra.mxu0 %v1405
    %2038 = vmatprep.subr.bf16.mxu0 %v1414
    %2039 = vmatpush1.bf16.msra.mxu0 %v1413
    %2040 = vmatprep.subr.bf16.mxu0 %v1422
    %2041 = vmatpush1.bf16.msra.mxu0 %v1421
    %2042 = vmatprep.subr.bf16.mxu0 %v1430
    %2043 = vmatpush1.bf16.msra.mxu0 %v1429
    %2044 = vmatprep.subr.bf16.mxu0 %v1438
    %2045 = vmatpush1.bf16.msra.mxu0 %v1437
    %2046 = vmatprep.subr.bf16.mxu0 %v1446
    %2047 = vmatpush1.bf16.msra.mxu0 %v1445
    %2048 = vmatprep.subr.bf16.mxu0 %v1454
    %2049 = vmatpush1.bf16.msra.mxu0 %v1453
    %2050 = vmatprep.subr.bf16.mxu0 %v1462
    %2051 = vmatpush1.bf16.msra.mxu0 %v1461
    %2052 = vmatprep.mubr.bf16.mxu0 %v434
    %2053 = vmatmul.mubr.bf16.gmra.mrb[0].mxu0 %v433
    %v2054 = vpop.f32.mrb[0].mxu0
    %v2055 = vadd.f32 %v2012, %v2054
    %v2056 = vpop.f32.mrb[0].mxu0
    %v2057 = vadd.f32 %v2014, %v2056
    %v2058 = vpop.f32.mrb[0].mxu0
    %v2059 = vadd.f32 %v2016, %v2058
    %v2060 = vpop.f32.mrb[0].mxu0
    %v2061 = vadd.f32 %v2018, %v2060
    %2062 = vdwg.mxu0
    %v2063 = vmax.f32 %v1797, 0.0
    %v2064 = vmax.f32 %v1799, 0.0
    %v2065 = vmax.f32 %v1883, 0.0
    %v2066 = vmax.f32 %v1885, 0.0
    %v2067 = vmax.f32 %v1969, 0.0
    %v2068 = vmax.f32 %v1971, 0.0
    %v2069 = vmax.f32 %v2055, 0.0
    %v2070 = vmax.f32 %v2057, 0.0
    %v2071 = vmax.f32 %v1801, 0.0
    %v2072 = vmax.f32 %v1803, 0.0
    %v2073 = vmax.f32 %v1887, 0.0
    %v2074 = vmax.f32 %v1889, 0.0
    %v2075 = vmax.f32 %v1973, 0.0
    %v2076 = vmax.f32 %v1975, 0.0
    %v2077 = vmax.f32 %v2059, 0.0
    %v2078 = vmax.f32 %v2061, 0.0
    %v2079 = vpack.c.bf16 %v2071, %v2063
    %v2080 = vpack.c.bf16 %v2072, %v2064
    %v2081 = vpack.c.bf16 %v2073, %v2065
    %v2082 = vpack.c.bf16 %v2074, %v2066
    %v2083 = vpack.c.bf16 %v2075, %v2067
    %v2084 = vpack.c.bf16 %v2076, %v2068
    %v2085 = vpack.c.bf16 %v2077, %v2069
    %v2086 = vpack.c.bf16 %v2078, %v2070
    %v2087 = vld [vmem:[#allocation8] sm:$0xff]
    %v2088 = vld [vmem:[#allocation8 + $0x8] sm:$0xff]
    %v2089 = vld [vmem:[#allocation8 + $0x10] sm:$0xff]
    %v2090 = vld [vmem:[#allocation8 + $0x18] sm:$0xff]
    %v2091 = vld [vmem:[#allocation8 + $0x20] sm:$0xff]
    %v2092 = vld [vmem:[#allocation8 + $0x28] sm:$0xff]
    %v2093 = vld [vmem:[#allocation8 + $0x30] sm:$0xff]
    %v2094 = vld [vmem:[#allocation8 + $0x38] sm:$0xff]
    %v2095 = vld [vmem:[#allocation8 + $0x40] sm:$0xff]
    %v2096 = vld [vmem:[#allocation8 + $0x48] sm:$0xff]
    %v2097 = vld [vmem:[#allocation8 + $0x50] sm:$0xff]
    %v2098 = vld [vmem:[#allocation8 + $0x58] sm:$0xff]
    %v2099 = vld [vmem:[#allocation8 + $0x60] sm:$0xff]
    %v2100 = vld [vmem:[#allocation8 + $0x68] sm:$0xff]
    %v2101 = vld [vmem:[#allocation8 + $0x70] sm:$0xff]
    %v2102 = vld [vmem:[#allocation8 + $0x78] sm:$0xff]
    %v2103 = vld [vmem:[#allocation8 + $0x80] sm:$0xff]
    %v2104 = vld [vmem:[#allocation8 + $0x88] sm:$0xff]
    %v2105 = vld [vmem:[#allocation8 + $0x90] sm:$0xff]
    %v2106 = vld [vmem:[#allocation8 + $0x98] sm:$0xff]
    %v2107 = vld [vmem:[#allocation8 + $0xa0] sm:$0xff]
    %v2108 = vld [vmem:[#allocation8 + $0xa8] sm:$0xff]
    %v2109 = vld [vmem:[#allocation8 + $0xb0] sm:$0xff]
    %v2110 = vld [vmem:[#allocation8 + $0xb8] sm:$0xff]
    %v2111 = vld [vmem:[#allocation8 + $0xc0] sm:$0xff]
    %v2112 = vld [vmem:[#allocation8 + $0xc8] sm:$0xff]
    %v2113 = vld [vmem:[#allocation8 + $0xd0] sm:$0xff]
    %v2114 = vld [vmem:[#allocation8 + $0xd8] sm:$0xff]
    %v2115 = vld [vmem:[#allocation8 + $0xe0] sm:$0xff]
    %v2116 = vld [vmem:[#allocation8 + $0xe8] sm:$0xff]
    %v2117 = vld [vmem:[#allocation8 + $0xf0] sm:$0xff]
    %v2118 = vld [vmem:[#allocation8 + $0xf8] sm:$0xff]
    %v2119 = vld [vmem:[#allocation8 + $0x100] sm:$0xff]
    %v2120 = vld [vmem:[#allocation8 + $0x108] sm:$0xff]
    %v2121 = vld [vmem:[#allocation8 + $0x110] sm:$0xff]
    %v2122 = vld [vmem:[#allocation8 + $0x118] sm:$0xff]
    %v2123 = vld [vmem:[#allocation8 + $0x120] sm:$0xff]
    %v2124 = vld [vmem:[#allocation8 + $0x128] sm:$0xff]
    %v2125 = vld [vmem:[#allocation8 + $0x130] sm:$0xff]
    %v2126 = vld [vmem:[#allocation8 + $0x138] sm:$0xff]
    %v2127 = vld [vmem:[#allocation8 + $0x140] sm:$0xff]
    %v2128 = vld [vmem:[#allocation8 + $0x148] sm:$0xff]
    %v2129 = vld [vmem:[#allocation8 + $0x150] sm:$0xff]
    %v2130 = vld [vmem:[#allocation8 + $0x158] sm:$0xff]
    %v2131 = vld [vmem:[#allocation8 + $0x160] sm:$0xff]
    %v2132 = vld [vmem:[#allocation8 + $0x168] sm:$0xff]
    %v2133 = vld [vmem:[#allocation8 + $0x170] sm:$0xff]
    %v2134 = vld [vmem:[#allocation8 + $0x178] sm:$0xff]
    %v2135 = vld [vmem:[#allocation8 + $0x180] sm:$0xff]
    %v2136 = vld [vmem:[#allocation8 + $0x188] sm:$0xff]
    %v2137 = vld [vmem:[#allocation8 + $0x190] sm:$0xff]
    %v2138 = vld [vmem:[#allocation8 + $0x198] sm:$0xff]
    %v2139 = vld [vmem:[#allocation8 + $0x1a0] sm:$0xff]
    %v2140 = vld [vmem:[#allocation8 + $0x1a8] sm:$0xff]
    %v2141 = vld [vmem:[#allocation8 + $0x1b0] sm:$0xff]
    %v2142 = vld [vmem:[#allocation8 + $0x1b8] sm:$0xff]
    %v2143 = vld [vmem:[#allocation8 + $0x1c0] sm:$0xff]
    %v2144 = vld [vmem:[#allocation8 + $0x1c8] sm:$0xff]
    %v2145 = vld [vmem:[#allocation8 + $0x1d0] sm:$0xff]
    %v2146 = vld [vmem:[#allocation8 + $0x1d8] sm:$0xff]
    %v2147 = vld [vmem:[#allocation8 + $0x1e0] sm:$0xff]
    %v2148 = vld [vmem:[#allocation8 + $0x1e8] sm:$0xff]
    %v2149 = vld [vmem:[#allocation8 + $0x1f0] sm:$0xff]
    %v2150 = vld [vmem:[#allocation8 + $0x1f8] sm:$0xff]
    %v2151 = vld [vmem:[#allocation8 + $0x200] sm:$0xff]
    %v2152 = vld [vmem:[#allocation8 + $0x208] sm:$0xff]
    %v2153 = vld [vmem:[#allocation8 + $0x210] sm:$0xff]
    %v2154 = vld [vmem:[#allocation8 + $0x218] sm:$0xff]
    %v2155 = vld [vmem:[#allocation8 + $0x220] sm:$0xff]
    %v2156 = vld [vmem:[#allocation8 + $0x228] sm:$0xff]
    %v2157 = vld [vmem:[#allocation8 + $0x230] sm:$0xff]
    %v2158 = vld [vmem:[#allocation8 + $0x238] sm:$0xff]
    %v2159 = vld [vmem:[#allocation8 + $0x240] sm:$0xff]
    %v2160 = vld [vmem:[#allocation8 + $0x248] sm:$0xff]
    %v2161 = vld [vmem:[#allocation8 + $0x250] sm:$0xff]
    %v2162 = vld [vmem:[#allocation8 + $0x258] sm:$0xff]
    %v2163 = vld [vmem:[#allocation8 + $0x260] sm:$0xff]
    %v2164 = vld [vmem:[#allocation8 + $0x268] sm:$0xff]
    %v2165 = vld [vmem:[#allocation8 + $0x270] sm:$0xff]
    %v2166 = vld [vmem:[#allocation8 + $0x278] sm:$0xff]
    %v2167 = vld [vmem:[#allocation8 + $0x280] sm:$0xff]
    %v2168 = vld [vmem:[#allocation8 + $0x288] sm:$0xff]
    %v2169 = vld [vmem:[#allocation8 + $0x290] sm:$0xff]
    %v2170 = vld [vmem:[#allocation8 + $0x298] sm:$0xff]
    %v2171 = vld [vmem:[#allocation8 + $0x2a0] sm:$0xff]
    %v2172 = vld [vmem:[#allocation8 + $0x2a8] sm:$0xff]
    %v2173 = vld [vmem:[#allocation8 + $0x2b0] sm:$0xff]
    %v2174 = vld [vmem:[#allocation8 + $0x2b8] sm:$0xff]
    %v2175 = vld [vmem:[#allocation8 + $0x2c0] sm:$0xff]
    %v2176 = vld [vmem:[#allocation8 + $0x2c8] sm:$0xff]
    %v2177 = vld [vmem:[#allocation8 + $0x2d0] sm:$0xff]
    %v2178 = vld [vmem:[#allocation8 + $0x2d8] sm:$0xff]
    %v2179 = vld [vmem:[#allocation8 + $0x2e0] sm:$0xff]
    %v2180 = vld [vmem:[#allocation8 + $0x2e8] sm:$0xff]
    %v2181 = vld [vmem:[#allocation8 + $0x2f0] sm:$0xff]
    %v2182 = vld [vmem:[#allocation8 + $0x2f8] sm:$0xff]
    %v2183 = vld [vmem:[#allocation8 + $0x300] sm:$0xff]
    %v2184 = vld [vmem:[#allocation8 + $0x308] sm:$0xff]
    %v2185 = vld [vmem:[#allocation8 + $0x310] sm:$0xff]
    %v2186 = vld [vmem:[#allocation8 + $0x318] sm:$0xff]
    %v2187 = vld [vmem:[#allocation8 + $0x320] sm:$0xff]
    %v2188 = vld [vmem:[#allocation8 + $0x328] sm:$0xff]
    %v2189 = vld [vmem:[#allocation8 + $0x330] sm:$0xff]
    %v2190 = vld [vmem:[#allocation8 + $0x338] sm:$0xff]
    %v2191 = vld [vmem:[#allocation8 + $0x340] sm:$0xff]
    %v2192 = vld [vmem:[#allocation8 + $0x348] sm:$0xff]
    %v2193 = vld [vmem:[#allocation8 + $0x350] sm:$0xff]
    %v2194 = vld [vmem:[#allocation8 + $0x358] sm:$0xff]
    %v2195 = vld [vmem:[#allocation8 + $0x360] sm:$0xff]
    %v2196 = vld [vmem:[#allocation8 + $0x368] sm:$0xff]
    %v2197 = vld [vmem:[#allocation8 + $0x370] sm:$0xff]
    %v2198 = vld [vmem:[#allocation8 + $0x378] sm:$0xff]
    %v2199 = vld [vmem:[#allocation8 + $0x380] sm:$0xff]
    %v2200 = vld [vmem:[#allocation8 + $0x388] sm:$0xff]
    %v2201 = vld [vmem:[#allocation8 + $0x390] sm:$0xff]
    %v2202 = vld [vmem:[#allocation8 + $0x398] sm:$0xff]
    %v2203 = vld [vmem:[#allocation8 + $0x3a0] sm:$0xff]
    %v2204 = vld [vmem:[#allocation8 + $0x3a8] sm:$0xff]
    %v2205 = vld [vmem:[#allocation8 + $0x3b0] sm:$0xff]
    %v2206 = vld [vmem:[#allocation8 + $0x3b8] sm:$0xff]
    %v2207 = vld [vmem:[#allocation8 + $0x3c0] sm:$0xff]
    %v2208 = vld [vmem:[#allocation8 + $0x3c8] sm:$0xff]
    %v2209 = vld [vmem:[#allocation8 + $0x3d0] sm:$0xff]
    %v2210 = vld [vmem:[#allocation8 + $0x3d8] sm:$0xff]
    %v2211 = vld [vmem:[#allocation8 + $0x3e0] sm:$0xff]
    %v2212 = vld [vmem:[#allocation8 + $0x3e8] sm:$0xff]
    %v2213 = vld [vmem:[#allocation8 + $0x3f0] sm:$0xff]
    %v2214 = vld [vmem:[#allocation8 + $0x3f8] sm:$0xff]
    %v2215 = vld [vmem:[#allocation8 + $0x400] sm:$0xff]
    %v2216 = vld [vmem:[#allocation8 + $0x408] sm:$0xff]
    %v2217 = vld [vmem:[#allocation8 + $0x410] sm:$0xff]
    %v2218 = vld [vmem:[#allocation8 + $0x418] sm:$0xff]
    %v2219 = vld [vmem:[#allocation8 + $0x420] sm:$0xff]
    %v2220 = vld [vmem:[#allocation8 + $0x428] sm:$0xff]
    %v2221 = vld [vmem:[#allocation8 + $0x430] sm:$0xff]
    %v2222 = vld [vmem:[#allocation8 + $0x438] sm:$0xff]
    %v2223 = vld [vmem:[#allocation8 + $0x440] sm:$0xff]
    %v2224 = vld [vmem:[#allocation8 + $0x448] sm:$0xff]
    %v2225 = vld [vmem:[#allocation8 + $0x450] sm:$0xff]
    %v2226 = vld [vmem:[#allocation8 + $0x458] sm:$0xff]
    %v2227 = vld [vmem:[#allocation8 + $0x460] sm:$0xff]
    %v2228 = vld [vmem:[#allocation8 + $0x468] sm:$0xff]
    %v2229 = vld [vmem:[#allocation8 + $0x470] sm:$0xff]
    %v2230 = vld [vmem:[#allocation8 + $0x478] sm:$0xff]
    %v2231 = vld [vmem:[#allocation8 + $0x480] sm:$0xff]
    %v2232 = vld [vmem:[#allocation8 + $0x488] sm:$0xff]
    %v2233 = vld [vmem:[#allocation8 + $0x490] sm:$0xff]
    %v2234 = vld [vmem:[#allocation8 + $0x498] sm:$0xff]
    %v2235 = vld [vmem:[#allocation8 + $0x4a0] sm:$0xff]
    %v2236 = vld [vmem:[#allocation8 + $0x4a8] sm:$0xff]
    %v2237 = vld [vmem:[#allocation8 + $0x4b0] sm:$0xff]
    %v2238 = vld [vmem:[#allocation8 + $0x4b8] sm:$0xff]
    %v2239 = vld [vmem:[#allocation8 + $0x4c0] sm:$0xff]
    %v2240 = vld [vmem:[#allocation8 + $0x4c8] sm:$0xff]
    %v2241 = vld [vmem:[#allocation8 + $0x4d0] sm:$0xff]
    %v2242 = vld [vmem:[#allocation8 + $0x4d8] sm:$0xff]
    %v2243 = vld [vmem:[#allocation8 + $0x4e0] sm:$0xff]
    %v2244 = vld [vmem:[#allocation8 + $0x4e8] sm:$0xff]
    %v2245 = vld [vmem:[#allocation8 + $0x4f0] sm:$0xff]
    %v2246 = vld [vmem:[#allocation8 + $0x4f8] sm:$0xff]
    %v2247 = vld [vmem:[#allocation8 + $0x500] sm:$0xff]
    %v2248 = vld [vmem:[#allocation8 + $0x508] sm:$0xff]
    %v2249 = vld [vmem:[#allocation8 + $0x510] sm:$0xff]
    %v2250 = vld [vmem:[#allocation8 + $0x518] sm:$0xff]
    %v2251 = vld [vmem:[#allocation8 + $0x520] sm:$0xff]
    %v2252 = vld [vmem:[#allocation8 + $0x528] sm:$0xff]
    %v2253 = vld [vmem:[#allocation8 + $0x530] sm:$0xff]
    %v2254 = vld [vmem:[#allocation8 + $0x538] sm:$0xff]
    %v2255 = vld [vmem:[#allocation8 + $0x540] sm:$0xff]
    %v2256 = vld [vmem:[#allocation8 + $0x548] sm:$0xff]
    %v2257 = vld [vmem:[#allocation8 + $0x550] sm:$0xff]
    %v2258 = vld [vmem:[#allocation8 + $0x558] sm:$0xff]
    %v2259 = vld [vmem:[#allocation8 + $0x560] sm:$0xff]
    %v2260 = vld [vmem:[#allocation8 + $0x568] sm:$0xff]
    %v2261 = vld [vmem:[#allocation8 + $0x570] sm:$0xff]
    %v2262 = vld [vmem:[#allocation8 + $0x578] sm:$0xff]
    %v2263 = vld [vmem:[#allocation8 + $0x580] sm:$0xff]
    %v2264 = vld [vmem:[#allocation8 + $0x588] sm:$0xff]
    %v2265 = vld [vmem:[#allocation8 + $0x590] sm:$0xff]
    %v2266 = vld [vmem:[#allocation8 + $0x598] sm:$0xff]
    %v2267 = vld [vmem:[#allocation8 + $0x5a0] sm:$0xff]
    %v2268 = vld [vmem:[#allocation8 + $0x5a8] sm:$0xff]
    %v2269 = vld [vmem:[#allocation8 + $0x5b0] sm:$0xff]
    %v2270 = vld [vmem:[#allocation8 + $0x5b8] sm:$0xff]
    %v2271 = vld [vmem:[#allocation8 + $0x5c0] sm:$0xff]
    %v2272 = vld [vmem:[#allocation8 + $0x5c8] sm:$0xff]
    %v2273 = vld [vmem:[#allocation8 + $0x5d0] sm:$0xff]
    %v2274 = vld [vmem:[#allocation8 + $0x5d8] sm:$0xff]
    %v2275 = vld [vmem:[#allocation8 + $0x5e0] sm:$0xff]
    %v2276 = vld [vmem:[#allocation8 + $0x5e8] sm:$0xff]
    %v2277 = vld [vmem:[#allocation8 + $0x5f0] sm:$0xff]
    %v2278 = vld [vmem:[#allocation8 + $0x5f8] sm:$0xff]
    %v2279 = vld [vmem:[#allocation8 + $0x600] sm:$0xff]
    %v2280 = vld [vmem:[#allocation8 + $0x608] sm:$0xff]
    %v2281 = vld [vmem:[#allocation8 + $0x610] sm:$0xff]
    %v2282 = vld [vmem:[#allocation8 + $0x618] sm:$0xff]
    %v2283 = vld [vmem:[#allocation8 + $0x620] sm:$0xff]
    %v2284 = vld [vmem:[#allocation8 + $0x628] sm:$0xff]
    %v2285 = vld [vmem:[#allocation8 + $0x630] sm:$0xff]
    %v2286 = vld [vmem:[#allocation8 + $0x638] sm:$0xff]
    %v2287 = vld [vmem:[#allocation8 + $0x640] sm:$0xff]
    %v2288 = vld [vmem:[#allocation8 + $0x648] sm:$0xff]
    %v2289 = vld [vmem:[#allocation8 + $0x650] sm:$0xff]
    %v2290 = vld [vmem:[#allocation8 + $0x658] sm:$0xff]
    %v2291 = vld [vmem:[#allocation8 + $0x660] sm:$0xff]
    %v2292 = vld [vmem:[#allocation8 + $0x668] sm:$0xff]
    %v2293 = vld [vmem:[#allocation8 + $0x670] sm:$0xff]
    %v2294 = vld [vmem:[#allocation8 + $0x678] sm:$0xff]
    %v2295 = vld [vmem:[#allocation8 + $0x680] sm:$0xff]
    %v2296 = vld [vmem:[#allocation8 + $0x688] sm:$0xff]
    %v2297 = vld [vmem:[#allocation8 + $0x690] sm:$0xff]
    %v2298 = vld [vmem:[#allocation8 + $0x698] sm:$0xff]
    %v2299 = vld [vmem:[#allocation8 + $0x6a0] sm:$0xff]
    %v2300 = vld [vmem:[#allocation8 + $0x6a8] sm:$0xff]
    %v2301 = vld [vmem:[#allocation8 + $0x6b0] sm:$0xff]
    %v2302 = vld [vmem:[#allocation8 + $0x6b8] sm:$0xff]
    %v2303 = vld [vmem:[#allocation8 + $0x6c0] sm:$0xff]
    %v2304 = vld [vmem:[#allocation8 + $0x6c8] sm:$0xff]
    %v2305 = vld [vmem:[#allocation8 + $0x6d0] sm:$0xff]
    %v2306 = vld [vmem:[#allocation8 + $0x6d8] sm:$0xff]
    %v2307 = vld [vmem:[#allocation8 + $0x6e0] sm:$0xff]
    %v2308 = vld [vmem:[#allocation8 + $0x6e8] sm:$0xff]
    %v2309 = vld [vmem:[#allocation8 + $0x6f0] sm:$0xff]
    %v2310 = vld [vmem:[#allocation8 + $0x6f8] sm:$0xff]
    %v2311 = vld [vmem:[#allocation8 + $0x700] sm:$0xff]
    %v2312 = vld [vmem:[#allocation8 + $0x708] sm:$0xff]
    %v2313 = vld [vmem:[#allocation8 + $0x710] sm:$0xff]
    %v2314 = vld [vmem:[#allocation8 + $0x718] sm:$0xff]
    %v2315 = vld [vmem:[#allocation8 + $0x720] sm:$0xff]
    %v2316 = vld [vmem:[#allocation8 + $0x728] sm:$0xff]
    %v2317 = vld [vmem:[#allocation8 + $0x730] sm:$0xff]
    %v2318 = vld [vmem:[#allocation8 + $0x738] sm:$0xff]
    %v2319 = vld [vmem:[#allocation8 + $0x740] sm:$0xff]
    %v2320 = vld [vmem:[#allocation8 + $0x748] sm:$0xff]
    %v2321 = vld [vmem:[#allocation8 + $0x750] sm:$0xff]
    %v2322 = vld [vmem:[#allocation8 + $0x758] sm:$0xff]
    %v2323 = vld [vmem:[#allocation8 + $0x760] sm:$0xff]
    %v2324 = vld [vmem:[#allocation8 + $0x768] sm:$0xff]
    %v2325 = vld [vmem:[#allocation8 + $0x770] sm:$0xff]
    %v2326 = vld [vmem:[#allocation8 + $0x778] sm:$0xff]
    %v2327 = vld [vmem:[#allocation8 + $0x780] sm:$0xff]
    %v2328 = vld [vmem:[#allocation8 + $0x788] sm:$0xff]
    %v2329 = vld [vmem:[#allocation8 + $0x790] sm:$0xff]
    %v2330 = vld [vmem:[#allocation8 + $0x798] sm:$0xff]
    %v2331 = vld [vmem:[#allocation8 + $0x7a0] sm:$0xff]
    %v2332 = vld [vmem:[#allocation8 + $0x7a8] sm:$0xff]
    %v2333 = vld [vmem:[#allocation8 + $0x7b0] sm:$0xff]
    %v2334 = vld [vmem:[#allocation8 + $0x7b8] sm:$0xff]
    %v2335 = vld [vmem:[#allocation8 + $0x7c0] sm:$0xff]
    %v2336 = vld [vmem:[#allocation8 + $0x7c8] sm:$0xff]
    %v2337 = vld [vmem:[#allocation8 + $0x7d0] sm:$0xff]
    %v2338 = vld [vmem:[#allocation8 + $0x7d8] sm:$0xff]
    %v2339 = vld [vmem:[#allocation8 + $0x7e0] sm:$0xff]
    %v2340 = vld [vmem:[#allocation8 + $0x7e8] sm:$0xff]
    %v2341 = vld [vmem:[#allocation8 + $0x7f0] sm:$0xff]
    %v2342 = vld [vmem:[#allocation8 + $0x7f8] sm:$0xff]
    %v2343 = vld [vmem:[#allocation8 + $0x800] sm:$0xff]
    %v2344 = vld [vmem:[#allocation8 + $0x808] sm:$0xff]
    %v2345 = vld [vmem:[#allocation8 + $0x810] sm:$0xff]
    %v2346 = vld [vmem:[#allocation8 + $0x818] sm:$0xff]
    %v2347 = vld [vmem:[#allocation8 + $0x820] sm:$0xff]
    %v2348 = vld [vmem:[#allocation8 + $0x828] sm:$0xff]
    %v2349 = vld [vmem:[#allocation8 + $0x830] sm:$0xff]
    %v2350 = vld [vmem:[#allocation8 + $0x838] sm:$0xff]
    %v2351 = vld [vmem:[#allocation8 + $0x840] sm:$0xff]
    %v2352 = vld [vmem:[#allocation8 + $0x848] sm:$0xff]
    %v2353 = vld [vmem:[#allocation8 + $0x850] sm:$0xff]
    %v2354 = vld [vmem:[#allocation8 + $0x858] sm:$0xff]
    %v2355 = vld [vmem:[#allocation8 + $0x860] sm:$0xff]
    %v2356 = vld [vmem:[#allocation8 + $0x868] sm:$0xff]
    %v2357 = vld [vmem:[#allocation8 + $0x870] sm:$0xff]
    %v2358 = vld [vmem:[#allocation8 + $0x878] sm:$0xff]
    %v2359 = vld [vmem:[#allocation8 + $0x880] sm:$0xff]
    %v2360 = vld [vmem:[#allocation8 + $0x888] sm:$0xff]
    %v2361 = vld [vmem:[#allocation8 + $0x890] sm:$0xff]
    %v2362 = vld [vmem:[#allocation8 + $0x898] sm:$0xff]
    %v2363 = vld [vmem:[#allocation8 + $0x8a0] sm:$0xff]
    %v2364 = vld [vmem:[#allocation8 + $0x8a8] sm:$0xff]
    %v2365 = vld [vmem:[#allocation8 + $0x8b0] sm:$0xff]
    %v2366 = vld [vmem:[#allocation8 + $0x8b8] sm:$0xff]
    %v2367 = vld [vmem:[#allocation8 + $0x8c0] sm:$0xff]
    %v2368 = vld [vmem:[#allocation8 + $0x8c8] sm:$0xff]
    %v2369 = vld [vmem:[#allocation8 + $0x8d0] sm:$0xff]
    %v2370 = vld [vmem:[#allocation8 + $0x8d8] sm:$0xff]
    %v2371 = vld [vmem:[#allocation8 + $0x8e0] sm:$0xff]
    %v2372 = vld [vmem:[#allocation8 + $0x8e8] sm:$0xff]
    %v2373 = vld [vmem:[#allocation8 + $0x8f0] sm:$0xff]
    %v2374 = vld [vmem:[#allocation8 + $0x8f8] sm:$0xff]
    %v2375 = vld [vmem:[#allocation8 + $0x900] sm:$0xff]
    %v2376 = vld [vmem:[#allocation8 + $0x908] sm:$0xff]
    %v2377 = vld [vmem:[#allocation8 + $0x910] sm:$0xff]
    %v2378 = vld [vmem:[#allocation8 + $0x918] sm:$0xff]
    %v2379 = vld [vmem:[#allocation8 + $0x920] sm:$0xff]
    %v2380 = vld [vmem:[#allocation8 + $0x928] sm:$0xff]
    %v2381 = vld [vmem:[#allocation8 + $0x930] sm:$0xff]
    %v2382 = vld [vmem:[#allocation8 + $0x938] sm:$0xff]
    %v2383 = vld [vmem:[#allocation8 + $0x940] sm:$0xff]
    %v2384 = vld [vmem:[#allocation8 + $0x948] sm:$0xff]
    %v2385 = vld [vmem:[#allocation8 + $0x950] sm:$0xff]
    %v2386 = vld [vmem:[#allocation8 + $0x958] sm:$0xff]
    %v2387 = vld [vmem:[#allocation8 + $0x960] sm:$0xff]
    %v2388 = vld [vmem:[#allocation8 + $0x968] sm:$0xff]
    %v2389 = vld [vmem:[#allocation8 + $0x970] sm:$0xff]
    %v2390 = vld [vmem:[#allocation8 + $0x978] sm:$0xff]
    %v2391 = vld [vmem:[#allocation8 + $0x980] sm:$0xff]
    %v2392 = vld [vmem:[#allocation8 + $0x988] sm:$0xff]
    %v2393 = vld [vmem:[#allocation8 + $0x990] sm:$0xff]
    %v2394 = vld [vmem:[#allocation8 + $0x998] sm:$0xff]
    %v2395 = vld [vmem:[#allocation8 + $0x9a0] sm:$0xff]
    %v2396 = vld [vmem:[#allocation8 + $0x9a8] sm:$0xff]
    %v2397 = vld [vmem:[#allocation8 + $0x9b0] sm:$0xff]
    %v2398 = vld [vmem:[#allocation8 + $0x9b8] sm:$0xff]
    %v2399 = vld [vmem:[#allocation8 + $0x9c0] sm:$0xff]
    %v2400 = vld [vmem:[#allocation8 + $0x9c8] sm:$0xff]
    %v2401 = vld [vmem:[#allocation8 + $0x9d0] sm:$0xff]
    %v2402 = vld [vmem:[#allocation8 + $0x9d8] sm:$0xff]
    %v2403 = vld [vmem:[#allocation8 + $0x9e0] sm:$0xff]
    %v2404 = vld [vmem:[#allocation8 + $0x9e8] sm:$0xff]
    %v2405 = vld [vmem:[#allocation8 + $0x9f0] sm:$0xff]
    %v2406 = vld [vmem:[#allocation8 + $0x9f8] sm:$0xff]
    %v2407 = vld [vmem:[#allocation8 + $0xa00] sm:$0xff]
    %v2408 = vld [vmem:[#allocation8 + $0xa08] sm:$0xff]
    %v2409 = vld [vmem:[#allocation8 + $0xa10] sm:$0xff]
    %v2410 = vld [vmem:[#allocation8 + $0xa18] sm:$0xff]
    %v2411 = vld [vmem:[#allocation8 + $0xa20] sm:$0xff]
    %v2412 = vld [vmem:[#allocation8 + $0xa28] sm:$0xff]
    %v2413 = vld [vmem:[#allocation8 + $0xa30] sm:$0xff]
    %v2414 = vld [vmem:[#allocation8 + $0xa38] sm:$0xff]
    %v2415 = vld [vmem:[#allocation8 + $0xa40] sm:$0xff]
    %v2416 = vld [vmem:[#allocation8 + $0xa48] sm:$0xff]
    %v2417 = vld [vmem:[#allocation8 + $0xa50] sm:$0xff]
    %v2418 = vld [vmem:[#allocation8 + $0xa58] sm:$0xff]
    %v2419 = vld [vmem:[#allocation8 + $0xa60] sm:$0xff]
    %v2420 = vld [vmem:[#allocation8 + $0xa68] sm:$0xff]
    %v2421 = vld [vmem:[#allocation8 + $0xa70] sm:$0xff]
    %v2422 = vld [vmem:[#allocation8 + $0xa78] sm:$0xff]
    %v2423 = vld [vmem:[#allocation8 + $0xa80] sm:$0xff]
    %v2424 = vld [vmem:[#allocation8 + $0xa88] sm:$0xff]
    %v2425 = vld [vmem:[#allocation8 + $0xa90] sm:$0xff]
    %v2426 = vld [vmem:[#allocation8 + $0xa98] sm:$0xff]
    %v2427 = vld [vmem:[#allocation8 + $0xaa0] sm:$0xff]
    %v2428 = vld [vmem:[#allocation8 + $0xaa8] sm:$0xff]
    %v2429 = vld [vmem:[#allocation8 + $0xab0] sm:$0xff]
    %v2430 = vld [vmem:[#allocation8 + $0xab8] sm:$0xff]
    %v2431 = vld [vmem:[#allocation8 + $0xac0] sm:$0xff]
    %v2432 = vld [vmem:[#allocation8 + $0xac8] sm:$0xff]
    %v2433 = vld [vmem:[#allocation8 + $0xad0] sm:$0xff]
    %v2434 = vld [vmem:[#allocation8 + $0xad8] sm:$0xff]
    %v2435 = vld [vmem:[#allocation8 + $0xae0] sm:$0xff]
    %v2436 = vld [vmem:[#allocation8 + $0xae8] sm:$0xff]
    %v2437 = vld [vmem:[#allocation8 + $0xaf0] sm:$0xff]
    %v2438 = vld [vmem:[#allocation8 + $0xaf8] sm:$0xff]
    %v2439 = vld [vmem:[#allocation8 + $0xb00] sm:$0xff]
    %v2440 = vld [vmem:[#allocation8 + $0xb08] sm:$0xff]
    %v2441 = vld [vmem:[#allocation8 + $0xb10] sm:$0xff]
    %v2442 = vld [vmem:[#allocation8 + $0xb18] sm:$0xff]
    %v2443 = vld [vmem:[#allocation8 + $0xb20] sm:$0xff]
    %v2444 = vld [vmem:[#allocation8 + $0xb28] sm:$0xff]
    %v2445 = vld [vmem:[#allocation8 + $0xb30] sm:$0xff]
    %v2446 = vld [vmem:[#allocation8 + $0xb38] sm:$0xff]
    %v2447 = vld [vmem:[#allocation8 + $0xb40] sm:$0xff]
    %v2448 = vld [vmem:[#allocation8 + $0xb48] sm:$0xff]
    %v2449 = vld [vmem:[#allocation8 + $0xb50] sm:$0xff]
    %v2450 = vld [vmem:[#allocation8 + $0xb58] sm:$0xff]
    %v2451 = vld [vmem:[#allocation8 + $0xb60] sm:$0xff]
    %v2452 = vld [vmem:[#allocation8 + $0xb68] sm:$0xff]
    %v2453 = vld [vmem:[#allocation8 + $0xb70] sm:$0xff]
    %v2454 = vld [vmem:[#allocation8 + $0xb78] sm:$0xff]
    %v2455 = vld [vmem:[#allocation8 + $0xb80] sm:$0xff]
    %v2456 = vld [vmem:[#allocation8 + $0xb88] sm:$0xff]
    %v2457 = vld [vmem:[#allocation8 + $0xb90] sm:$0xff]
    %v2458 = vld [vmem:[#allocation8 + $0xb98] sm:$0xff]
    %v2459 = vld [vmem:[#allocation8 + $0xba0] sm:$0xff]
    %v2460 = vld [vmem:[#allocation8 + $0xba8] sm:$0xff]
    %v2461 = vld [vmem:[#allocation8 + $0xbb0] sm:$0xff]
    %v2462 = vld [vmem:[#allocation8 + $0xbb8] sm:$0xff]
    %v2463 = vld [vmem:[#allocation8 + $0xbc0] sm:$0xff]
    %v2464 = vld [vmem:[#allocation8 + $0xbc8] sm:$0xff]
    %v2465 = vld [vmem:[#allocation8 + $0xbd0] sm:$0xff]
    %v2466 = vld [vmem:[#allocation8 + $0xbd8] sm:$0xff]
    %v2467 = vld [vmem:[#allocation8 + $0xbe0] sm:$0xff]
    %v2468 = vld [vmem:[#allocation8 + $0xbe8] sm:$0xff]
    %v2469 = vld [vmem:[#allocation8 + $0xbf0] sm:$0xff]
    %v2470 = vld [vmem:[#allocation8 + $0xbf8] sm:$0xff]
    %v2471 = vld [vmem:[#allocation8 + $0xc00] sm:$0xff]
    %v2472 = vld [vmem:[#allocation8 + $0xc08] sm:$0xff]
    %v2473 = vld [vmem:[#allocation8 + $0xc10] sm:$0xff]
    %v2474 = vld [vmem:[#allocation8 + $0xc18] sm:$0xff]
    %v2475 = vld [vmem:[#allocation8 + $0xc20] sm:$0xff]
    %v2476 = vld [vmem:[#allocation8 + $0xc28] sm:$0xff]
    %v2477 = vld [vmem:[#allocation8 + $0xc30] sm:$0xff]
    %v2478 = vld [vmem:[#allocation8 + $0xc38] sm:$0xff]
    %v2479 = vld [vmem:[#allocation8 + $0xc40] sm:$0xff]
    %v2480 = vld [vmem:[#allocation8 + $0xc48] sm:$0xff]
    %v2481 = vld [vmem:[#allocation8 + $0xc50] sm:$0xff]
    %v2482 = vld [vmem:[#allocation8 + $0xc58] sm:$0xff]
    %v2483 = vld [vmem:[#allocation8 + $0xc60] sm:$0xff]
    %v2484 = vld [vmem:[#allocation8 + $0xc68] sm:$0xff]
    %v2485 = vld [vmem:[#allocation8 + $0xc70] sm:$0xff]
    %v2486 = vld [vmem:[#allocation8 + $0xc78] sm:$0xff]
    %v2487 = vld [vmem:[#allocation8 + $0xc80] sm:$0xff]
    %v2488 = vld [vmem:[#allocation8 + $0xc88] sm:$0xff]
    %v2489 = vld [vmem:[#allocation8 + $0xc90] sm:$0xff]
    %v2490 = vld [vmem:[#allocation8 + $0xc98] sm:$0xff]
    %v2491 = vld [vmem:[#allocation8 + $0xca0] sm:$0xff]
    %v2492 = vld [vmem:[#allocation8 + $0xca8] sm:$0xff]
    %v2493 = vld [vmem:[#allocation8 + $0xcb0] sm:$0xff]
    %v2494 = vld [vmem:[#allocation8 + $0xcb8] sm:$0xff]
    %v2495 = vld [vmem:[#allocation8 + $0xcc0] sm:$0xff]
    %v2496 = vld [vmem:[#allocation8 + $0xcc8] sm:$0xff]
    %v2497 = vld [vmem:[#allocation8 + $0xcd0] sm:$0xff]
    %v2498 = vld [vmem:[#allocation8 + $0xcd8] sm:$0xff]
    %v2499 = vld [vmem:[#allocation8 + $0xce0] sm:$0xff]
    %v2500 = vld [vmem:[#allocation8 + $0xce8] sm:$0xff]
    %v2501 = vld [vmem:[#allocation8 + $0xcf0] sm:$0xff]
    %v2502 = vld [vmem:[#allocation8 + $0xcf8] sm:$0xff]
    %v2503 = vld [vmem:[#allocation8 + $0xd00] sm:$0xff]
    %v2504 = vld [vmem:[#allocation8 + $0xd08] sm:$0xff]
    %v2505 = vld [vmem:[#allocation8 + $0xd10] sm:$0xff]
    %v2506 = vld [vmem:[#allocation8 + $0xd18] sm:$0xff]
    %v2507 = vld [vmem:[#allocation8 + $0xd20] sm:$0xff]
    %v2508 = vld [vmem:[#allocation8 + $0xd28] sm:$0xff]
    %v2509 = vld [vmem:[#allocation8 + $0xd30] sm:$0xff]
    %v2510 = vld [vmem:[#allocation8 + $0xd38] sm:$0xff]
    %v2511 = vld [vmem:[#allocation8 + $0xd40] sm:$0xff]
    %v2512 = vld [vmem:[#allocation8 + $0xd48] sm:$0xff]
    %v2513 = vld [vmem:[#allocation8 + $0xd50] sm:$0xff]
    %v2514 = vld [vmem:[#allocation8 + $0xd58] sm:$0xff]
    %v2515 = vld [vmem:[#allocation8 + $0xd60] sm:$0xff]
    %v2516 = vld [vmem:[#allocation8 + $0xd68] sm:$0xff]
    %v2517 = vld [vmem:[#allocation8 + $0xd70] sm:$0xff]
    %v2518 = vld [vmem:[#allocation8 + $0xd78] sm:$0xff]
    %v2519 = vld [vmem:[#allocation8 + $0xd80] sm:$0xff]
    %v2520 = vld [vmem:[#allocation8 + $0xd88] sm:$0xff]
    %v2521 = vld [vmem:[#allocation8 + $0xd90] sm:$0xff]
    %v2522 = vld [vmem:[#allocation8 + $0xd98] sm:$0xff]
    %v2523 = vld [vmem:[#allocation8 + $0xda0] sm:$0xff]
    %v2524 = vld [vmem:[#allocation8 + $0xda8] sm:$0xff]
    %v2525 = vld [vmem:[#allocation8 + $0xdb0] sm:$0xff]
    %v2526 = vld [vmem:[#allocation8 + $0xdb8] sm:$0xff]
    %v2527 = vld [vmem:[#allocation8 + $0xdc0] sm:$0xff]
    %v2528 = vld [vmem:[#allocation8 + $0xdc8] sm:$0xff]
    %v2529 = vld [vmem:[#allocation8 + $0xdd0] sm:$0xff]
    %v2530 = vld [vmem:[#allocation8 + $0xdd8] sm:$0xff]
    %v2531 = vld [vmem:[#allocation8 + $0xde0] sm:$0xff]
    %v2532 = vld [vmem:[#allocation8 + $0xde8] sm:$0xff]
    %v2533 = vld [vmem:[#allocation8 + $0xdf0] sm:$0xff]
    %v2534 = vld [vmem:[#allocation8 + $0xdf8] sm:$0xff]
    %v2535 = vld [vmem:[#allocation8 + $0xe00] sm:$0xff]
    %v2536 = vld [vmem:[#allocation8 + $0xe08] sm:$0xff]
    %v2537 = vld [vmem:[#allocation8 + $0xe10] sm:$0xff]
    %v2538 = vld [vmem:[#allocation8 + $0xe18] sm:$0xff]
    %v2539 = vld [vmem:[#allocation8 + $0xe20] sm:$0xff]
    %v2540 = vld [vmem:[#allocation8 + $0xe28] sm:$0xff]
    %v2541 = vld [vmem:[#allocation8 + $0xe30] sm:$0xff]
    %v2542 = vld [vmem:[#allocation8 + $0xe38] sm:$0xff]
    %v2543 = vld [vmem:[#allocation8 + $0xe40] sm:$0xff]
    %v2544 = vld [vmem:[#allocation8 + $0xe48] sm:$0xff]
    %v2545 = vld [vmem:[#allocation8 + $0xe50] sm:$0xff]
    %v2546 = vld [vmem:[#allocation8 + $0xe58] sm:$0xff]
    %v2547 = vld [vmem:[#allocation8 + $0xe60] sm:$0xff]
    %v2548 = vld [vmem:[#allocation8 + $0xe68] sm:$0xff]
    %v2549 = vld [vmem:[#allocation8 + $0xe70] sm:$0xff]
    %v2550 = vld [vmem:[#allocation8 + $0xe78] sm:$0xff]
    %v2551 = vld [vmem:[#allocation8 + $0xe80] sm:$0xff]
    %v2552 = vld [vmem:[#allocation8 + $0xe88] sm:$0xff]
    %v2553 = vld [vmem:[#allocation8 + $0xe90] sm:$0xff]
    %v2554 = vld [vmem:[#allocation8 + $0xe98] sm:$0xff]
    %v2555 = vld [vmem:[#allocation8 + $0xea0] sm:$0xff]
    %v2556 = vld [vmem:[#allocation8 + $0xea8] sm:$0xff]
    %v2557 = vld [vmem:[#allocation8 + $0xeb0] sm:$0xff]
    %v2558 = vld [vmem:[#allocation8 + $0xeb8] sm:$0xff]
    %v2559 = vld [vmem:[#allocation8 + $0xec0] sm:$0xff]
    %v2560 = vld [vmem:[#allocation8 + $0xec8] sm:$0xff]
    %v2561 = vld [vmem:[#allocation8 + $0xed0] sm:$0xff]
    %v2562 = vld [vmem:[#allocation8 + $0xed8] sm:$0xff]
    %v2563 = vld [vmem:[#allocation8 + $0xee0] sm:$0xff]
    %v2564 = vld [vmem:[#allocation8 + $0xee8] sm:$0xff]
    %v2565 = vld [vmem:[#allocation8 + $0xef0] sm:$0xff]
    %v2566 = vld [vmem:[#allocation8 + $0xef8] sm:$0xff]
    %v2567 = vld [vmem:[#allocation8 + $0xf00] sm:$0xff]
    %v2568 = vld [vmem:[#allocation8 + $0xf08] sm:$0xff]
    %v2569 = vld [vmem:[#allocation8 + $0xf10] sm:$0xff]
    %v2570 = vld [vmem:[#allocation8 + $0xf18] sm:$0xff]
    %v2571 = vld [vmem:[#allocation8 + $0xf20] sm:$0xff]
    %v2572 = vld [vmem:[#allocation8 + $0xf28] sm:$0xff]
    %v2573 = vld [vmem:[#allocation8 + $0xf30] sm:$0xff]
    %v2574 = vld [vmem:[#allocation8 + $0xf38] sm:$0xff]
    %v2575 = vld [vmem:[#allocation8 + $0xf40] sm:$0xff]
    %v2576 = vld [vmem:[#allocation8 + $0xf48] sm:$0xff]
    %v2577 = vld [vmem:[#allocation8 + $0xf50] sm:$0xff]
    %v2578 = vld [vmem:[#allocation8 + $0xf58] sm:$0xff]
    %v2579 = vld [vmem:[#allocation8 + $0xf60] sm:$0xff]
    %v2580 = vld [vmem:[#allocation8 + $0xf68] sm:$0xff]
    %v2581 = vld [vmem:[#allocation8 + $0xf70] sm:$0xff]
    %v2582 = vld [vmem:[#allocation8 + $0xf78] sm:$0xff]
    %v2583 = vld [vmem:[#allocation8 + $0xf80] sm:$0xff]
    %v2584 = vld [vmem:[#allocation8 + $0xf88] sm:$0xff]
    %v2585 = vld [vmem:[#allocation8 + $0xf90] sm:$0xff]
    %v2586 = vld [vmem:[#allocation8 + $0xf98] sm:$0xff]
    %v2587 = vld [vmem:[#allocation8 + $0xfa0] sm:$0xff]
    %v2588 = vld [vmem:[#allocation8 + $0xfa8] sm:$0xff]
    %v2589 = vld [vmem:[#allocation8 + $0xfb0] sm:$0xff]
    %v2590 = vld [vmem:[#allocation8 + $0xfb8] sm:$0xff]
    %v2591 = vld [vmem:[#allocation8 + $0xfc0] sm:$0xff]
    %v2592 = vld [vmem:[#allocation8 + $0xfc8] sm:$0xff]
    %v2593 = vld [vmem:[#allocation8 + $0xfd0] sm:$0xff]
    %v2594 = vld [vmem:[#allocation8 + $0xfd8] sm:$0xff]
    %v2595 = vld [vmem:[#allocation8 + $0xfe0] sm:$0xff]
    %v2596 = vld [vmem:[#allocation8 + $0xfe8] sm:$0xff]
    %v2597 = vld [vmem:[#allocation8 + $0xff0] sm:$0xff]
    %v2598 = vld [vmem:[#allocation8 + $0xff8] sm:$0xff]
    %v2599 = vld [vmem:[#allocation10] sm:$0xff]
    %v2601 = vlaneseq
    %v2602 = vshrl.u32 %v2601, 7
    %v2603 = vsub.s32 0, %v2602
    %v2604 = vrot.slane %v2599, %v2603
    %v2605 = vlaneseq
    %v2606 = vshrl.u32 %v2605, 7
    %v2607 = vsub.s32 1, %v2606
    %v2608 = vrot.slane %v2599, %v2607
    %v2609 = vlaneseq
    %v2610 = vshrl.u32 %v2609, 7
    %v2611 = vsub.s32 2, %v2610
    %v2612 = vrot.slane %v2599, %v2611
    %v2613 = vlaneseq
    %v2614 = vshrl.u32 %v2613, 7
    %v2615 = vsub.s32 3, %v2614
    %v2616 = vrot.slane %v2599, %v2615
    %v2617 = vlaneseq
    %v2618 = vshrl.u32 %v2617, 7
    %v2619 = vsub.s32 4, %v2618
    %v2620 = vrot.slane %v2599, %v2619
    %v2621 = vlaneseq
    %v2622 = vshrl.u32 %v2621, 7
    %v2623 = vsub.s32 5, %v2622
    %v2624 = vrot.slane %v2599, %v2623
    %v2625 = vlaneseq
    %v2626 = vshrl.u32 %v2625, 7
    %v2627 = vsub.s32 6, %v2626
    %v2628 = vrot.slane %v2599, %v2627
    %v2629 = vlaneseq
    %v2630 = vshrl.u32 %v2629, 7
    %v2631 = vsub.s32 7, %v2630
    %v2632 = vrot.slane %v2599, %v2631
    %v3153 = vunpack.c.l.b16 %v2087
    %v3154 = vunpack.c.h.b16 %v2087
    %v3155 = vunpack.c.l.b16 %v2088
    %v3156 = vunpack.c.h.b16 %v2088
    %v3157 = vunpack.c.l.b16 %v2089
    %v3158 = vunpack.c.h.b16 %v2089
    %v3159 = vunpack.c.l.b16 %v2090
    %v3160 = vunpack.c.h.b16 %v2090
    %v3161 = vunpack.c.l.b16 %v2091
    %v3162 = vunpack.c.h.b16 %v2091
    %v3163 = vunpack.c.l.b16 %v2092
    %v3164 = vunpack.c.h.b16 %v2092
    %v3165 = vunpack.c.l.b16 %v2093
    %v3166 = vunpack.c.h.b16 %v2093
    %v3167 = vunpack.c.l.b16 %v2094
    %v3168 = vunpack.c.h.b16 %v2094
    %v3169 = vunpack.c.l.b16 %v2095
    %v3170 = vunpack.c.h.b16 %v2095
    %v3171 = vunpack.c.l.b16 %v2096
    %v3172 = vunpack.c.h.b16 %v2096
    %v3173 = vunpack.c.l.b16 %v2097
    %v3174 = vunpack.c.h.b16 %v2097
    %v3175 = vunpack.c.l.b16 %v2098
    %v3176 = vunpack.c.h.b16 %v2098
    %v3177 = vunpack.c.l.b16 %v2099
    %v3178 = vunpack.c.h.b16 %v2099
    %v3179 = vunpack.c.l.b16 %v2100
    %v3180 = vunpack.c.h.b16 %v2100
    %v3181 = vunpack.c.l.b16 %v2101
    %v3182 = vunpack.c.h.b16 %v2101
    %v3183 = vunpack.c.l.b16 %v2102
    %v3184 = vunpack.c.h.b16 %v2102
    %v3185 = vunpack.c.l.b16 %v2103
    %v3186 = vunpack.c.h.b16 %v2103
    %v3187 = vunpack.c.l.b16 %v2104
    %v3188 = vunpack.c.h.b16 %v2104
    %v3189 = vunpack.c.l.b16 %v2105
    %v3190 = vunpack.c.h.b16 %v2105
    %v3191 = vunpack.c.l.b16 %v2106
    %v3192 = vunpack.c.h.b16 %v2106
    %v3193 = vunpack.c.l.b16 %v2107
    %v3194 = vunpack.c.h.b16 %v2107
    %v3195 = vunpack.c.l.b16 %v2108
    %v3196 = vunpack.c.h.b16 %v2108
    %v3197 = vunpack.c.l.b16 %v2109
    %v3198 = vunpack.c.h.b16 %v2109
    %v3199 = vunpack.c.l.b16 %v2110
    %v3200 = vunpack.c.h.b16 %v2110
    %v3201 = vunpack.c.l.b16 %v2111
    %v3202 = vunpack.c.h.b16 %v2111
    %v3203 = vunpack.c.l.b16 %v2112
    %v3204 = vunpack.c.h.b16 %v2112
    %v3205 = vunpack.c.l.b16 %v2113
    %v3206 = vunpack.c.h.b16 %v2113
    %v3207 = vunpack.c.l.b16 %v2114
    %v3208 = vunpack.c.h.b16 %v2114
    %v3209 = vunpack.c.l.b16 %v2115
    %v3210 = vunpack.c.h.b16 %v2115
    %v3211 = vunpack.c.l.b16 %v2116
    %v3212 = vunpack.c.h.b16 %v2116
    %v3213 = vunpack.c.l.b16 %v2117
    %v3214 = vunpack.c.h.b16 %v2117
    %v3215 = vunpack.c.l.b16 %v2118
    %v3216 = vunpack.c.h.b16 %v2118
    %v3217 = vunpack.c.l.b16 %v2119
    %v3218 = vunpack.c.h.b16 %v2119
    %v3219 = vunpack.c.l.b16 %v2120
    %v3220 = vunpack.c.h.b16 %v2120
    %v3221 = vunpack.c.l.b16 %v2121
    %v3222 = vunpack.c.h.b16 %v2121
    %v3223 = vunpack.c.l.b16 %v2122
    %v3224 = vunpack.c.h.b16 %v2122
    %v3225 = vunpack.c.l.b16 %v2123
    %v3226 = vunpack.c.h.b16 %v2123
    %v3227 = vunpack.c.l.b16 %v2124
    %v3228 = vunpack.c.h.b16 %v2124
    %v3229 = vunpack.c.l.b16 %v2125
    %v3230 = vunpack.c.h.b16 %v2125
    %v3231 = vunpack.c.l.b16 %v2126
    %v3232 = vunpack.c.h.b16 %v2126
    %v3233 = vunpack.c.l.b16 %v2127
    %v3234 = vunpack.c.h.b16 %v2127
    %v3235 = vunpack.c.l.b16 %v2128
    %v3236 = vunpack.c.h.b16 %v2128
    %v3237 = vunpack.c.l.b16 %v2129
    %v3238 = vunpack.c.h.b16 %v2129
    %v3239 = vunpack.c.l.b16 %v2130
    %v3240 = vunpack.c.h.b16 %v2130
    %v3241 = vunpack.c.l.b16 %v2131
    %v3242 = vunpack.c.h.b16 %v2131
    %v3243 = vunpack.c.l.b16 %v2132
    %v3244 = vunpack.c.h.b16 %v2132
    %v3245 = vunpack.c.l.b16 %v2133
    %v3246 = vunpack.c.h.b16 %v2133
    %v3247 = vunpack.c.l.b16 %v2134
    %v3248 = vunpack.c.h.b16 %v2134
    %v3249 = vunpack.c.l.b16 %v2135
    %v3250 = vunpack.c.h.b16 %v2135
    %v3251 = vunpack.c.l.b16 %v2136
    %v3252 = vunpack.c.h.b16 %v2136
    %v3253 = vunpack.c.l.b16 %v2137
    %v3254 = vunpack.c.h.b16 %v2137
    %v3255 = vunpack.c.l.b16 %v2138
    %v3256 = vunpack.c.h.b16 %v2138
    %v3257 = vunpack.c.l.b16 %v2139
    %v3258 = vunpack.c.h.b16 %v2139
    %v3259 = vunpack.c.l.b16 %v2140
    %v3260 = vunpack.c.h.b16 %v2140
    %v3261 = vunpack.c.l.b16 %v2141
    %v3262 = vunpack.c.h.b16 %v2141
    %v3263 = vunpack.c.l.b16 %v2142
    %v3264 = vunpack.c.h.b16 %v2142
    %v3265 = vunpack.c.l.b16 %v2143
    %v3266 = vunpack.c.h.b16 %v2143
    %v3267 = vunpack.c.l.b16 %v2144
    %v3268 = vunpack.c.h.b16 %v2144
    %v3269 = vunpack.c.l.b16 %v2145
    %v3270 = vunpack.c.h.b16 %v2145
    %v3271 = vunpack.c.l.b16 %v2146
    %v3272 = vunpack.c.h.b16 %v2146
    %v3273 = vunpack.c.l.b16 %v2147
    %v3274 = vunpack.c.h.b16 %v2147
    %v3275 = vunpack.c.l.b16 %v2148
    %v3276 = vunpack.c.h.b16 %v2148
    %v3277 = vunpack.c.l.b16 %v2149
    %v3278 = vunpack.c.h.b16 %v2149
    %v3279 = vunpack.c.l.b16 %v2150
    %v3280 = vunpack.c.h.b16 %v2150
    %v3281 = vunpack.c.l.b16 %v2151
    %v3282 = vunpack.c.h.b16 %v2151
    %v3283 = vunpack.c.l.b16 %v2152
    %v3284 = vunpack.c.h.b16 %v2152
    %v3285 = vunpack.c.l.b16 %v2153
    %v3286 = vunpack.c.h.b16 %v2153
    %v3287 = vunpack.c.l.b16 %v2154
    %v3288 = vunpack.c.h.b16 %v2154
    %v3289 = vunpack.c.l.b16 %v2155
    %v3290 = vunpack.c.h.b16 %v2155
    %v3291 = vunpack.c.l.b16 %v2156
    %v3292 = vunpack.c.h.b16 %v2156
    %v3293 = vunpack.c.l.b16 %v2157
    %v3294 = vunpack.c.h.b16 %v2157
    %v3295 = vunpack.c.l.b16 %v2158
    %v3296 = vunpack.c.h.b16 %v2158
    %v3297 = vunpack.c.l.b16 %v2159
    %v3298 = vunpack.c.h.b16 %v2159
    %v3299 = vunpack.c.l.b16 %v2160
    %v3300 = vunpack.c.h.b16 %v2160
    %v3301 = vunpack.c.l.b16 %v2161
    %v3302 = vunpack.c.h.b16 %v2161
    %v3303 = vunpack.c.l.b16 %v2162
    %v3304 = vunpack.c.h.b16 %v2162
    %v3305 = vunpack.c.l.b16 %v2163
    %v3306 = vunpack.c.h.b16 %v2163
    %v3307 = vunpack.c.l.b16 %v2164
    %v3308 = vunpack.c.h.b16 %v2164
    %v3309 = vunpack.c.l.b16 %v2165
    %v3310 = vunpack.c.h.b16 %v2165
    %v3311 = vunpack.c.l.b16 %v2166
    %v3312 = vunpack.c.h.b16 %v2166
    %v3313 = vunpack.c.l.b16 %v2167
    %v3314 = vunpack.c.h.b16 %v2167
    %v3315 = vunpack.c.l.b16 %v2168
    %v3316 = vunpack.c.h.b16 %v2168
    %v3317 = vunpack.c.l.b16 %v2169
    %v3318 = vunpack.c.h.b16 %v2169
    %v3319 = vunpack.c.l.b16 %v2170
    %v3320 = vunpack.c.h.b16 %v2170
    %v3321 = vunpack.c.l.b16 %v2171
    %v3322 = vunpack.c.h.b16 %v2171
    %v3323 = vunpack.c.l.b16 %v2172
    %v3324 = vunpack.c.h.b16 %v2172
    %v3325 = vunpack.c.l.b16 %v2173
    %v3326 = vunpack.c.h.b16 %v2173
    %v3327 = vunpack.c.l.b16 %v2174
    %v3328 = vunpack.c.h.b16 %v2174
    %v3329 = vunpack.c.l.b16 %v2175
    %v3330 = vunpack.c.h.b16 %v2175
    %v3331 = vunpack.c.l.b16 %v2176
    %v3332 = vunpack.c.h.b16 %v2176
    %v3333 = vunpack.c.l.b16 %v2177
    %v3334 = vunpack.c.h.b16 %v2177
    %v3335 = vunpack.c.l.b16 %v2178
    %v3336 = vunpack.c.h.b16 %v2178
    %v3337 = vunpack.c.l.b16 %v2179
    %v3338 = vunpack.c.h.b16 %v2179
    %v3339 = vunpack.c.l.b16 %v2180
    %v3340 = vunpack.c.h.b16 %v2180
    %v3341 = vunpack.c.l.b16 %v2181
    %v3342 = vunpack.c.h.b16 %v2181
    %v3343 = vunpack.c.l.b16 %v2182
    %v3344 = vunpack.c.h.b16 %v2182
    %v3345 = vunpack.c.l.b16 %v2183
    %v3346 = vunpack.c.h.b16 %v2183
    %v3347 = vunpack.c.l.b16 %v2184
    %v3348 = vunpack.c.h.b16 %v2184
    %v3349 = vunpack.c.l.b16 %v2185
    %v3350 = vunpack.c.h.b16 %v2185
    %v3351 = vunpack.c.l.b16 %v2186
    %v3352 = vunpack.c.h.b16 %v2186
    %v3353 = vunpack.c.l.b16 %v2187
    %v3354 = vunpack.c.h.b16 %v2187
    %v3355 = vunpack.c.l.b16 %v2188
    %v3356 = vunpack.c.h.b16 %v2188
    %v3357 = vunpack.c.l.b16 %v2189
    %v3358 = vunpack.c.h.b16 %v2189
    %v3359 = vunpack.c.l.b16 %v2190
    %v3360 = vunpack.c.h.b16 %v2190
    %v3361 = vunpack.c.l.b16 %v2191
    %v3362 = vunpack.c.h.b16 %v2191
    %v3363 = vunpack.c.l.b16 %v2192
    %v3364 = vunpack.c.h.b16 %v2192
    %v3365 = vunpack.c.l.b16 %v2193
    %v3366 = vunpack.c.h.b16 %v2193
    %v3367 = vunpack.c.l.b16 %v2194
    %v3368 = vunpack.c.h.b16 %v2194
    %v3369 = vunpack.c.l.b16 %v2195
    %v3370 = vunpack.c.h.b16 %v2195
    %v3371 = vunpack.c.l.b16 %v2196
    %v3372 = vunpack.c.h.b16 %v2196
    %v3373 = vunpack.c.l.b16 %v2197
    %v3374 = vunpack.c.h.b16 %v2197
    %v3375 = vunpack.c.l.b16 %v2198
    %v3376 = vunpack.c.h.b16 %v2198
    %v3377 = vunpack.c.l.b16 %v2199
    %v3378 = vunpack.c.h.b16 %v2199
    %v3379 = vunpack.c.l.b16 %v2200
    %v3380 = vunpack.c.h.b16 %v2200
    %v3381 = vunpack.c.l.b16 %v2201
    %v3382 = vunpack.c.h.b16 %v2201
    %v3383 = vunpack.c.l.b16 %v2202
    %v3384 = vunpack.c.h.b16 %v2202
    %v3385 = vunpack.c.l.b16 %v2203
    %v3386 = vunpack.c.h.b16 %v2203
    %v3387 = vunpack.c.l.b16 %v2204
    %v3388 = vunpack.c.h.b16 %v2204
    %v3389 = vunpack.c.l.b16 %v2205
    %v3390 = vunpack.c.h.b16 %v2205
    %v3391 = vunpack.c.l.b16 %v2206
    %v3392 = vunpack.c.h.b16 %v2206
    %v3393 = vunpack.c.l.b16 %v2207
    %v3394 = vunpack.c.h.b16 %v2207
    %v3395 = vunpack.c.l.b16 %v2208
    %v3396 = vunpack.c.h.b16 %v2208
    %v3397 = vunpack.c.l.b16 %v2209
    %v3398 = vunpack.c.h.b16 %v2209
    %v3399 = vunpack.c.l.b16 %v2210
    %v3400 = vunpack.c.h.b16 %v2210
    %v3401 = vunpack.c.l.b16 %v2211
    %v3402 = vunpack.c.h.b16 %v2211
    %v3403 = vunpack.c.l.b16 %v2212
    %v3404 = vunpack.c.h.b16 %v2212
    %v3405 = vunpack.c.l.b16 %v2213
    %v3406 = vunpack.c.h.b16 %v2213
    %v3407 = vunpack.c.l.b16 %v2214
    %v3408 = vunpack.c.h.b16 %v2214
    %v3409 = vunpack.c.l.b16 %v2215
    %v3410 = vunpack.c.h.b16 %v2215
    %v3411 = vunpack.c.l.b16 %v2216
    %v3412 = vunpack.c.h.b16 %v2216
    %v3413 = vunpack.c.l.b16 %v2217
    %v3414 = vunpack.c.h.b16 %v2217
    %v3415 = vunpack.c.l.b16 %v2218
    %v3416 = vunpack.c.h.b16 %v2218
    %v3417 = vunpack.c.l.b16 %v2219
    %v3418 = vunpack.c.h.b16 %v2219
    %v3419 = vunpack.c.l.b16 %v2220
    %v3420 = vunpack.c.h.b16 %v2220
    %v3421 = vunpack.c.l.b16 %v2221
    %v3422 = vunpack.c.h.b16 %v2221
    %v3423 = vunpack.c.l.b16 %v2222
    %v3424 = vunpack.c.h.b16 %v2222
    %v3425 = vunpack.c.l.b16 %v2223
    %v3426 = vunpack.c.h.b16 %v2223
    %v3427 = vunpack.c.l.b16 %v2224
    %v3428 = vunpack.c.h.b16 %v2224
    %v3429 = vunpack.c.l.b16 %v2225
    %v3430 = vunpack.c.h.b16 %v2225
    %v3431 = vunpack.c.l.b16 %v2226
    %v3432 = vunpack.c.h.b16 %v2226
    %v3433 = vunpack.c.l.b16 %v2227
    %v3434 = vunpack.c.h.b16 %v2227
    %v3435 = vunpack.c.l.b16 %v2228
    %v3436 = vunpack.c.h.b16 %v2228
    %v3437 = vunpack.c.l.b16 %v2229
    %v3438 = vunpack.c.h.b16 %v2229
    %v3439 = vunpack.c.l.b16 %v2230
    %v3440 = vunpack.c.h.b16 %v2230
    %v3441 = vunpack.c.l.b16 %v2231
    %v3442 = vunpack.c.h.b16 %v2231
    %v3443 = vunpack.c.l.b16 %v2232
    %v3444 = vunpack.c.h.b16 %v2232
    %v3445 = vunpack.c.l.b16 %v2233
    %v3446 = vunpack.c.h.b16 %v2233
    %v3447 = vunpack.c.l.b16 %v2234
    %v3448 = vunpack.c.h.b16 %v2234
    %v3449 = vunpack.c.l.b16 %v2235
    %v3450 = vunpack.c.h.b16 %v2235
    %v3451 = vunpack.c.l.b16 %v2236
    %v3452 = vunpack.c.h.b16 %v2236
    %v3453 = vunpack.c.l.b16 %v2237
    %v3454 = vunpack.c.h.b16 %v2237
    %v3455 = vunpack.c.l.b16 %v2238
    %v3456 = vunpack.c.h.b16 %v2238
    %v3457 = vunpack.c.l.b16 %v2239
    %v3458 = vunpack.c.h.b16 %v2239
    %v3459 = vunpack.c.l.b16 %v2240
    %v3460 = vunpack.c.h.b16 %v2240
    %v3461 = vunpack.c.l.b16 %v2241
    %v3462 = vunpack.c.h.b16 %v2241
    %v3463 = vunpack.c.l.b16 %v2242
    %v3464 = vunpack.c.h.b16 %v2242
    %v3465 = vunpack.c.l.b16 %v2243
    %v3466 = vunpack.c.h.b16 %v2243
    %v3467 = vunpack.c.l.b16 %v2244
    %v3468 = vunpack.c.h.b16 %v2244
    %v3469 = vunpack.c.l.b16 %v2245
    %v3470 = vunpack.c.h.b16 %v2245
    %v3471 = vunpack.c.l.b16 %v2246
    %v3472 = vunpack.c.h.b16 %v2246
    %v3473 = vunpack.c.l.b16 %v2247
    %v3474 = vunpack.c.h.b16 %v2247
    %v3475 = vunpack.c.l.b16 %v2248
    %v3476 = vunpack.c.h.b16 %v2248
    %v3477 = vunpack.c.l.b16 %v2249
    %v3478 = vunpack.c.h.b16 %v2249
    %v3479 = vunpack.c.l.b16 %v2250
    %v3480 = vunpack.c.h.b16 %v2250
    %v3481 = vunpack.c.l.b16 %v2251
    %v3482 = vunpack.c.h.b16 %v2251
    %v3483 = vunpack.c.l.b16 %v2252
    %v3484 = vunpack.c.h.b16 %v2252
    %v3485 = vunpack.c.l.b16 %v2253
    %v3486 = vunpack.c.h.b16 %v2253
    %v3487 = vunpack.c.l.b16 %v2254
    %v3488 = vunpack.c.h.b16 %v2254
    %v3489 = vunpack.c.l.b16 %v2255
    %v3490 = vunpack.c.h.b16 %v2255
    %v3491 = vunpack.c.l.b16 %v2256
    %v3492 = vunpack.c.h.b16 %v2256
    %v3493 = vunpack.c.l.b16 %v2257
    %v3494 = vunpack.c.h.b16 %v2257
    %v3495 = vunpack.c.l.b16 %v2258
    %v3496 = vunpack.c.h.b16 %v2258
    %v3497 = vunpack.c.l.b16 %v2259
    %v3498 = vunpack.c.h.b16 %v2259
    %v3499 = vunpack.c.l.b16 %v2260
    %v3500 = vunpack.c.h.b16 %v2260
    %v3501 = vunpack.c.l.b16 %v2261
    %v3502 = vunpack.c.h.b16 %v2261
    %v3503 = vunpack.c.l.b16 %v2262
    %v3504 = vunpack.c.h.b16 %v2262
    %v3505 = vunpack.c.l.b16 %v2263
    %v3506 = vunpack.c.h.b16 %v2263
    %v3507 = vunpack.c.l.b16 %v2264
    %v3508 = vunpack.c.h.b16 %v2264
    %v3509 = vunpack.c.l.b16 %v2265
    %v3510 = vunpack.c.h.b16 %v2265
    %v3511 = vunpack.c.l.b16 %v2266
    %v3512 = vunpack.c.h.b16 %v2266
    %v3513 = vunpack.c.l.b16 %v2267
    %v3514 = vunpack.c.h.b16 %v2267
    %v3515 = vunpack.c.l.b16 %v2268
    %v3516 = vunpack.c.h.b16 %v2268
    %v3517 = vunpack.c.l.b16 %v2269
    %v3518 = vunpack.c.h.b16 %v2269
    %v3519 = vunpack.c.l.b16 %v2270
    %v3520 = vunpack.c.h.b16 %v2270
    %v3521 = vunpack.c.l.b16 %v2271
    %v3522 = vunpack.c.h.b16 %v2271
    %v3523 = vunpack.c.l.b16 %v2272
    %v3524 = vunpack.c.h.b16 %v2272
    %v3525 = vunpack.c.l.b16 %v2273
    %v3526 = vunpack.c.h.b16 %v2273
    %v3527 = vunpack.c.l.b16 %v2274
    %v3528 = vunpack.c.h.b16 %v2274
    %v3529 = vunpack.c.l.b16 %v2275
    %v3530 = vunpack.c.h.b16 %v2275
    %v3531 = vunpack.c.l.b16 %v2276
    %v3532 = vunpack.c.h.b16 %v2276
    %v3533 = vunpack.c.l.b16 %v2277
    %v3534 = vunpack.c.h.b16 %v2277
    %v3535 = vunpack.c.l.b16 %v2278
    %v3536 = vunpack.c.h.b16 %v2278
    %v3537 = vunpack.c.l.b16 %v2279
    %v3538 = vunpack.c.h.b16 %v2279
    %v3539 = vunpack.c.l.b16 %v2280
    %v3540 = vunpack.c.h.b16 %v2280
    %v3541 = vunpack.c.l.b16 %v2281
    %v3542 = vunpack.c.h.b16 %v2281
    %v3543 = vunpack.c.l.b16 %v2282
    %v3544 = vunpack.c.h.b16 %v2282
    %v3545 = vunpack.c.l.b16 %v2283
    %v3546 = vunpack.c.h.b16 %v2283
    %v3547 = vunpack.c.l.b16 %v2284
    %v3548 = vunpack.c.h.b16 %v2284
    %v3549 = vunpack.c.l.b16 %v2285
    %v3550 = vunpack.c.h.b16 %v2285
    %v3551 = vunpack.c.l.b16 %v2286
    %v3552 = vunpack.c.h.b16 %v2286
    %v3553 = vunpack.c.l.b16 %v2287
    %v3554 = vunpack.c.h.b16 %v2287
    %v3555 = vunpack.c.l.b16 %v2288
    %v3556 = vunpack.c.h.b16 %v2288
    %v3557 = vunpack.c.l.b16 %v2289
    %v3558 = vunpack.c.h.b16 %v2289
    %v3559 = vunpack.c.l.b16 %v2290
    %v3560 = vunpack.c.h.b16 %v2290
    %v3561 = vunpack.c.l.b16 %v2291
    %v3562 = vunpack.c.h.b16 %v2291
    %v3563 = vunpack.c.l.b16 %v2292
    %v3564 = vunpack.c.h.b16 %v2292
    %v3565 = vunpack.c.l.b16 %v2293
    %v3566 = vunpack.c.h.b16 %v2293
    %v3567 = vunpack.c.l.b16 %v2294
    %v3568 = vunpack.c.h.b16 %v2294
    %v3569 = vunpack.c.l.b16 %v2295
    %v3570 = vunpack.c.h.b16 %v2295
    %v3571 = vunpack.c.l.b16 %v2296
    %v3572 = vunpack.c.h.b16 %v2296
    %v3573 = vunpack.c.l.b16 %v2297
    %v3574 = vunpack.c.h.b16 %v2297
    %v3575 = vunpack.c.l.b16 %v2298
    %v3576 = vunpack.c.h.b16 %v2298
    %v3577 = vunpack.c.l.b16 %v2299
    %v3578 = vunpack.c.h.b16 %v2299
    %v3579 = vunpack.c.l.b16 %v2300
    %v3580 = vunpack.c.h.b16 %v2300
    %v3581 = vunpack.c.l.b16 %v2301
    %v3582 = vunpack.c.h.b16 %v2301
    %v3583 = vunpack.c.l.b16 %v2302
    %v3584 = vunpack.c.h.b16 %v2302
    %v3585 = vunpack.c.l.b16 %v2303
    %v3586 = vunpack.c.h.b16 %v2303
    %v3587 = vunpack.c.l.b16 %v2304
    %v3588 = vunpack.c.h.b16 %v2304
    %v3589 = vunpack.c.l.b16 %v2305
    %v3590 = vunpack.c.h.b16 %v2305
    %v3591 = vunpack.c.l.b16 %v2306
    %v3592 = vunpack.c.h.b16 %v2306
    %v3593 = vunpack.c.l.b16 %v2307
    %v3594 = vunpack.c.h.b16 %v2307
    %v3595 = vunpack.c.l.b16 %v2308
    %v3596 = vunpack.c.h.b16 %v2308
    %v3597 = vunpack.c.l.b16 %v2309
    %v3598 = vunpack.c.h.b16 %v2309
    %v3599 = vunpack.c.l.b16 %v2310
    %v3600 = vunpack.c.h.b16 %v2310
    %v3601 = vunpack.c.l.b16 %v2311
    %v3602 = vunpack.c.h.b16 %v2311
    %v3603 = vunpack.c.l.b16 %v2312
    %v3604 = vunpack.c.h.b16 %v2312
    %v3605 = vunpack.c.l.b16 %v2313
    %v3606 = vunpack.c.h.b16 %v2313
    %v3607 = vunpack.c.l.b16 %v2314
    %v3608 = vunpack.c.h.b16 %v2314
    %v3609 = vunpack.c.l.b16 %v2315
    %v3610 = vunpack.c.h.b16 %v2315
    %v3611 = vunpack.c.l.b16 %v2316
    %v3612 = vunpack.c.h.b16 %v2316
    %v3613 = vunpack.c.l.b16 %v2317
    %v3614 = vunpack.c.h.b16 %v2317
    %v3615 = vunpack.c.l.b16 %v2318
    %v3616 = vunpack.c.h.b16 %v2318
    %v3617 = vunpack.c.l.b16 %v2319
    %v3618 = vunpack.c.h.b16 %v2319
    %v3619 = vunpack.c.l.b16 %v2320
    %v3620 = vunpack.c.h.b16 %v2320
    %v3621 = vunpack.c.l.b16 %v2321
    %v3622 = vunpack.c.h.b16 %v2321
    %v3623 = vunpack.c.l.b16 %v2322
    %v3624 = vunpack.c.h.b16 %v2322
    %v3625 = vunpack.c.l.b16 %v2323
    %v3626 = vunpack.c.h.b16 %v2323
    %v3627 = vunpack.c.l.b16 %v2324
    %v3628 = vunpack.c.h.b16 %v2324
    %v3629 = vunpack.c.l.b16 %v2325
    %v3630 = vunpack.c.h.b16 %v2325
    %v3631 = vunpack.c.l.b16 %v2326
    %v3632 = vunpack.c.h.b16 %v2326
    %v3633 = vunpack.c.l.b16 %v2327
    %v3634 = vunpack.c.h.b16 %v2327
    %v3635 = vunpack.c.l.b16 %v2328
    %v3636 = vunpack.c.h.b16 %v2328
    %v3637 = vunpack.c.l.b16 %v2329
    %v3638 = vunpack.c.h.b16 %v2329
    %v3639 = vunpack.c.l.b16 %v2330
    %v3640 = vunpack.c.h.b16 %v2330
    %v3641 = vunpack.c.l.b16 %v2331
    %v3642 = vunpack.c.h.b16 %v2331
    %v3643 = vunpack.c.l.b16 %v2332
    %v3644 = vunpack.c.h.b16 %v2332
    %v3645 = vunpack.c.l.b16 %v2333
    %v3646 = vunpack.c.h.b16 %v2333
    %v3647 = vunpack.c.l.b16 %v2334
    %v3648 = vunpack.c.h.b16 %v2334
    %v3649 = vunpack.c.l.b16 %v2335
    %v3650 = vunpack.c.h.b16 %v2335
    %v3651 = vunpack.c.l.b16 %v2336
    %v3652 = vunpack.c.h.b16 %v2336
    %v3653 = vunpack.c.l.b16 %v2337
    %v3654 = vunpack.c.h.b16 %v2337
    %v3655 = vunpack.c.l.b16 %v2338
    %v3656 = vunpack.c.h.b16 %v2338
    %v3657 = vunpack.c.l.b16 %v2339
    %v3658 = vunpack.c.h.b16 %v2339
    %v3659 = vunpack.c.l.b16 %v2340
    %v3660 = vunpack.c.h.b16 %v2340
    %v3661 = vunpack.c.l.b16 %v2341
    %v3662 = vunpack.c.h.b16 %v2341
    %v3663 = vunpack.c.l.b16 %v2342
    %v3664 = vunpack.c.h.b16 %v2342
    %v3665 = vunpack.c.l.b16 %v2343
    %v3666 = vunpack.c.h.b16 %v2343
    %v3667 = vunpack.c.l.b16 %v2344
    %v3668 = vunpack.c.h.b16 %v2344
    %v3669 = vunpack.c.l.b16 %v2345
    %v3670 = vunpack.c.h.b16 %v2345
    %v3671 = vunpack.c.l.b16 %v2346
    %v3672 = vunpack.c.h.b16 %v2346
    %v3673 = vunpack.c.l.b16 %v2347
    %v3674 = vunpack.c.h.b16 %v2347
    %v3675 = vunpack.c.l.b16 %v2348
    %v3676 = vunpack.c.h.b16 %v2348
    %v3677 = vunpack.c.l.b16 %v2349
    %v3678 = vunpack.c.h.b16 %v2349
    %v3679 = vunpack.c.l.b16 %v2350
    %v3680 = vunpack.c.h.b16 %v2350
    %v3681 = vunpack.c.l.b16 %v2351
    %v3682 = vunpack.c.h.b16 %v2351
    %v3683 = vunpack.c.l.b16 %v2352
    %v3684 = vunpack.c.h.b16 %v2352
    %v3685 = vunpack.c.l.b16 %v2353
    %v3686 = vunpack.c.h.b16 %v2353
    %v3687 = vunpack.c.l.b16 %v2354
    %v3688 = vunpack.c.h.b16 %v2354
    %v3689 = vunpack.c.l.b16 %v2355
    %v3690 = vunpack.c.h.b16 %v2355
    %v3691 = vunpack.c.l.b16 %v2356
    %v3692 = vunpack.c.h.b16 %v2356
    %v3693 = vunpack.c.l.b16 %v2357
    %v3694 = vunpack.c.h.b16 %v2357
    %v3695 = vunpack.c.l.b16 %v2358
    %v3696 = vunpack.c.h.b16 %v2358
    %v3697 = vunpack.c.l.b16 %v2359
    %v3698 = vunpack.c.h.b16 %v2359
    %v3699 = vunpack.c.l.b16 %v2360
    %v3700 = vunpack.c.h.b16 %v2360
    %v3701 = vunpack.c.l.b16 %v2361
    %v3702 = vunpack.c.h.b16 %v2361
    %v3703 = vunpack.c.l.b16 %v2362
    %v3704 = vunpack.c.h.b16 %v2362
    %v3705 = vunpack.c.l.b16 %v2363
    %v3706 = vunpack.c.h.b16 %v2363
    %v3707 = vunpack.c.l.b16 %v2364
    %v3708 = vunpack.c.h.b16 %v2364
    %v3709 = vunpack.c.l.b16 %v2365
    %v3710 = vunpack.c.h.b16 %v2365
    %v3711 = vunpack.c.l.b16 %v2366
    %v3712 = vunpack.c.h.b16 %v2366
    %v3713 = vunpack.c.l.b16 %v2367
    %v3714 = vunpack.c.h.b16 %v2367
    %v3715 = vunpack.c.l.b16 %v2368
    %v3716 = vunpack.c.h.b16 %v2368
    %v3717 = vunpack.c.l.b16 %v2369
    %v3718 = vunpack.c.h.b16 %v2369
    %v3719 = vunpack.c.l.b16 %v2370
    %v3720 = vunpack.c.h.b16 %v2370
    %v3721 = vunpack.c.l.b16 %v2371
    %v3722 = vunpack.c.h.b16 %v2371
    %v3723 = vunpack.c.l.b16 %v2372
    %v3724 = vunpack.c.h.b16 %v2372
    %v3725 = vunpack.c.l.b16 %v2373
    %v3726 = vunpack.c.h.b16 %v2373
    %v3727 = vunpack.c.l.b16 %v2374
    %v3728 = vunpack.c.h.b16 %v2374
    %v3729 = vunpack.c.l.b16 %v2375
    %v3730 = vunpack.c.h.b16 %v2375
    %v3731 = vunpack.c.l.b16 %v2376
    %v3732 = vunpack.c.h.b16 %v2376
    %v3733 = vunpack.c.l.b16 %v2377
    %v3734 = vunpack.c.h.b16 %v2377
    %v3735 = vunpack.c.l.b16 %v2378
    %v3736 = vunpack.c.h.b16 %v2378
    %v3737 = vunpack.c.l.b16 %v2379
    %v3738 = vunpack.c.h.b16 %v2379
    %v3739 = vunpack.c.l.b16 %v2380
    %v3740 = vunpack.c.h.b16 %v2380
    %v3741 = vunpack.c.l.b16 %v2381
    %v3742 = vunpack.c.h.b16 %v2381
    %v3743 = vunpack.c.l.b16 %v2382
    %v3744 = vunpack.c.h.b16 %v2382
    %v3745 = vunpack.c.l.b16 %v2383
    %v3746 = vunpack.c.h.b16 %v2383
    %v3747 = vunpack.c.l.b16 %v2384
    %v3748 = vunpack.c.h.b16 %v2384
    %v3749 = vunpack.c.l.b16 %v2385
    %v3750 = vunpack.c.h.b16 %v2385
    %v3751 = vunpack.c.l.b16 %v2386
    %v3752 = vunpack.c.h.b16 %v2386
    %v3753 = vunpack.c.l.b16 %v2387
    %v3754 = vunpack.c.h.b16 %v2387
    %v3755 = vunpack.c.l.b16 %v2388
    %v3756 = vunpack.c.h.b16 %v2388
    %v3757 = vunpack.c.l.b16 %v2389
    %v3758 = vunpack.c.h.b16 %v2389
    %v3759 = vunpack.c.l.b16 %v2390
    %v3760 = vunpack.c.h.b16 %v2390
    %v3761 = vunpack.c.l.b16 %v2391
    %v3762 = vunpack.c.h.b16 %v2391
    %v3763 = vunpack.c.l.b16 %v2392
    %v3764 = vunpack.c.h.b16 %v2392
    %v3765 = vunpack.c.l.b16 %v2393
    %v3766 = vunpack.c.h.b16 %v2393
    %v3767 = vunpack.c.l.b16 %v2394
    %v3768 = vunpack.c.h.b16 %v2394
    %v3769 = vunpack.c.l.b16 %v2395
    %v3770 = vunpack.c.h.b16 %v2395
    %v3771 = vunpack.c.l.b16 %v2396
    %v3772 = vunpack.c.h.b16 %v2396
    %v3773 = vunpack.c.l.b16 %v2397
    %v3774 = vunpack.c.h.b16 %v2397
    %v3775 = vunpack.c.l.b16 %v2398
    %v3776 = vunpack.c.h.b16 %v2398
    %v3777 = vunpack.c.l.b16 %v2399
    %v3778 = vunpack.c.h.b16 %v2399
    %v3779 = vunpack.c.l.b16 %v2400
    %v3780 = vunpack.c.h.b16 %v2400
    %v3781 = vunpack.c.l.b16 %v2401
    %v3782 = vunpack.c.h.b16 %v2401
    %v3783 = vunpack.c.l.b16 %v2402
    %v3784 = vunpack.c.h.b16 %v2402
    %v3785 = vunpack.c.l.b16 %v2403
    %v3786 = vunpack.c.h.b16 %v2403
    %v3787 = vunpack.c.l.b16 %v2404
    %v3788 = vunpack.c.h.b16 %v2404
    %v3789 = vunpack.c.l.b16 %v2405
    %v3790 = vunpack.c.h.b16 %v2405
    %v3791 = vunpack.c.l.b16 %v2406
    %v3792 = vunpack.c.h.b16 %v2406
    %v3793 = vunpack.c.l.b16 %v2407
    %v3794 = vunpack.c.h.b16 %v2407
    %v3795 = vunpack.c.l.b16 %v2408
    %v3796 = vunpack.c.h.b16 %v2408
    %v3797 = vunpack.c.l.b16 %v2409
    %v3798 = vunpack.c.h.b16 %v2409
    %v3799 = vunpack.c.l.b16 %v2410
    %v3800 = vunpack.c.h.b16 %v2410
    %v3801 = vunpack.c.l.b16 %v2411
    %v3802 = vunpack.c.h.b16 %v2411
    %v3803 = vunpack.c.l.b16 %v2412
    %v3804 = vunpack.c.h.b16 %v2412
    %v3805 = vunpack.c.l.b16 %v2413
    %v3806 = vunpack.c.h.b16 %v2413
    %v3807 = vunpack.c.l.b16 %v2414
    %v3808 = vunpack.c.h.b16 %v2414
    %v3809 = vunpack.c.l.b16 %v2415
    %v3810 = vunpack.c.h.b16 %v2415
    %v3811 = vunpack.c.l.b16 %v2416
    %v3812 = vunpack.c.h.b16 %v2416
    %v3813 = vunpack.c.l.b16 %v2417
    %v3814 = vunpack.c.h.b16 %v2417
    %v3815 = vunpack.c.l.b16 %v2418
    %v3816 = vunpack.c.h.b16 %v2418
    %v3817 = vunpack.c.l.b16 %v2419
    %v3818 = vunpack.c.h.b16 %v2419
    %v3819 = vunpack.c.l.b16 %v2420
    %v3820 = vunpack.c.h.b16 %v2420
    %v3821 = vunpack.c.l.b16 %v2421
    %v3822 = vunpack.c.h.b16 %v2421
    %v3823 = vunpack.c.l.b16 %v2422
    %v3824 = vunpack.c.h.b16 %v2422
    %v3825 = vunpack.c.l.b16 %v2423
    %v3826 = vunpack.c.h.b16 %v2423
    %v3827 = vunpack.c.l.b16 %v2424
    %v3828 = vunpack.c.h.b16 %v2424
    %v3829 = vunpack.c.l.b16 %v2425
    %v3830 = vunpack.c.h.b16 %v2425
    %v3831 = vunpack.c.l.b16 %v2426
    %v3832 = vunpack.c.h.b16 %v2426
    %v3833 = vunpack.c.l.b16 %v2427
    %v3834 = vunpack.c.h.b16 %v2427
    %v3835 = vunpack.c.l.b16 %v2428
    %v3836 = vunpack.c.h.b16 %v2428
    %v3837 = vunpack.c.l.b16 %v2429
    %v3838 = vunpack.c.h.b16 %v2429
    %v3839 = vunpack.c.l.b16 %v2430
    %v3840 = vunpack.c.h.b16 %v2430
    %v3841 = vunpack.c.l.b16 %v2431
    %v3842 = vunpack.c.h.b16 %v2431
    %v3843 = vunpack.c.l.b16 %v2432
    %v3844 = vunpack.c.h.b16 %v2432
    %v3845 = vunpack.c.l.b16 %v2433
    %v3846 = vunpack.c.h.b16 %v2433
    %v3847 = vunpack.c.l.b16 %v2434
    %v3848 = vunpack.c.h.b16 %v2434
    %v3849 = vunpack.c.l.b16 %v2435
    %v3850 = vunpack.c.h.b16 %v2435
    %v3851 = vunpack.c.l.b16 %v2436
    %v3852 = vunpack.c.h.b16 %v2436
    %v3853 = vunpack.c.l.b16 %v2437
    %v3854 = vunpack.c.h.b16 %v2437
    %v3855 = vunpack.c.l.b16 %v2438
    %v3856 = vunpack.c.h.b16 %v2438
    %v3857 = vunpack.c.l.b16 %v2439
    %v3858 = vunpack.c.h.b16 %v2439
    %v3859 = vunpack.c.l.b16 %v2440
    %v3860 = vunpack.c.h.b16 %v2440
    %v3861 = vunpack.c.l.b16 %v2441
    %v3862 = vunpack.c.h.b16 %v2441
    %v3863 = vunpack.c.l.b16 %v2442
    %v3864 = vunpack.c.h.b16 %v2442
    %v3865 = vunpack.c.l.b16 %v2443
    %v3866 = vunpack.c.h.b16 %v2443
    %v3867 = vunpack.c.l.b16 %v2444
    %v3868 = vunpack.c.h.b16 %v2444
    %v3869 = vunpack.c.l.b16 %v2445
    %v3870 = vunpack.c.h.b16 %v2445
    %v3871 = vunpack.c.l.b16 %v2446
    %v3872 = vunpack.c.h.b16 %v2446
    %v3873 = vunpack.c.l.b16 %v2447
    %v3874 = vunpack.c.h.b16 %v2447
    %v3875 = vunpack.c.l.b16 %v2448
    %v3876 = vunpack.c.h.b16 %v2448
    %v3877 = vunpack.c.l.b16 %v2449
    %v3878 = vunpack.c.h.b16 %v2449
    %v3879 = vunpack.c.l.b16 %v2450
    %v3880 = vunpack.c.h.b16 %v2450
    %v3881 = vunpack.c.l.b16 %v2451
    %v3882 = vunpack.c.h.b16 %v2451
    %v3883 = vunpack.c.l.b16 %v2452
    %v3884 = vunpack.c.h.b16 %v2452
    %v3885 = vunpack.c.l.b16 %v2453
    %v3886 = vunpack.c.h.b16 %v2453
    %v3887 = vunpack.c.l.b16 %v2454
    %v3888 = vunpack.c.h.b16 %v2454
    %v3889 = vunpack.c.l.b16 %v2455
    %v3890 = vunpack.c.h.b16 %v2455
    %v3891 = vunpack.c.l.b16 %v2456
    %v3892 = vunpack.c.h.b16 %v2456
    %v3893 = vunpack.c.l.b16 %v2457
    %v3894 = vunpack.c.h.b16 %v2457
    %v3895 = vunpack.c.l.b16 %v2458
    %v3896 = vunpack.c.h.b16 %v2458
    %v3897 = vunpack.c.l.b16 %v2459
    %v3898 = vunpack.c.h.b16 %v2459
    %v3899 = vunpack.c.l.b16 %v2460
    %v3900 = vunpack.c.h.b16 %v2460
    %v3901 = vunpack.c.l.b16 %v2461
    %v3902 = vunpack.c.h.b16 %v2461
    %v3903 = vunpack.c.l.b16 %v2462
    %v3904 = vunpack.c.h.b16 %v2462
    %v3905 = vunpack.c.l.b16 %v2463
    %v3906 = vunpack.c.h.b16 %v2463
    %v3907 = vunpack.c.l.b16 %v2464
    %v3908 = vunpack.c.h.b16 %v2464
    %v3909 = vunpack.c.l.b16 %v2465
    %v3910 = vunpack.c.h.b16 %v2465
    %v3911 = vunpack.c.l.b16 %v2466
    %v3912 = vunpack.c.h.b16 %v2466
    %v3913 = vunpack.c.l.b16 %v2467
    %v3914 = vunpack.c.h.b16 %v2467
    %v3915 = vunpack.c.l.b16 %v2468
    %v3916 = vunpack.c.h.b16 %v2468
    %v3917 = vunpack.c.l.b16 %v2469
    %v3918 = vunpack.c.h.b16 %v2469
    %v3919 = vunpack.c.l.b16 %v2470
    %v3920 = vunpack.c.h.b16 %v2470
    %v3921 = vunpack.c.l.b16 %v2471
    %v3922 = vunpack.c.h.b16 %v2471
    %v3923 = vunpack.c.l.b16 %v2472
    %v3924 = vunpack.c.h.b16 %v2472
    %v3925 = vunpack.c.l.b16 %v2473
    %v3926 = vunpack.c.h.b16 %v2473
    %v3927 = vunpack.c.l.b16 %v2474
    %v3928 = vunpack.c.h.b16 %v2474
    %v3929 = vunpack.c.l.b16 %v2475
    %v3930 = vunpack.c.h.b16 %v2475
    %v3931 = vunpack.c.l.b16 %v2476
    %v3932 = vunpack.c.h.b16 %v2476
    %v3933 = vunpack.c.l.b16 %v2477
    %v3934 = vunpack.c.h.b16 %v2477
    %v3935 = vunpack.c.l.b16 %v2478
    %v3936 = vunpack.c.h.b16 %v2478
    %v3937 = vunpack.c.l.b16 %v2479
    %v3938 = vunpack.c.h.b16 %v2479
    %v3939 = vunpack.c.l.b16 %v2480
    %v3940 = vunpack.c.h.b16 %v2480
    %v3941 = vunpack.c.l.b16 %v2481
    %v3942 = vunpack.c.h.b16 %v2481
    %v3943 = vunpack.c.l.b16 %v2482
    %v3944 = vunpack.c.h.b16 %v2482
    %v3945 = vunpack.c.l.b16 %v2483
    %v3946 = vunpack.c.h.b16 %v2483
    %v3947 = vunpack.c.l.b16 %v2484
    %v3948 = vunpack.c.h.b16 %v2484
    %v3949 = vunpack.c.l.b16 %v2485
    %v3950 = vunpack.c.h.b16 %v2485
    %v3951 = vunpack.c.l.b16 %v2486
    %v3952 = vunpack.c.h.b16 %v2486
    %v3953 = vunpack.c.l.b16 %v2487
    %v3954 = vunpack.c.h.b16 %v2487
    %v3955 = vunpack.c.l.b16 %v2488
    %v3956 = vunpack.c.h.b16 %v2488
    %v3957 = vunpack.c.l.b16 %v2489
    %v3958 = vunpack.c.h.b16 %v2489
    %v3959 = vunpack.c.l.b16 %v2490
    %v3960 = vunpack.c.h.b16 %v2490
    %v3961 = vunpack.c.l.b16 %v2491
    %v3962 = vunpack.c.h.b16 %v2491
    %v3963 = vunpack.c.l.b16 %v2492
    %v3964 = vunpack.c.h.b16 %v2492
    %v3965 = vunpack.c.l.b16 %v2493
    %v3966 = vunpack.c.h.b16 %v2493
    %v3967 = vunpack.c.l.b16 %v2494
    %v3968 = vunpack.c.h.b16 %v2494
    %v3969 = vunpack.c.l.b16 %v2495
    %v3970 = vunpack.c.h.b16 %v2495
    %v3971 = vunpack.c.l.b16 %v2496
    %v3972 = vunpack.c.h.b16 %v2496
    %v3973 = vunpack.c.l.b16 %v2497
    %v3974 = vunpack.c.h.b16 %v2497
    %v3975 = vunpack.c.l.b16 %v2498
    %v3976 = vunpack.c.h.b16 %v2498
    %v3977 = vunpack.c.l.b16 %v2499
    %v3978 = vunpack.c.h.b16 %v2499
    %v3979 = vunpack.c.l.b16 %v2500
    %v3980 = vunpack.c.h.b16 %v2500
    %v3981 = vunpack.c.l.b16 %v2501
    %v3982 = vunpack.c.h.b16 %v2501
    %v3983 = vunpack.c.l.b16 %v2502
    %v3984 = vunpack.c.h.b16 %v2502
    %v3985 = vunpack.c.l.b16 %v2503
    %v3986 = vunpack.c.h.b16 %v2503
    %v3987 = vunpack.c.l.b16 %v2504
    %v3988 = vunpack.c.h.b16 %v2504
    %v3989 = vunpack.c.l.b16 %v2505
    %v3990 = vunpack.c.h.b16 %v2505
    %v3991 = vunpack.c.l.b16 %v2506
    %v3992 = vunpack.c.h.b16 %v2506
    %v3993 = vunpack.c.l.b16 %v2507
    %v3994 = vunpack.c.h.b16 %v2507
    %v3995 = vunpack.c.l.b16 %v2508
    %v3996 = vunpack.c.h.b16 %v2508
    %v3997 = vunpack.c.l.b16 %v2509
    %v3998 = vunpack.c.h.b16 %v2509
    %v3999 = vunpack.c.l.b16 %v2510
    %v4000 = vunpack.c.h.b16 %v2510
    %v4001 = vunpack.c.l.b16 %v2511
    %v4002 = vunpack.c.h.b16 %v2511
    %v4003 = vunpack.c.l.b16 %v2512
    %v4004 = vunpack.c.h.b16 %v2512
    %v4005 = vunpack.c.l.b16 %v2513
    %v4006 = vunpack.c.h.b16 %v2513
    %v4007 = vunpack.c.l.b16 %v2514
    %v4008 = vunpack.c.h.b16 %v2514
    %v4009 = vunpack.c.l.b16 %v2515
    %v4010 = vunpack.c.h.b16 %v2515
    %v4011 = vunpack.c.l.b16 %v2516
    %v4012 = vunpack.c.h.b16 %v2516
    %v4013 = vunpack.c.l.b16 %v2517
    %v4014 = vunpack.c.h.b16 %v2517
    %v4015 = vunpack.c.l.b16 %v2518
    %v4016 = vunpack.c.h.b16 %v2518
    %v4017 = vunpack.c.l.b16 %v2519
    %v4018 = vunpack.c.h.b16 %v2519
    %v4019 = vunpack.c.l.b16 %v2520
    %v4020 = vunpack.c.h.b16 %v2520
    %v4021 = vunpack.c.l.b16 %v2521
    %v4022 = vunpack.c.h.b16 %v2521
    %v4023 = vunpack.c.l.b16 %v2522
    %v4024 = vunpack.c.h.b16 %v2522
    %v4025 = vunpack.c.l.b16 %v2523
    %v4026 = vunpack.c.h.b16 %v2523
    %v4027 = vunpack.c.l.b16 %v2524
    %v4028 = vunpack.c.h.b16 %v2524
    %v4029 = vunpack.c.l.b16 %v2525
    %v4030 = vunpack.c.h.b16 %v2525
    %v4031 = vunpack.c.l.b16 %v2526
    %v4032 = vunpack.c.h.b16 %v2526
    %v4033 = vunpack.c.l.b16 %v2527
    %v4034 = vunpack.c.h.b16 %v2527
    %v4035 = vunpack.c.l.b16 %v2528
    %v4036 = vunpack.c.h.b16 %v2528
    %v4037 = vunpack.c.l.b16 %v2529
    %v4038 = vunpack.c.h.b16 %v2529
    %v4039 = vunpack.c.l.b16 %v2530
    %v4040 = vunpack.c.h.b16 %v2530
    %v4041 = vunpack.c.l.b16 %v2531
    %v4042 = vunpack.c.h.b16 %v2531
    %v4043 = vunpack.c.l.b16 %v2532
    %v4044 = vunpack.c.h.b16 %v2532
    %v4045 = vunpack.c.l.b16 %v2533
    %v4046 = vunpack.c.h.b16 %v2533
    %v4047 = vunpack.c.l.b16 %v2534
    %v4048 = vunpack.c.h.b16 %v2534
    %v4049 = vunpack.c.l.b16 %v2535
    %v4050 = vunpack.c.h.b16 %v2535
    %v4051 = vunpack.c.l.b16 %v2536
    %v4052 = vunpack.c.h.b16 %v2536
    %v4053 = vunpack.c.l.b16 %v2537
    %v4054 = vunpack.c.h.b16 %v2537
    %v4055 = vunpack.c.l.b16 %v2538
    %v4056 = vunpack.c.h.b16 %v2538
    %v4057 = vunpack.c.l.b16 %v2539
    %v4058 = vunpack.c.h.b16 %v2539
    %v4059 = vunpack.c.l.b16 %v2540
    %v4060 = vunpack.c.h.b16 %v2540
    %v4061 = vunpack.c.l.b16 %v2541
    %v4062 = vunpack.c.h.b16 %v2541
    %v4063 = vunpack.c.l.b16 %v2542
    %v4064 = vunpack.c.h.b16 %v2542
    %v4065 = vunpack.c.l.b16 %v2543
    %v4066 = vunpack.c.h.b16 %v2543
    %v4067 = vunpack.c.l.b16 %v2544
    %v4068 = vunpack.c.h.b16 %v2544
    %v4069 = vunpack.c.l.b16 %v2545
    %v4070 = vunpack.c.h.b16 %v2545
    %v4071 = vunpack.c.l.b16 %v2546
    %v4072 = vunpack.c.h.b16 %v2546
    %v4073 = vunpack.c.l.b16 %v2547
    %v4074 = vunpack.c.h.b16 %v2547
    %v4075 = vunpack.c.l.b16 %v2548
    %v4076 = vunpack.c.h.b16 %v2548
    %v4077 = vunpack.c.l.b16 %v2549
    %v4078 = vunpack.c.h.b16 %v2549
    %v4079 = vunpack.c.l.b16 %v2550
    %v4080 = vunpack.c.h.b16 %v2550
    %v4081 = vunpack.c.l.b16 %v2551
    %v4082 = vunpack.c.h.b16 %v2551
    %v4083 = vunpack.c.l.b16 %v2552
    %v4084 = vunpack.c.h.b16 %v2552
    %v4085 = vunpack.c.l.b16 %v2553
    %v4086 = vunpack.c.h.b16 %v2553
    %v4087 = vunpack.c.l.b16 %v2554
    %v4088 = vunpack.c.h.b16 %v2554
    %v4089 = vunpack.c.l.b16 %v2555
    %v4090 = vunpack.c.h.b16 %v2555
    %v4091 = vunpack.c.l.b16 %v2556
    %v4092 = vunpack.c.h.b16 %v2556
    %v4093 = vunpack.c.l.b16 %v2557
    %v4094 = vunpack.c.h.b16 %v2557
    %v4095 = vunpack.c.l.b16 %v2558
    %v4096 = vunpack.c.h.b16 %v2558
    %v4097 = vunpack.c.l.b16 %v2559
    %v4098 = vunpack.c.h.b16 %v2559
    %v4099 = vunpack.c.l.b16 %v2560
    %v4100 = vunpack.c.h.b16 %v2560
    %v4101 = vunpack.c.l.b16 %v2561
    %v4102 = vunpack.c.h.b16 %v2561
    %v4103 = vunpack.c.l.b16 %v2562
    %v4104 = vunpack.c.h.b16 %v2562
    %v4105 = vunpack.c.l.b16 %v2563
    %v4106 = vunpack.c.h.b16 %v2563
    %v4107 = vunpack.c.l.b16 %v2564
    %v4108 = vunpack.c.h.b16 %v2564
    %v4109 = vunpack.c.l.b16 %v2565
    %v4110 = vunpack.c.h.b16 %v2565
    %v4111 = vunpack.c.l.b16 %v2566
    %v4112 = vunpack.c.h.b16 %v2566
    %v4113 = vunpack.c.l.b16 %v2567
    %v4114 = vunpack.c.h.b16 %v2567
    %v4115 = vunpack.c.l.b16 %v2568
    %v4116 = vunpack.c.h.b16 %v2568
    %v4117 = vunpack.c.l.b16 %v2569
    %v4118 = vunpack.c.h.b16 %v2569
    %v4119 = vunpack.c.l.b16 %v2570
    %v4120 = vunpack.c.h.b16 %v2570
    %v4121 = vunpack.c.l.b16 %v2571
    %v4122 = vunpack.c.h.b16 %v2571
    %v4123 = vunpack.c.l.b16 %v2572
    %v4124 = vunpack.c.h.b16 %v2572
    %v4125 = vunpack.c.l.b16 %v2573
    %v4126 = vunpack.c.h.b16 %v2573
    %v4127 = vunpack.c.l.b16 %v2574
    %v4128 = vunpack.c.h.b16 %v2574
    %v4129 = vunpack.c.l.b16 %v2575
    %v4130 = vunpack.c.h.b16 %v2575
    %v4131 = vunpack.c.l.b16 %v2576
    %v4132 = vunpack.c.h.b16 %v2576
    %v4133 = vunpack.c.l.b16 %v2577
    %v4134 = vunpack.c.h.b16 %v2577
    %v4135 = vunpack.c.l.b16 %v2578
    %v4136 = vunpack.c.h.b16 %v2578
    %v4137 = vunpack.c.l.b16 %v2579
    %v4138 = vunpack.c.h.b16 %v2579
    %v4139 = vunpack.c.l.b16 %v2580
    %v4140 = vunpack.c.h.b16 %v2580
    %v4141 = vunpack.c.l.b16 %v2581
    %v4142 = vunpack.c.h.b16 %v2581
    %v4143 = vunpack.c.l.b16 %v2582
    %v4144 = vunpack.c.h.b16 %v2582
    %v4145 = vunpack.c.l.b16 %v2583
    %v4146 = vunpack.c.h.b16 %v2583
    %v4147 = vunpack.c.l.b16 %v2584
    %v4148 = vunpack.c.h.b16 %v2584
    %v4149 = vunpack.c.l.b16 %v2585
    %v4150 = vunpack.c.h.b16 %v2585
    %v4151 = vunpack.c.l.b16 %v2586
    %v4152 = vunpack.c.h.b16 %v2586
    %v4153 = vunpack.c.l.b16 %v2587
    %v4154 = vunpack.c.h.b16 %v2587
    %v4155 = vunpack.c.l.b16 %v2588
    %v4156 = vunpack.c.h.b16 %v2588
    %v4157 = vunpack.c.l.b16 %v2589
    %v4158 = vunpack.c.h.b16 %v2589
    %v4159 = vunpack.c.l.b16 %v2590
    %v4160 = vunpack.c.h.b16 %v2590
    %v4161 = vunpack.c.l.b16 %v2591
    %v4162 = vunpack.c.h.b16 %v2591
    %v4163 = vunpack.c.l.b16 %v2592
    %v4164 = vunpack.c.h.b16 %v2592
    %v4165 = vunpack.c.l.b16 %v2593
    %v4166 = vunpack.c.h.b16 %v2593
    %v4167 = vunpack.c.l.b16 %v2594
    %v4168 = vunpack.c.h.b16 %v2594
    %v4169 = vunpack.c.l.b16 %v2595
    %v4170 = vunpack.c.h.b16 %v2595
    %v4171 = vunpack.c.l.b16 %v2596
    %v4172 = vunpack.c.h.b16 %v2596
    %v4173 = vunpack.c.l.b16 %v2597
    %v4174 = vunpack.c.h.b16 %v2597
    %v4175 = vunpack.c.l.b16 %v2598
    %v4176 = vunpack.c.h.b16 %v2598
    %v4177 = vpack.c.b16 %v3161, %v3153
    %v4178 = vpack.c.b16 %v3162, %v3154
    %v4179 = vpack.c.b16 %v3163, %v3155
    %v4180 = vpack.c.b16 %v3164, %v3156
    %v4181 = vpack.c.b16 %v3165, %v3157
    %v4182 = vpack.c.b16 %v3166, %v3158
    %v4183 = vpack.c.b16 %v3167, %v3159
    %v4184 = vpack.c.b16 %v3168, %v3160
    %v4185 = vpack.c.b16 %v3177, %v3169
    %v4186 = vpack.c.b16 %v3178, %v3170
    %v4187 = vpack.c.b16 %v3179, %v3171
    %v4188 = vpack.c.b16 %v3180, %v3172
    %v4189 = vpack.c.b16 %v3181, %v3173
    %v4190 = vpack.c.b16 %v3182, %v3174
    %v4191 = vpack.c.b16 %v3183, %v3175
    %v4192 = vpack.c.b16 %v3184, %v3176
    %v4193 = vpack.c.b16 %v3193, %v3185
    %v4194 = vpack.c.b16 %v3194, %v3186
    %v4195 = vpack.c.b16 %v3195, %v3187
    %v4196 = vpack.c.b16 %v3196, %v3188
    %v4197 = vpack.c.b16 %v3197, %v3189
    %v4198 = vpack.c.b16 %v3198, %v3190
    %v4199 = vpack.c.b16 %v3199, %v3191
    %v4200 = vpack.c.b16 %v3200, %v3192
    %v4201 = vpack.c.b16 %v3209, %v3201
    %v4202 = vpack.c.b16 %v3210, %v3202
    %v4203 = vpack.c.b16 %v3211, %v3203
    %v4204 = vpack.c.b16 %v3212, %v3204
    %v4205 = vpack.c.b16 %v3213, %v3205
    %v4206 = vpack.c.b16 %v3214, %v3206
    %v4207 = vpack.c.b16 %v3215, %v3207
    %v4208 = vpack.c.b16 %v3216, %v3208
    %v4209 = vpack.c.b16 %v3225, %v3217
    %v4210 = vpack.c.b16 %v3226, %v3218
    %v4211 = vpack.c.b16 %v3227, %v3219
    %v4212 = vpack.c.b16 %v3228, %v3220
    %v4213 = vpack.c.b16 %v3229, %v3221
    %v4214 = vpack.c.b16 %v3230, %v3222
    %v4215 = vpack.c.b16 %v3231, %v3223
    %v4216 = vpack.c.b16 %v3232, %v3224
    %v4217 = vpack.c.b16 %v3241, %v3233
    %v4218 = vpack.c.b16 %v3242, %v3234
    %v4219 = vpack.c.b16 %v3243, %v3235
    %v4220 = vpack.c.b16 %v3244, %v3236
    %v4221 = vpack.c.b16 %v3245, %v3237
    %v4222 = vpack.c.b16 %v3246, %v3238
    %v4223 = vpack.c.b16 %v3247, %v3239
    %v4224 = vpack.c.b16 %v3248, %v3240
    %v4225 = vpack.c.b16 %v3257, %v3249
    %v4226 = vpack.c.b16 %v3258, %v3250
    %v4227 = vpack.c.b16 %v3259, %v3251
    %v4228 = vpack.c.b16 %v3260, %v3252
    %v4229 = vpack.c.b16 %v3261, %v3253
    %v4230 = vpack.c.b16 %v3262, %v3254
    %v4231 = vpack.c.b16 %v3263, %v3255
    %v4232 = vpack.c.b16 %v3264, %v3256
    %v4233 = vpack.c.b16 %v3273, %v3265
    %v4234 = vpack.c.b16 %v3274, %v3266
    %v4235 = vpack.c.b16 %v3275, %v3267
    %v4236 = vpack.c.b16 %v3276, %v3268
    %v4237 = vpack.c.b16 %v3277, %v3269
    %v4238 = vpack.c.b16 %v3278, %v3270
    %v4239 = vpack.c.b16 %v3279, %v3271
    %v4240 = vpack.c.b16 %v3280, %v3272
    %v4241 = vpack.c.b16 %v3289, %v3281
    %v4242 = vpack.c.b16 %v3290, %v3282
    %v4243 = vpack.c.b16 %v3291, %v3283
    %v4244 = vpack.c.b16 %v3292, %v3284
    %v4245 = vpack.c.b16 %v3293, %v3285
    %v4246 = vpack.c.b16 %v3294, %v3286
    %v4247 = vpack.c.b16 %v3295, %v3287
    %v4248 = vpack.c.b16 %v3296, %v3288
    %v4249 = vpack.c.b16 %v3305, %v3297
    %v4250 = vpack.c.b16 %v3306, %v3298
    %v4251 = vpack.c.b16 %v3307, %v3299
    %v4252 = vpack.c.b16 %v3308, %v3300
    %v4253 = vpack.c.b16 %v3309, %v3301
    %v4254 = vpack.c.b16 %v3310, %v3302
    %v4255 = vpack.c.b16 %v3311, %v3303
    %v4256 = vpack.c.b16 %v3312, %v3304
    %v4257 = vpack.c.b16 %v3321, %v3313
    %v4258 = vpack.c.b16 %v3322, %v3314
    %v4259 = vpack.c.b16 %v3323, %v3315
    %v4260 = vpack.c.b16 %v3324, %v3316
    %v4261 = vpack.c.b16 %v3325, %v3317
    %v4262 = vpack.c.b16 %v3326, %v3318
    %v4263 = vpack.c.b16 %v3327, %v3319
    %v4264 = vpack.c.b16 %v3328, %v3320
    %v4265 = vpack.c.b16 %v3337, %v3329
    %v4266 = vpack.c.b16 %v3338, %v3330
    %v4267 = vpack.c.b16 %v3339, %v3331
    %v4268 = vpack.c.b16 %v3340, %v3332
    %v4269 = vpack.c.b16 %v3341, %v3333
    %v4270 = vpack.c.b16 %v3342, %v3334
    %v4271 = vpack.c.b16 %v3343, %v3335
    %v4272 = vpack.c.b16 %v3344, %v3336
    %v4273 = vpack.c.b16 %v3353, %v3345
    %v4274 = vpack.c.b16 %v3354, %v3346
    %v4275 = vpack.c.b16 %v3355, %v3347
    %v4276 = vpack.c.b16 %v3356, %v3348
    %v4277 = vpack.c.b16 %v3357, %v3349
    %v4278 = vpack.c.b16 %v3358, %v3350
    %v4279 = vpack.c.b16 %v3359, %v3351
    %v4280 = vpack.c.b16 %v3360, %v3352
    %v4281 = vpack.c.b16 %v3369, %v3361
    %v4282 = vpack.c.b16 %v3370, %v3362
    %v4283 = vpack.c.b16 %v3371, %v3363
    %v4284 = vpack.c.b16 %v3372, %v3364
    %v4285 = vpack.c.b16 %v3373, %v3365
    %v4286 = vpack.c.b16 %v3374, %v3366
    %v4287 = vpack.c.b16 %v3375, %v3367
    %v4288 = vpack.c.b16 %v3376, %v3368
    %v4289 = vpack.c.b16 %v3385, %v3377
    %v4290 = vpack.c.b16 %v3386, %v3378
    %v4291 = vpack.c.b16 %v3387, %v3379
    %v4292 = vpack.c.b16 %v3388, %v3380
    %v4293 = vpack.c.b16 %v3389, %v3381
    %v4294 = vpack.c.b16 %v3390, %v3382
    %v4295 = vpack.c.b16 %v3391, %v3383
    %v4296 = vpack.c.b16 %v3392, %v3384
    %v4297 = vpack.c.b16 %v3401, %v3393
    %v4298 = vpack.c.b16 %v3402, %v3394
    %v4299 = vpack.c.b16 %v3403, %v3395
    %v4300 = vpack.c.b16 %v3404, %v3396
    %v4301 = vpack.c.b16 %v3405, %v3397
    %v4302 = vpack.c.b16 %v3406, %v3398
    %v4303 = vpack.c.b16 %v3407, %v3399
    %v4304 = vpack.c.b16 %v3408, %v3400
    %v4305 = vpack.c.b16 %v3417, %v3409
    %v4306 = vpack.c.b16 %v3418, %v3410
    %v4307 = vpack.c.b16 %v3419, %v3411
    %v4308 = vpack.c.b16 %v3420, %v3412
    %v4309 = vpack.c.b16 %v3421, %v3413
    %v4310 = vpack.c.b16 %v3422, %v3414
    %v4311 = vpack.c.b16 %v3423, %v3415
    %v4312 = vpack.c.b16 %v3424, %v3416
    %v4313 = vpack.c.b16 %v3433, %v3425
    %v4314 = vpack.c.b16 %v3434, %v3426
    %v4315 = vpack.c.b16 %v3435, %v3427
    %v4316 = vpack.c.b16 %v3436, %v3428
    %v4317 = vpack.c.b16 %v3437, %v3429
    %v4318 = vpack.c.b16 %v3438, %v3430
    %v4319 = vpack.c.b16 %v3439, %v3431
    %v4320 = vpack.c.b16 %v3440, %v3432
    %v4321 = vpack.c.b16 %v3449, %v3441
    %v4322 = vpack.c.b16 %v3450, %v3442
    %v4323 = vpack.c.b16 %v3451, %v3443
    %v4324 = vpack.c.b16 %v3452, %v3444
    %v4325 = vpack.c.b16 %v3453, %v3445
    %v4326 = vpack.c.b16 %v3454, %v3446
    %v4327 = vpack.c.b16 %v3455, %v3447
    %v4328 = vpack.c.b16 %v3456, %v3448
    %v4329 = vpack.c.b16 %v3465, %v3457
    %v4330 = vpack.c.b16 %v3466, %v3458
    %v4331 = vpack.c.b16 %v3467, %v3459
    %v4332 = vpack.c.b16 %v3468, %v3460
    %v4333 = vpack.c.b16 %v3469, %v3461
    %v4334 = vpack.c.b16 %v3470, %v3462
    %v4335 = vpack.c.b16 %v3471, %v3463
    %v4336 = vpack.c.b16 %v3472, %v3464
    %v4337 = vpack.c.b16 %v3481, %v3473
    %v4338 = vpack.c.b16 %v3482, %v3474
    %v4339 = vpack.c.b16 %v3483, %v3475
    %v4340 = vpack.c.b16 %v3484, %v3476
    %v4341 = vpack.c.b16 %v3485, %v3477
    %v4342 = vpack.c.b16 %v3486, %v3478
    %v4343 = vpack.c.b16 %v3487, %v3479
    %v4344 = vpack.c.b16 %v3488, %v3480
    %v4345 = vpack.c.b16 %v3497, %v3489
    %v4346 = vpack.c.b16 %v3498, %v3490
    %v4347 = vpack.c.b16 %v3499, %v3491
    %v4348 = vpack.c.b16 %v3500, %v3492
    %v4349 = vpack.c.b16 %v3501, %v3493
    %v4350 = vpack.c.b16 %v3502, %v3494
    %v4351 = vpack.c.b16 %v3503, %v3495
    %v4352 = vpack.c.b16 %v3504, %v3496
    %v4353 = vpack.c.b16 %v3513, %v3505
    %v4354 = vpack.c.b16 %v3514, %v3506
    %v4355 = vpack.c.b16 %v3515, %v3507
    %v4356 = vpack.c.b16 %v3516, %v3508
    %v4357 = vpack.c.b16 %v3517, %v3509
    %v4358 = vpack.c.b16 %v3518, %v3510
    %v4359 = vpack.c.b16 %v3519, %v3511
    %v4360 = vpack.c.b16 %v3520, %v3512
    %v4361 = vpack.c.b16 %v3529, %v3521
    %v4362 = vpack.c.b16 %v3530, %v3522
    %v4363 = vpack.c.b16 %v3531, %v3523
    %v4364 = vpack.c.b16 %v3532, %v3524
    %v4365 = vpack.c.b16 %v3533, %v3525
    %v4366 = vpack.c.b16 %v3534, %v3526
    %v4367 = vpack.c.b16 %v3535, %v3527
    %v4368 = vpack.c.b16 %v3536, %v3528
    %v4369 = vpack.c.b16 %v3545, %v3537
    %v4370 = vpack.c.b16 %v3546, %v3538
    %v4371 = vpack.c.b16 %v3547, %v3539
    %v4372 = vpack.c.b16 %v3548, %v3540
    %v4373 = vpack.c.b16 %v3549, %v3541
    %v4374 = vpack.c.b16 %v3550, %v3542
    %v4375 = vpack.c.b16 %v3551, %v3543
    %v4376 = vpack.c.b16 %v3552, %v3544
    %v4377 = vpack.c.b16 %v3561, %v3553
    %v4378 = vpack.c.b16 %v3562, %v3554
    %v4379 = vpack.c.b16 %v3563, %v3555
    %v4380 = vpack.c.b16 %v3564, %v3556
    %v4381 = vpack.c.b16 %v3565, %v3557
    %v4382 = vpack.c.b16 %v3566, %v3558
    %v4383 = vpack.c.b16 %v3567, %v3559
    %v4384 = vpack.c.b16 %v3568, %v3560
    %v4385 = vpack.c.b16 %v3577, %v3569
    %v4386 = vpack.c.b16 %v3578, %v3570
    %v4387 = vpack.c.b16 %v3579, %v3571
    %v4388 = vpack.c.b16 %v3580, %v3572
    %v4389 = vpack.c.b16 %v3581, %v3573
    %v4390 = vpack.c.b16 %v3582, %v3574
    %v4391 = vpack.c.b16 %v3583, %v3575
    %v4392 = vpack.c.b16 %v3584, %v3576
    %v4393 = vpack.c.b16 %v3593, %v3585
    %v4394 = vpack.c.b16 %v3594, %v3586
    %v4395 = vpack.c.b16 %v3595, %v3587
    %v4396 = vpack.c.b16 %v3596, %v3588
    %v4397 = vpack.c.b16 %v3597, %v3589
    %v4398 = vpack.c.b16 %v3598, %v3590
    %v4399 = vpack.c.b16 %v3599, %v3591
    %v4400 = vpack.c.b16 %v3600, %v3592
    %v4401 = vpack.c.b16 %v3609, %v3601
    %v4402 = vpack.c.b16 %v3610, %v3602
    %v4403 = vpack.c.b16 %v3611, %v3603
    %v4404 = vpack.c.b16 %v3612, %v3604
    %v4405 = vpack.c.b16 %v3613, %v3605
    %v4406 = vpack.c.b16 %v3614, %v3606
    %v4407 = vpack.c.b16 %v3615, %v3607
    %v4408 = vpack.c.b16 %v3616, %v3608
    %v4409 = vpack.c.b16 %v3625, %v3617
    %v4410 = vpack.c.b16 %v3626, %v3618
    %v4411 = vpack.c.b16 %v3627, %v3619
    %v4412 = vpack.c.b16 %v3628, %v3620
    %v4413 = vpack.c.b16 %v3629, %v3621
    %v4414 = vpack.c.b16 %v3630, %v3622
    %v4415 = vpack.c.b16 %v3631, %v3623
    %v4416 = vpack.c.b16 %v3632, %v3624
    %v4417 = vpack.c.b16 %v3641, %v3633
    %v4418 = vpack.c.b16 %v3642, %v3634
    %v4419 = vpack.c.b16 %v3643, %v3635
    %v4420 = vpack.c.b16 %v3644, %v3636
    %v4421 = vpack.c.b16 %v3645, %v3637
    %v4422 = vpack.c.b16 %v3646, %v3638
    %v4423 = vpack.c.b16 %v3647, %v3639
    %v4424 = vpack.c.b16 %v3648, %v3640
    %v4425 = vpack.c.b16 %v3657, %v3649
    %v4426 = vpack.c.b16 %v3658, %v3650
    %v4427 = vpack.c.b16 %v3659, %v3651
    %v4428 = vpack.c.b16 %v3660, %v3652
    %v4429 = vpack.c.b16 %v3661, %v3653
    %v4430 = vpack.c.b16 %v3662, %v3654
    %v4431 = vpack.c.b16 %v3663, %v3655
    %v4432 = vpack.c.b16 %v3664, %v3656
    %v4433 = vpack.c.b16 %v3673, %v3665
    %v4434 = vpack.c.b16 %v3674, %v3666
    %v4435 = vpack.c.b16 %v3675, %v3667
    %v4436 = vpack.c.b16 %v3676, %v3668
    %v4437 = vpack.c.b16 %v3677, %v3669
    %v4438 = vpack.c.b16 %v3678, %v3670
    %v4439 = vpack.c.b16 %v3679, %v3671
    %v4440 = vpack.c.b16 %v3680, %v3672
    %v4441 = vpack.c.b16 %v3689, %v3681
    %v4442 = vpack.c.b16 %v3690, %v3682
    %v4443 = vpack.c.b16 %v3691, %v3683
    %v4444 = vpack.c.b16 %v3692, %v3684
    %v4445 = vpack.c.b16 %v3693, %v3685
    %v4446 = vpack.c.b16 %v3694, %v3686
    %v4447 = vpack.c.b16 %v3695, %v3687
    %v4448 = vpack.c.b16 %v3696, %v3688
    %v4449 = vpack.c.b16 %v3705, %v3697
    %v4450 = vpack.c.b16 %v3706, %v3698
    %v4451 = vpack.c.b16 %v3707, %v3699
    %v4452 = vpack.c.b16 %v3708, %v3700
    %v4453 = vpack.c.b16 %v3709, %v3701
    %v4454 = vpack.c.b16 %v3710, %v3702
    %v4455 = vpack.c.b16 %v3711, %v3703
    %v4456 = vpack.c.b16 %v3712, %v3704
    %v4457 = vpack.c.b16 %v3721, %v3713
    %v4458 = vpack.c.b16 %v3722, %v3714
    %v4459 = vpack.c.b16 %v3723, %v3715
    %v4460 = vpack.c.b16 %v3724, %v3716
    %v4461 = vpack.c.b16 %v3725, %v3717
    %v4462 = vpack.c.b16 %v3726, %v3718
    %v4463 = vpack.c.b16 %v3727, %v3719
    %v4464 = vpack.c.b16 %v3728, %v3720
    %v4465 = vpack.c.b16 %v3737, %v3729
    %v4466 = vpack.c.b16 %v3738, %v3730
    %v4467 = vpack.c.b16 %v3739, %v3731
    %v4468 = vpack.c.b16 %v3740, %v3732
    %v4469 = vpack.c.b16 %v3741, %v3733
    %v4470 = vpack.c.b16 %v3742, %v3734
    %v4471 = vpack.c.b16 %v3743, %v3735
    %v4472 = vpack.c.b16 %v3744, %v3736
    %v4473 = vpack.c.b16 %v3753, %v3745
    %v4474 = vpack.c.b16 %v3754, %v3746
    %v4475 = vpack.c.b16 %v3755, %v3747
    %v4476 = vpack.c.b16 %v3756, %v3748
    %v4477 = vpack.c.b16 %v3757, %v3749
    %v4478 = vpack.c.b16 %v3758, %v3750
    %v4479 = vpack.c.b16 %v3759, %v3751
    %v4480 = vpack.c.b16 %v3760, %v3752
    %v4481 = vpack.c.b16 %v3769, %v3761
    %v4482 = vpack.c.b16 %v3770, %v3762
    %v4483 = vpack.c.b16 %v3771, %v3763
    %v4484 = vpack.c.b16 %v3772, %v3764
    %v4485 = vpack.c.b16 %v3773, %v3765
    %v4486 = vpack.c.b16 %v3774, %v3766
    %v4487 = vpack.c.b16 %v3775, %v3767
    %v4488 = vpack.c.b16 %v3776, %v3768
    %v4489 = vpack.c.b16 %v3785, %v3777
    %v4490 = vpack.c.b16 %v3786, %v3778
    %v4491 = vpack.c.b16 %v3787, %v3779
    %v4492 = vpack.c.b16 %v3788, %v3780
    %v4493 = vpack.c.b16 %v3789, %v3781
    %v4494 = vpack.c.b16 %v3790, %v3782
    %v4495 = vpack.c.b16 %v3791, %v3783
    %v4496 = vpack.c.b16 %v3792, %v3784
    %v4497 = vpack.c.b16 %v3801, %v3793
    %v4498 = vpack.c.b16 %v3802, %v3794
    %v4499 = vpack.c.b16 %v3803, %v3795
    %v4500 = vpack.c.b16 %v3804, %v3796
    %v4501 = vpack.c.b16 %v3805, %v3797
    %v4502 = vpack.c.b16 %v3806, %v3798
    %v4503 = vpack.c.b16 %v3807, %v3799
    %v4504 = vpack.c.b16 %v3808, %v3800
    %v4505 = vpack.c.b16 %v3817, %v3809
    %v4506 = vpack.c.b16 %v3818, %v3810
    %v4507 = vpack.c.b16 %v3819, %v3811
    %v4508 = vpack.c.b16 %v3820, %v3812
    %v4509 = vpack.c.b16 %v3821, %v3813
    %v4510 = vpack.c.b16 %v3822, %v3814
    %v4511 = vpack.c.b16 %v3823, %v3815
    %v4512 = vpack.c.b16 %v3824, %v3816
    %v4513 = vpack.c.b16 %v3833, %v3825
    %v4514 = vpack.c.b16 %v3834, %v3826
    %v4515 = vpack.c.b16 %v3835, %v3827
    %v4516 = vpack.c.b16 %v3836, %v3828
    %v4517 = vpack.c.b16 %v3837, %v3829
    %v4518 = vpack.c.b16 %v3838, %v3830
    %v4519 = vpack.c.b16 %v3839, %v3831
    %v4520 = vpack.c.b16 %v3840, %v3832
    %v4521 = vpack.c.b16 %v3849, %v3841
    %v4522 = vpack.c.b16 %v3850, %v3842
    %v4523 = vpack.c.b16 %v3851, %v3843
    %v4524 = vpack.c.b16 %v3852, %v3844
    %v4525 = vpack.c.b16 %v3853, %v3845
    %v4526 = vpack.c.b16 %v3854, %v3846
    %v4527 = vpack.c.b16 %v3855, %v3847
    %v4528 = vpack.c.b16 %v3856, %v3848
    %v4529 = vpack.c.b16 %v3865, %v3857
    %v4530 = vpack.c.b16 %v3866, %v3858
    %v4531 = vpack.c.b16 %v3867, %v3859
    %v4532 = vpack.c.b16 %v3868, %v3860
    %v4533 = vpack.c.b16 %v3869, %v3861
    %v4534 = vpack.c.b16 %v3870, %v3862
    %v4535 = vpack.c.b16 %v3871, %v3863
    %v4536 = vpack.c.b16 %v3872, %v3864
    %v4537 = vpack.c.b16 %v3881, %v3873
    %v4538 = vpack.c.b16 %v3882, %v3874
    %v4539 = vpack.c.b16 %v3883, %v3875
    %v4540 = vpack.c.b16 %v3884, %v3876
    %v4541 = vpack.c.b16 %v3885, %v3877
    %v4542 = vpack.c.b16 %v3886, %v3878
    %v4543 = vpack.c.b16 %v3887, %v3879
    %v4544 = vpack.c.b16 %v3888, %v3880
    %v4545 = vpack.c.b16 %v3897, %v3889
    %v4546 = vpack.c.b16 %v3898, %v3890
    %v4547 = vpack.c.b16 %v3899, %v3891
    %v4548 = vpack.c.b16 %v3900, %v3892
    %v4549 = vpack.c.b16 %v3901, %v3893
    %v4550 = vpack.c.b16 %v3902, %v3894
    %v4551 = vpack.c.b16 %v3903, %v3895
    %v4552 = vpack.c.b16 %v3904, %v3896
    %v4553 = vpack.c.b16 %v3913, %v3905
    %v4554 = vpack.c.b16 %v3914, %v3906
    %v4555 = vpack.c.b16 %v3915, %v3907
    %v4556 = vpack.c.b16 %v3916, %v3908
    %v4557 = vpack.c.b16 %v3917, %v3909
    %v4558 = vpack.c.b16 %v3918, %v3910
    %v4559 = vpack.c.b16 %v3919, %v3911
    %v4560 = vpack.c.b16 %v3920, %v3912
    %v4561 = vpack.c.b16 %v3929, %v3921
    %v4562 = vpack.c.b16 %v3930, %v3922
    %v4563 = vpack.c.b16 %v3931, %v3923
    %v4564 = vpack.c.b16 %v3932, %v3924
    %v4565 = vpack.c.b16 %v3933, %v3925
    %v4566 = vpack.c.b16 %v3934, %v3926
    %v4567 = vpack.c.b16 %v3935, %v3927
    %v4568 = vpack.c.b16 %v3936, %v3928
    %v4569 = vpack.c.b16 %v3945, %v3937
    %v4570 = vpack.c.b16 %v3946, %v3938
    %v4571 = vpack.c.b16 %v3947, %v3939
    %v4572 = vpack.c.b16 %v3948, %v3940
    %v4573 = vpack.c.b16 %v3949, %v3941
    %v4574 = vpack.c.b16 %v3950, %v3942
    %v4575 = vpack.c.b16 %v3951, %v3943
    %v4576 = vpack.c.b16 %v3952, %v3944
    %v4577 = vpack.c.b16 %v3961, %v3953
    %v4578 = vpack.c.b16 %v3962, %v3954
    %v4579 = vpack.c.b16 %v3963, %v3955
    %v4580 = vpack.c.b16 %v3964, %v3956
    %v4581 = vpack.c.b16 %v3965, %v3957
    %v4582 = vpack.c.b16 %v3966, %v3958
    %v4583 = vpack.c.b16 %v3967, %v3959
    %v4584 = vpack.c.b16 %v3968, %v3960
    %v4585 = vpack.c.b16 %v3977, %v3969
    %v4586 = vpack.c.b16 %v3978, %v3970
    %v4587 = vpack.c.b16 %v3979, %v3971
    %v4588 = vpack.c.b16 %v3980, %v3972
    %v4589 = vpack.c.b16 %v3981, %v3973
    %v4590 = vpack.c.b16 %v3982, %v3974
    %v4591 = vpack.c.b16 %v3983, %v3975
    %v4592 = vpack.c.b16 %v3984, %v3976
    %v4593 = vpack.c.b16 %v3993, %v3985
    %v4594 = vpack.c.b16 %v3994, %v3986
    %v4595 = vpack.c.b16 %v3995, %v3987
    %v4596 = vpack.c.b16 %v3996, %v3988
    %v4597 = vpack.c.b16 %v3997, %v3989
    %v4598 = vpack.c.b16 %v3998, %v3990
    %v4599 = vpack.c.b16 %v3999, %v3991
    %v4600 = vpack.c.b16 %v4000, %v3992
    %v4601 = vpack.c.b16 %v4009, %v4001
    %v4602 = vpack.c.b16 %v4010, %v4002
    %v4603 = vpack.c.b16 %v4011, %v4003
    %v4604 = vpack.c.b16 %v4012, %v4004
    %v4605 = vpack.c.b16 %v4013, %v4005
    %v4606 = vpack.c.b16 %v4014, %v4006
    %v4607 = vpack.c.b16 %v4015, %v4007
    %v4608 = vpack.c.b16 %v4016, %v4008
    %v4609 = vpack.c.b16 %v4025, %v4017
    %v4610 = vpack.c.b16 %v4026, %v4018
    %v4611 = vpack.c.b16 %v4027, %v4019
    %v4612 = vpack.c.b16 %v4028, %v4020
    %v4613 = vpack.c.b16 %v4029, %v4021
    %v4614 = vpack.c.b16 %v4030, %v4022
    %v4615 = vpack.c.b16 %v4031, %v4023
    %v4616 = vpack.c.b16 %v4032, %v4024
    %v4617 = vpack.c.b16 %v4041, %v4033
    %v4618 = vpack.c.b16 %v4042, %v4034
    %v4619 = vpack.c.b16 %v4043, %v4035
    %v4620 = vpack.c.b16 %v4044, %v4036
    %v4621 = vpack.c.b16 %v4045, %v4037
    %v4622 = vpack.c.b16 %v4046, %v4038
    %v4623 = vpack.c.b16 %v4047, %v4039
    %v4624 = vpack.c.b16 %v4048, %v4040
    %v4625 = vpack.c.b16 %v4057, %v4049
    %v4626 = vpack.c.b16 %v4058, %v4050
    %v4627 = vpack.c.b16 %v4059, %v4051
    %v4628 = vpack.c.b16 %v4060, %v4052
    %v4629 = vpack.c.b16 %v4061, %v4053
    %v4630 = vpack.c.b16 %v4062, %v4054
    %v4631 = vpack.c.b16 %v4063, %v4055
    %v4632 = vpack.c.b16 %v4064, %v4056
    %v4633 = vpack.c.b16 %v4073, %v4065
    %v4634 = vpack.c.b16 %v4074, %v4066
    %v4635 = vpack.c.b16 %v4075, %v4067
    %v4636 = vpack.c.b16 %v4076, %v4068
    %v4637 = vpack.c.b16 %v4077, %v4069
    %v4638 = vpack.c.b16 %v4078, %v4070
    %v4639 = vpack.c.b16 %v4079, %v4071
    %v4640 = vpack.c.b16 %v4080, %v4072
    %v4641 = vpack.c.b16 %v4089, %v4081
    %v4642 = vpack.c.b16 %v4090, %v4082
    %v4643 = vpack.c.b16 %v4091, %v4083
    %v4644 = vpack.c.b16 %v4092, %v4084
    %v4645 = vpack.c.b16 %v4093, %v4085
    %v4646 = vpack.c.b16 %v4094, %v4086
    %v4647 = vpack.c.b16 %v4095, %v4087
    %v4648 = vpack.c.b16 %v4096, %v4088
    %v4649 = vpack.c.b16 %v4105, %v4097
    %v4650 = vpack.c.b16 %v4106, %v4098
    %v4651 = vpack.c.b16 %v4107, %v4099
    %v4652 = vpack.c.b16 %v4108, %v4100
    %v4653 = vpack.c.b16 %v4109, %v4101
    %v4654 = vpack.c.b16 %v4110, %v4102
    %v4655 = vpack.c.b16 %v4111, %v4103
    %v4656 = vpack.c.b16 %v4112, %v4104
    %v4657 = vpack.c.b16 %v4121, %v4113
    %v4658 = vpack.c.b16 %v4122, %v4114
    %v4659 = vpack.c.b16 %v4123, %v4115
    %v4660 = vpack.c.b16 %v4124, %v4116
    %v4661 = vpack.c.b16 %v4125, %v4117
    %v4662 = vpack.c.b16 %v4126, %v4118
    %v4663 = vpack.c.b16 %v4127, %v4119
    %v4664 = vpack.c.b16 %v4128, %v4120
    %v4665 = vpack.c.b16 %v4137, %v4129
    %v4666 = vpack.c.b16 %v4138, %v4130
    %v4667 = vpack.c.b16 %v4139, %v4131
    %v4668 = vpack.c.b16 %v4140, %v4132
    %v4669 = vpack.c.b16 %v4141, %v4133
    %v4670 = vpack.c.b16 %v4142, %v4134
    %v4671 = vpack.c.b16 %v4143, %v4135
    %v4672 = vpack.c.b16 %v4144, %v4136
    %v4673 = vpack.c.b16 %v4153, %v4145
    %v4674 = vpack.c.b16 %v4154, %v4146
    %v4675 = vpack.c.b16 %v4155, %v4147
    %v4676 = vpack.c.b16 %v4156, %v4148
    %v4677 = vpack.c.b16 %v4157, %v4149
    %v4678 = vpack.c.b16 %v4158, %v4150
    %v4679 = vpack.c.b16 %v4159, %v4151
    %v4680 = vpack.c.b16 %v4160, %v4152
    %v4681 = vpack.c.b16 %v4169, %v4161
    %v4682 = vpack.c.b16 %v4170, %v4162
    %v4683 = vpack.c.b16 %v4171, %v4163
    %v4684 = vpack.c.b16 %v4172, %v4164
    %v4685 = vpack.c.b16 %v4173, %v4165
    %v4686 = vpack.c.b16 %v4174, %v4166
    %v4687 = vpack.c.b16 %v4175, %v4167
    %v4688 = vpack.c.b16 %v4176, %v4168
    %5201 = vmatprep.subr.bf16.mxu0 %v4178
    %5202 = vmatpush1.bf16.msra.mxu0 %v4177
    %5203 = vmatprep.subr.bf16.mxu0 %v4186
    %5204 = vmatpush1.bf16.msra.mxu0 %v4185
    %5205 = vmatprep.subr.bf16.mxu0 %v4194
    %5206 = vmatpush1.bf16.msra.mxu0 %v4193
    %5207 = vmatprep.subr.bf16.mxu0 %v4202
    %5208 = vmatpush1.bf16.msra.mxu0 %v4201
    %5209 = vmatprep.subr.bf16.mxu0 %v4210
    %5210 = vmatpush1.bf16.msra.mxu0 %v4209
    %5211 = vmatprep.subr.bf16.mxu0 %v4218
    %5212 = vmatpush1.bf16.msra.mxu0 %v4217
    %5213 = vmatprep.subr.bf16.mxu0 %v4226
    %5214 = vmatpush1.bf16.msra.mxu0 %v4225
    %5215 = vmatprep.subr.bf16.mxu0 %v4234
    %5216 = vmatpush1.bf16.msra.mxu0 %v4233
    %5217 = vmatprep.subr.bf16.mxu0 %v4242
    %5218 = vmatpush1.bf16.msra.mxu0 %v4241
    %5219 = vmatprep.subr.bf16.mxu0 %v4250
    %5220 = vmatpush1.bf16.msra.mxu0 %v4249
    %5221 = vmatprep.subr.bf16.mxu0 %v4258
    %5222 = vmatpush1.bf16.msra.mxu0 %v4257
    %5223 = vmatprep.subr.bf16.mxu0 %v4266
    %5224 = vmatpush1.bf16.msra.mxu0 %v4265
    %5225 = vmatprep.subr.bf16.mxu0 %v4274
    %5226 = vmatpush1.bf16.msra.mxu0 %v4273
    %5227 = vmatprep.subr.bf16.mxu0 %v4282
    %5228 = vmatpush1.bf16.msra.mxu0 %v4281
    %5229 = vmatprep.subr.bf16.mxu0 %v4290
    %5230 = vmatpush1.bf16.msra.mxu0 %v4289
    %5231 = vmatprep.subr.bf16.mxu0 %v4298
    %5232 = vmatpush1.bf16.msra.mxu0 %v4297
    %5233 = vmatprep.mubr.bf16.mxu0 %v2080
    %5234 = vmatmul.mubr.bf16.gmra.mrb[0].mxu0 %v2079
    %v5235 = vpop.f32.mrb[0].mxu0
    %v5236 = vadd.f32 %v2604, %v5235
    %v5237 = vpop.f32.mrb[0].mxu0
    %v5238 = vadd.f32 %v2608, %v5237
    %v5239 = vpop.f32.mrb[0].mxu0
    %v5240 = vadd.f32 %v2604, %v5239
    %v5241 = vpop.f32.mrb[0].mxu0
    %v5242 = vadd.f32 %v2608, %v5241
    %5243 = vdwg.mxu0
    %5244 = vmatprep.subr.bf16.mxu0 %v4306
    %5245 = vmatpush1.bf16.msra.mxu0 %v4305
    %5246 = vmatprep.subr.bf16.mxu0 %v4314
    %5247 = vmatpush1.bf16.msra.mxu0 %v4313
    %5248 = vmatprep.subr.bf16.mxu0 %v4322
    %5249 = vmatpush1.bf16.msra.mxu0 %v4321
    %5250 = vmatprep.subr.bf16.mxu0 %v4330
    %5251 = vmatpush1.bf16.msra.mxu0 %v4329
    %5252 = vmatprep.subr.bf16.mxu0 %v4338
    %5253 = vmatpush1.bf16.msra.mxu0 %v4337
    %5254 = vmatprep.subr.bf16.mxu0 %v4346
    %5255 = vmatpush1.bf16.msra.mxu0 %v4345
    %5256 = vmatprep.subr.bf16.mxu0 %v4354
    %5257 = vmatpush1.bf16.msra.mxu0 %v4353
    %5258 = vmatprep.subr.bf16.mxu0 %v4362
    %5259 = vmatpush1.bf16.msra.mxu0 %v4361
    %5260 = vmatprep.subr.bf16.mxu0 %v4370
    %5261 = vmatpush1.bf16.msra.mxu0 %v4369
    %5262 = vmatprep.subr.bf16.mxu0 %v4378
    %5263 = vmatpush1.bf16.msra.mxu0 %v4377
    %5264 = vmatprep.subr.bf16.mxu0 %v4386
    %5265 = vmatpush1.bf16.msra.mxu0 %v4385
    %5266 = vmatprep.subr.bf16.mxu0 %v4394
    %5267 = vmatpush1.bf16.msra.mxu0 %v4393
    %5268 = vmatprep.subr.bf16.mxu0 %v4402
    %5269 = vmatpush1.bf16.msra.mxu0 %v4401
    %5270 = vmatprep.subr.bf16.mxu0 %v4410
    %5271 = vmatpush1.bf16.msra.mxu0 %v4409
    %5272 = vmatprep.subr.bf16.mxu0 %v4418
    %5273 = vmatpush1.bf16.msra.mxu0 %v4417
    %5274 = vmatprep.subr.bf16.mxu0 %v4426
    %5275 = vmatpush1.bf16.msra.mxu0 %v4425
    %5276 = vmatprep.mubr.bf16.mxu0 %v2082
    %5277 = vmatmul.mubr.bf16.gmra.mrb[0].mxu0 %v2081
    %v5278 = vpop.f32.mrb[0].mxu0
    %v5279 = vadd.f32 %v5236, %v5278
    %v5280 = vpop.f32.mrb[0].mxu0
    %v5281 = vadd.f32 %v5238, %v5280
    %v5282 = vpop.f32.mrb[0].mxu0
    %v5283 = vadd.f32 %v5240, %v5282
    %v5284 = vpop.f32.mrb[0].mxu0
    %v5285 = vadd.f32 %v5242, %v5284
    %5286 = vdwg.mxu0
    %5287 = vmatprep.subr.bf16.mxu0 %v4434
    %5288 = vmatpush1.bf16.msra.mxu0 %v4433
    %5289 = vmatprep.subr.bf16.mxu0 %v4442
    %5290 = vmatpush1.bf16.msra.mxu0 %v4441
    %5291 = vmatprep.subr.bf16.mxu0 %v4450
    %5292 = vmatpush1.bf16.msra.mxu0 %v4449
    %5293 = vmatprep.subr.bf16.mxu0 %v4458
    %5294 = vmatpush1.bf16.msra.mxu0 %v4457
    %5295 = vmatprep.subr.bf16.mxu0 %v4466
    %5296 = vmatpush1.bf16.msra.mxu0 %v4465
    %5297 = vmatprep.subr.bf16.mxu0 %v4474
    %5298 = vmatpush1.bf16.msra.mxu0 %v4473
    %5299 = vmatprep.subr.bf16.mxu0 %v4482
    %5300 = vmatpush1.bf16.msra.mxu0 %v4481
    %5301 = vmatprep.subr.bf16.mxu0 %v4490
    %5302 = vmatpush1.bf16.msra.mxu0 %v4489
    %5303 = vmatprep.subr.bf16.mxu0 %v4498
    %5304 = vmatpush1.bf16.msra.mxu0 %v4497
    %5305 = vmatprep.subr.bf16.mxu0 %v4506
    %5306 = vmatpush1.bf16.msra.mxu0 %v4505
    %5307 = vmatprep.subr.bf16.mxu0 %v4514
    %5308 = vmatpush1.bf16.msra.mxu0 %v4513
    %5309 = vmatprep.subr.bf16.mxu0 %v4522
    %5310 = vmatpush1.bf16.msra.mxu0 %v4521
    %5311 = vmatprep.subr.bf16.mxu0 %v4530
    %5312 = vmatpush1.bf16.msra.mxu0 %v4529
    %5313 = vmatprep.subr.bf16.mxu0 %v4538
    %5314 = vmatpush1.bf16.msra.mxu0 %v4537
    %5315 = vmatprep.subr.bf16.mxu0 %v4546
    %5316 = vmatpush1.bf16.msra.mxu0 %v4545
    %5317 = vmatprep.subr.bf16.mxu0 %v4554
    %5318 = vmatpush1.bf16.msra.mxu0 %v4553
    %5319 = vmatprep.mubr.bf16.mxu0 %v2084
    %5320 = vmatmul.mubr.bf16.gmra.mrb[0].mxu0 %v2083
    %v5321 = vpop.f32.mrb[0].mxu0
    %v5322 = vadd.f32 %v5279, %v5321
    %v5323 = vpop.f32.mrb[0].mxu0
    %v5324 = vadd.f32 %v5281, %v5323
    %v5325 = vpop.f32.mrb[0].mxu0
    %v5326 = vadd.f32 %v5283, %v5325
    %v5327 = vpop.f32.mrb[0].mxu0
    %v5328 = vadd.f32 %v5285, %v5327
    %5329 = vdwg.mxu0
    %5330 = vmatprep.subr.bf16.mxu0 %v4562
    %5331 = vmatpush1.bf16.msra.mxu0 %v4561
    %5332 = vmatprep.subr.bf16.mxu0 %v4570
    %5333 = vmatpush1.bf16.msra.mxu0 %v4569
    %5334 = vmatprep.subr.bf16.mxu0 %v4578
    %5335 = vmatpush1.bf16.msra.mxu0 %v4577
    %5336 = vmatprep.subr.bf16.mxu0 %v4586
    %5337 = vmatpush1.bf16.msra.mxu0 %v4585
    %5338 = vmatprep.subr.bf16.mxu0 %v4594
    %5339 = vmatpush1.bf16.msra.mxu0 %v4593
    %5340 = vmatprep.subr.bf16.mxu0 %v4602
    %5341 = vmatpush1.bf16.msra.mxu0 %v4601
    %5342 = vmatprep.subr.bf16.mxu0 %v4610
    %5343 = vmatpush1.bf16.msra.mxu0 %v4609
    %5344 = vmatprep.subr.bf16.mxu0 %v4618
    %5345 = vmatpush1.bf16.msra.mxu0 %v4617
    %5346 = vmatprep.subr.bf16.mxu0 %v4626
    %5347 = vmatpush1.bf16.msra.mxu0 %v4625
    %5348 = vmatprep.subr.bf16.mxu0 %v4634
    %5349 = vmatpush1.bf16.msra.mxu0 %v4633
    %5350 = vmatprep.subr.bf16.mxu0 %v4642
    %5351 = vmatpush1.bf16.msra.mxu0 %v4641
    %5352 = vmatprep.subr.bf16.mxu0 %v4650
    %5353 = vmatpush1.bf16.msra.mxu0 %v4649
    %5354 = vmatprep.subr.bf16.mxu0 %v4658
    %5355 = vmatpush1.bf16.msra.mxu0 %v4657
    %5356 = vmatprep.subr.bf16.mxu0 %v4666
    %5357 = vmatpush1.bf16.msra.mxu0 %v4665
    %5358 = vmatprep.subr.bf16.mxu0 %v4674
    %5359 = vmatpush1.bf16.msra.mxu0 %v4673
    %5360 = vmatprep.subr.bf16.mxu0 %v4682
    %5361 = vmatpush1.bf16.msra.mxu0 %v4681
    %5362 = vmatprep.mubr.bf16.mxu0 %v2086
    %5363 = vmatmul.mubr.bf16.gmra.mrb[0].mxu0 %v2085
    %v5364 = vpop.f32.mrb[0].mxu0
    %v5365 = vadd.f32 %v5322, %v5364
    %v5366 = vpop.f32.mrb[0].mxu0
    %v5367 = vadd.f32 %v5324, %v5366
    %v5368 = vpop.f32.mrb[0].mxu0
    %v5369 = vadd.f32 %v5326, %v5368
    %v5370 = vpop.f32.mrb[0].mxu0
    %v5371 = vadd.f32 %v5328, %v5370
    %5372 = vdwg.mxu0
    %5373 = vmatprep.subr.bf16.mxu0 %v4180
    %5374 = vmatpush1.bf16.msra.mxu0 %v4179
    %5375 = vmatprep.subr.bf16.mxu0 %v4188
    %5376 = vmatpush1.bf16.msra.mxu0 %v4187
    %5377 = vmatprep.subr.bf16.mxu0 %v4196
    %5378 = vmatpush1.bf16.msra.mxu0 %v4195
    %5379 = vmatprep.subr.bf16.mxu0 %v4204
    %5380 = vmatpush1.bf16.msra.mxu0 %v4203
    %5381 = vmatprep.subr.bf16.mxu0 %v4212
    %5382 = vmatpush1.bf16.msra.mxu0 %v4211
    %5383 = vmatprep.subr.bf16.mxu0 %v4220
    %5384 = vmatpush1.bf16.msra.mxu0 %v4219
    %5385 = vmatprep.subr.bf16.mxu0 %v4228
    %5386 = vmatpush1.bf16.msra.mxu0 %v4227
    %5387 = vmatprep.subr.bf16.mxu0 %v4236
    %5388 = vmatpush1.bf16.msra.mxu0 %v4235
    %5389 = vmatprep.subr.bf16.mxu0 %v4244
    %5390 = vmatpush1.bf16.msra.mxu0 %v4243
    %5391 = vmatprep.subr.bf16.mxu0 %v4252
    %5392 = vmatpush1.bf16.msra.mxu0 %v4251
    %5393 = vmatprep.subr.bf16.mxu0 %v4260
    %5394 = vmatpush1.bf16.msra.mxu0 %v4259
    %5395 = vmatprep.subr.bf16.mxu0 %v4268
    %5396 = vmatpush1.bf16.msra.mxu0 %v4267
    %5397 = vmatprep.subr.bf16.mxu0 %v4276
    %5398 = vmatpush1.bf16.msra.mxu0 %v4275
    %5399 = vmatprep.subr.bf16.mxu0 %v4284
    %5400 = vmatpush1.bf16.msra.mxu0 %v4283
    %5401 = vmatprep.subr.bf16.mxu0 %v4292
    %5402 = vmatpush1.bf16.msra.mxu0 %v4291
    %5403 = vmatprep.subr.bf16.mxu0 %v4300
    %5404 = vmatpush1.bf16.msra.mxu0 %v4299
    %5405 = vmatprep.mubr.bf16.mxu0 %v2080
    %5406 = vmatmul.mubr.bf16.gmra.mrb[0].mxu0 %v2079
    %v5407 = vpop.f32.mrb[0].mxu0
    %v5408 = vadd.f32 %v2612, %v5407
    %v5409 = vpop.f32.mrb[0].mxu0
    %v5410 = vadd.f32 %v2616, %v5409
    %v5411 = vpop.f32.mrb[0].mxu0
    %v5412 = vadd.f32 %v2612, %v5411
    %v5413 = vpop.f32.mrb[0].mxu0
    %v5414 = vadd.f32 %v2616, %v5413
    %5415 = vdwg.mxu0
    %5416 = vmatprep.subr.bf16.mxu0 %v4308
    %5417 = vmatpush1.bf16.msra.mxu0 %v4307
    %5418 = vmatprep.subr.bf16.mxu0 %v4316
    %5419 = vmatpush1.bf16.msra.mxu0 %v4315
    %5420 = vmatprep.subr.bf16.mxu0 %v4324
    %5421 = vmatpush1.bf16.msra.mxu0 %v4323
    %5422 = vmatprep.subr.bf16.mxu0 %v4332
    %5423 = vmatpush1.bf16.msra.mxu0 %v4331
    %5424 = vmatprep.subr.bf16.mxu0 %v4340
    %5425 = vmatpush1.bf16.msra.mxu0 %v4339
    %5426 = vmatprep.subr.bf16.mxu0 %v4348
    %5427 = vmatpush1.bf16.msra.mxu0 %v4347
    %5428 = vmatprep.subr.bf16.mxu0 %v4356
    %5429 = vmatpush1.bf16.msra.mxu0 %v4355
    %5430 = vmatprep.subr.bf16.mxu0 %v4364
    %5431 = vmatpush1.bf16.msra.mxu0 %v4363
    %5432 = vmatprep.subr.bf16.mxu0 %v4372
    %5433 = vmatpush1.bf16.msra.mxu0 %v4371
    %5434 = vmatprep.subr.bf16.mxu0 %v4380
    %5435 = vmatpush1.bf16.msra.mxu0 %v4379
    %5436 = vmatprep.subr.bf16.mxu0 %v4388
    %5437 = vmatpush1.bf16.msra.mxu0 %v4387
    %5438 = vmatprep.subr.bf16.mxu0 %v4396
    %5439 = vmatpush1.bf16.msra.mxu0 %v4395
    %5440 = vmatprep.subr.bf16.mxu0 %v4404
    %5441 = vmatpush1.bf16.msra.mxu0 %v4403
    %5442 = vmatprep.subr.bf16.mxu0 %v4412
    %5443 = vmatpush1.bf16.msra.mxu0 %v4411
    %5444 = vmatprep.subr.bf16.mxu0 %v4420
    %5445 = vmatpush1.bf16.msra.mxu0 %v4419
    %5446 = vmatprep.subr.bf16.mxu0 %v4428
    %5447 = vmatpush1.bf16.msra.mxu0 %v4427
    %5448 = vmatprep.mubr.bf16.mxu0 %v2082
    %5449 = vmatmul.mubr.bf16.gmra.mrb[0].mxu0 %v2081
    %v5450 = vpop.f32.mrb[0].mxu0
    %v5451 = vadd.f32 %v5408, %v5450
    %v5452 = vpop.f32.mrb[0].mxu0
    %v5453 = vadd.f32 %v5410, %v5452
    %v5454 = vpop.f32.mrb[0].mxu0
    %v5455 = vadd.f32 %v5412, %v5454
    %v5456 = vpop.f32.mrb[0].mxu0
    %v5457 = vadd.f32 %v5414, %v5456
    %5458 = vdwg.mxu0
    %5459 = vmatprep.subr.bf16.mxu0 %v4436
    %5460 = vmatpush1.bf16.msra.mxu0 %v4435
    %5461 = vmatprep.subr.bf16.mxu0 %v4444
    %5462 = vmatpush1.bf16.msra.mxu0 %v4443
    %5463 = vmatprep.subr.bf16.mxu0 %v4452
    %5464 = vmatpush1.bf16.msra.mxu0 %v4451
    %5465 = vmatprep.subr.bf16.mxu0 %v4460
    %5466 = vmatpush1.bf16.msra.mxu0 %v4459
    %5467 = vmatprep.subr.bf16.mxu0 %v4468
    %5468 = vmatpush1.bf16.msra.mxu0 %v4467
    %5469 = vmatprep.subr.bf16.mxu0 %v4476
    %5470 = vmatpush1.bf16.msra.mxu0 %v4475
    %5471 = vmatprep.subr.bf16.mxu0 %v4484
    %5472 = vmatpush1.bf16.msra.mxu0 %v4483
    %5473 = vmatprep.subr.bf16.mxu0 %v4492
    %5474 = vmatpush1.bf16.msra.mxu0 %v4491
    %5475 = vmatprep.subr.bf16.mxu0 %v4500
    %5476 = vmatpush1.bf16.msra.mxu0 %v4499
    %5477 = vmatprep.subr.bf16.mxu0 %v4508
    %5478 = vmatpush1.bf16.msra.mxu0 %v4507
    %5479 = vmatprep.subr.bf16.mxu0 %v4516
    %5480 = vmatpush1.bf16.msra.mxu0 %v4515
    %5481 = vmatprep.subr.bf16.mxu0 %v4524
    %5482 = vmatpush1.bf16.msra.mxu0 %v4523
    %5483 = vmatprep.subr.bf16.mxu0 %v4532
    %5484 = vmatpush1.bf16.msra.mxu0 %v4531
    %5485 = vmatprep.subr.bf16.mxu0 %v4540
    %5486 = vmatpush1.bf16.msra.mxu0 %v4539
    %5487 = vmatprep.subr.bf16.mxu0 %v4548
    %5488 = vmatpush1.bf16.msra.mxu0 %v4547
    %5489 = vmatprep.subr.bf16.mxu0 %v4556
    %5490 = vmatpush1.bf16.msra.mxu0 %v4555
    %5491 = vmatprep.mubr.bf16.mxu0 %v2084
    %5492 = vmatmul.mubr.bf16.gmra.mrb[0].mxu0 %v2083
    %v5493 = vpop.f32.mrb[0].mxu0
    %v5494 = vadd.f32 %v5451, %v5493
    %v5495 = vpop.f32.mrb[0].mxu0
    %v5496 = vadd.f32 %v5453, %v5495
    %v5497 = vpop.f32.mrb[0].mxu0
    %v5498 = vadd.f32 %v5455, %v5497
    %v5499 = vpop.f32.mrb[0].mxu0
    %v5500 = vadd.f32 %v5457, %v5499
    %5501 = vdwg.mxu0
    %5502 = vmatprep.subr.bf16.mxu0 %v4564
    %5503 = vmatpush1.bf16.msra.mxu0 %v4563
    %5504 = vmatprep.subr.bf16.mxu0 %v4572
    %5505 = vmatpush1.bf16.msra.mxu0 %v4571
    %5506 = vmatprep.subr.bf16.mxu0 %v4580
    %5507 = vmatpush1.bf16.msra.mxu0 %v4579
    %5508 = vmatprep.subr.bf16.mxu0 %v4588
    %5509 = vmatpush1.bf16.msra.mxu0 %v4587
    %5510 = vmatprep.subr.bf16.mxu0 %v4596
    %5511 = vmatpush1.bf16.msra.mxu0 %v4595
    %5512 = vmatprep.subr.bf16.mxu0 %v4604
    %5513 = vmatpush1.bf16.msra.mxu0 %v4603
    %5514 = vmatprep.subr.bf16.mxu0 %v4612
    %5515 = vmatpush1.bf16.msra.mxu0 %v4611
    %5516 = vmatprep.subr.bf16.mxu0 %v4620
    %5517 = vmatpush1.bf16.msra.mxu0 %v4619
    %5518 = vmatprep.subr.bf16.mxu0 %v4628
    %5519 = vmatpush1.bf16.msra.mxu0 %v4627
    %5520 = vmatprep.subr.bf16.mxu0 %v4636
    %5521 = vmatpush1.bf16.msra.mxu0 %v4635
    %5522 = vmatprep.subr.bf16.mxu0 %v4644
    %5523 = vmatpush1.bf16.msra.mxu0 %v4643
    %5524 = vmatprep.subr.bf16.mxu0 %v4652
    %5525 = vmatpush1.bf16.msra.mxu0 %v4651
    %5526 = vmatprep.subr.bf16.mxu0 %v4660
    %5527 = vmatpush1.bf16.msra.mxu0 %v4659
    %5528 = vmatprep.subr.bf16.mxu0 %v4668
    %5529 = vmatpush1.bf16.msra.mxu0 %v4667
    %5530 = vmatprep.subr.bf16.mxu0 %v4676
    %5531 = vmatpush1.bf16.msra.mxu0 %v4675
    %5532 = vmatprep.subr.bf16.mxu0 %v4684
    %5533 = vmatpush1.bf16.msra.mxu0 %v4683
    %5534 = vmatprep.mubr.bf16.mxu0 %v2086
    %5535 = vmatmul.mubr.bf16.gmra.mrb[0].mxu0 %v2085
    %v5536 = vpop.f32.mrb[0].mxu0
    %v5537 = vadd.f32 %v5494, %v5536
    %v5538 = vpop.f32.mrb[0].mxu0
    %v5539 = vadd.f32 %v5496, %v5538
    %v5540 = vpop.f32.mrb[0].mxu0
    %v5541 = vadd.f32 %v5498, %v5540
    %v5542 = vpop.f32.mrb[0].mxu0
    %v5543 = vadd.f32 %v5500, %v5542
    %5544 = vdwg.mxu0
    %5545 = vmatprep.subr.bf16.mxu0 %v4182
    %5546 = vmatpush1.bf16.msra.mxu0 %v4181
    %5547 = vmatprep.subr.bf16.mxu0 %v4190
    %5548 = vmatpush1.bf16.msra.mxu0 %v4189
    %5549 = vmatprep.subr.bf16.mxu0 %v4198
    %5550 = vmatpush1.bf16.msra.mxu0 %v4197
    %5551 = vmatprep.subr.bf16.mxu0 %v4206
    %5552 = vmatpush1.bf16.msra.mxu0 %v4205
    %5553 = vmatprep.subr.bf16.mxu0 %v4214
    %5554 = vmatpush1.bf16.msra.mxu0 %v4213
    %5555 = vmatprep.subr.bf16.mxu0 %v4222
    %5556 = vmatpush1.bf16.msra.mxu0 %v4221
    %5557 = vmatprep.subr.bf16.mxu0 %v4230
    %5558 = vmatpush1.bf16.msra.mxu0 %v4229
    %5559 = vmatprep.subr.bf16.mxu0 %v4238
    %5560 = vmatpush1.bf16.msra.mxu0 %v4237
    %5561 = vmatprep.subr.bf16.mxu0 %v4246
    %5562 = vmatpush1.bf16.msra.mxu0 %v4245
    %5563 = vmatprep.subr.bf16.mxu0 %v4254
    %5564 = vmatpush1.bf16.msra.mxu0 %v4253
    %5565 = vmatprep.subr.bf16.mxu0 %v4262
    %5566 = vmatpush1.bf16.msra.mxu0 %v4261
    %5567 = vmatprep.subr.bf16.mxu0 %v4270
    %5568 = vmatpush1.bf16.msra.mxu0 %v4269
    %5569 = vmatprep.subr.bf16.mxu0 %v4278
    %5570 = vmatpush1.bf16.msra.mxu0 %v4277
    %5571 = vmatprep.subr.bf16.mxu0 %v4286
    %5572 = vmatpush1.bf16.msra.mxu0 %v4285
    %5573 = vmatprep.subr.bf16.mxu0 %v4294
    %5574 = vmatpush1.bf16.msra.mxu0 %v4293
    %5575 = vmatprep.subr.bf16.mxu0 %v4302
    %5576 = vmatpush1.bf16.msra.mxu0 %v4301
    %5577 = vmatprep.mubr.bf16.mxu0 %v2080
    %5578 = vmatmul.mubr.bf16.gmra.mrb[0].mxu0 %v2079
    %v5579 = vpop.f32.mrb[0].mxu0
    %v5580 = vadd.f32 %v2620, %v5579
    %v5581 = vpop.f32.mrb[0].mxu0
    %v5582 = vadd.f32 %v2624, %v5581
    %v5583 = vpop.f32.mrb[0].mxu0
    %v5584 = vadd.f32 %v2620, %v5583
    %v5585 = vpop.f32.mrb[0].mxu0
    %v5586 = vadd.f32 %v2624, %v5585
    %5587 = vdwg.mxu0
    %5588 = vmatprep.subr.bf16.mxu0 %v4310
    %5589 = vmatpush1.bf16.msra.mxu0 %v4309
    %5590 = vmatprep.subr.bf16.mxu0 %v4318
    %5591 = vmatpush1.bf16.msra.mxu0 %v4317
    %5592 = vmatprep.subr.bf16.mxu0 %v4326
    %5593 = vmatpush1.bf16.msra.mxu0 %v4325
    %5594 = vmatprep.subr.bf16.mxu0 %v4334
    %5595 = vmatpush1.bf16.msra.mxu0 %v4333
    %5596 = vmatprep.subr.bf16.mxu0 %v4342
    %5597 = vmatpush1.bf16.msra.mxu0 %v4341
    %5598 = vmatprep.subr.bf16.mxu0 %v4350
    %5599 = vmatpush1.bf16.msra.mxu0 %v4349
    %5600 = vmatprep.subr.bf16.mxu0 %v4358
    %5601 = vmatpush1.bf16.msra.mxu0 %v4357
    %5602 = vmatprep.subr.bf16.mxu0 %v4366
    %5603 = vmatpush1.bf16.msra.mxu0 %v4365
    %5604 = vmatprep.subr.bf16.mxu0 %v4374
    %5605 = vmatpush1.bf16.msra.mxu0 %v4373
    %5606 = vmatprep.subr.bf16.mxu0 %v4382
    %5607 = vmatpush1.bf16.msra.mxu0 %v4381
    %5608 = vmatprep.subr.bf16.mxu0 %v4390
    %5609 = vmatpush1.bf16.msra.mxu0 %v4389
    %5610 = vmatprep.subr.bf16.mxu0 %v4398
    %5611 = vmatpush1.bf16.msra.mxu0 %v4397
    %5612 = vmatprep.subr.bf16.mxu0 %v4406
    %5613 = vmatpush1.bf16.msra.mxu0 %v4405
    %5614 = vmatprep.subr.bf16.mxu0 %v4414
    %5615 = vmatpush1.bf16.msra.mxu0 %v4413
    %5616 = vmatprep.subr.bf16.mxu0 %v4422
    %5617 = vmatpush1.bf16.msra.mxu0 %v4421
    %5618 = vmatprep.subr.bf16.mxu0 %v4430
    %5619 = vmatpush1.bf16.msra.mxu0 %v4429
    %5620 = vmatprep.mubr.bf16.mxu0 %v2082
    %5621 = vmatmul.mubr.bf16.gmra.mrb[0].mxu0 %v2081
    %v5622 = vpop.f32.mrb[0].mxu0
    %v5623 = vadd.f32 %v5580, %v5622
    %v5624 = vpop.f32.mrb[0].mxu0
    %v5625 = vadd.f32 %v5582, %v5624
    %v5626 = vpop.f32.mrb[0].mxu0
    %v5627 = vadd.f32 %v5584, %v5626
    %v5628 = vpop.f32.mrb[0].mxu0
    %v5629 = vadd.f32 %v5586, %v5628
    %5630 = vdwg.mxu0
    %5631 = vmatprep.subr.bf16.mxu0 %v4438
    %5632 = vmatpush1.bf16.msra.mxu0 %v4437
    %5633 = vmatprep.subr.bf16.mxu0 %v4446
    %5634 = vmatpush1.bf16.msra.mxu0 %v4445
    %5635 = vmatprep.subr.bf16.mxu0 %v4454
    %5636 = vmatpush1.bf16.msra.mxu0 %v4453
    %5637 = vmatprep.subr.bf16.mxu0 %v4462
    %5638 = vmatpush1.bf16.msra.mxu0 %v4461
    %5639 = vmatprep.subr.bf16.mxu0 %v4470
    %5640 = vmatpush1.bf16.msra.mxu0 %v4469
    %5641 = vmatprep.subr.bf16.mxu0 %v4478
    %5642 = vmatpush1.bf16.msra.mxu0 %v4477
    %5643 = vmatprep.subr.bf16.mxu0 %v4486
    %5644 = vmatpush1.bf16.msra.mxu0 %v4485
    %5645 = vmatprep.subr.bf16.mxu0 %v4494
    %5646 = vmatpush1.bf16.msra.mxu0 %v4493
    %5647 = vmatprep.subr.bf16.mxu0 %v4502
    %5648 = vmatpush1.bf16.msra.mxu0 %v4501
    %5649 = vmatprep.subr.bf16.mxu0 %v4510
    %5650 = vmatpush1.bf16.msra.mxu0 %v4509
    %5651 = vmatprep.subr.bf16.mxu0 %v4518
    %5652 = vmatpush1.bf16.msra.mxu0 %v4517
    %5653 = vmatprep.subr.bf16.mxu0 %v4526
    %5654 = vmatpush1.bf16.msra.mxu0 %v4525
    %5655 = vmatprep.subr.bf16.mxu0 %v4534
    %5656 = vmatpush1.bf16.msra.mxu0 %v4533
    %5657 = vmatprep.subr.bf16.mxu0 %v4542
    %5658 = vmatpush1.bf16.msra.mxu0 %v4541
    %5659 = vmatprep.subr.bf16.mxu0 %v4550
    %5660 = vmatpush1.bf16.msra.mxu0 %v4549
    %5661 = vmatprep.subr.bf16.mxu0 %v4558
    %5662 = vmatpush1.bf16.msra.mxu0 %v4557
    %5663 = vmatprep.mubr.bf16.mxu0 %v2084
    %5664 = vmatmul.mubr.bf16.gmra.mrb[0].mxu0 %v2083
    %v5665 = vpop.f32.mrb[0].mxu0
    %v5666 = vadd.f32 %v5623, %v5665
    %v5667 = vpop.f32.mrb[0].mxu0
    %v5668 = vadd.f32 %v5625, %v5667
    %v5669 = vpop.f32.mrb[0].mxu0
    %v5670 = vadd.f32 %v5627, %v5669
    %v5671 = vpop.f32.mrb[0].mxu0
    %v5672 = vadd.f32 %v5629, %v5671
    %5673 = vdwg.mxu0
    %5674 = vmatprep.subr.bf16.mxu0 %v4566
    %5675 = vmatpush1.bf16.msra.mxu0 %v4565
    %5676 = vmatprep.subr.bf16.mxu0 %v4574
    %5677 = vmatpush1.bf16.msra.mxu0 %v4573
    %5678 = vmatprep.subr.bf16.mxu0 %v4582
    %5679 = vmatpush1.bf16.msra.mxu0 %v4581
    %5680 = vmatprep.subr.bf16.mxu0 %v4590
    %5681 = vmatpush1.bf16.msra.mxu0 %v4589
    %5682 = vmatprep.subr.bf16.mxu0 %v4598
    %5683 = vmatpush1.bf16.msra.mxu0 %v4597
    %5684 = vmatprep.subr.bf16.mxu0 %v4606
    %5685 = vmatpush1.bf16.msra.mxu0 %v4605
    %5686 = vmatprep.subr.bf16.mxu0 %v4614
    %5687 = vmatpush1.bf16.msra.mxu0 %v4613
    %5688 = vmatprep.subr.bf16.mxu0 %v4622
    %5689 = vmatpush1.bf16.msra.mxu0 %v4621
    %5690 = vmatprep.subr.bf16.mxu0 %v4630
    %5691 = vmatpush1.bf16.msra.mxu0 %v4629
    %5692 = vmatprep.subr.bf16.mxu0 %v4638
    %5693 = vmatpush1.bf16.msra.mxu0 %v4637
    %5694 = vmatprep.subr.bf16.mxu0 %v4646
    %5695 = vmatpush1.bf16.msra.mxu0 %v4645
    %5696 = vmatprep.subr.bf16.mxu0 %v4654
    %5697 = vmatpush1.bf16.msra.mxu0 %v4653
    %5698 = vmatprep.subr.bf16.mxu0 %v4662
    %5699 = vmatpush1.bf16.msra.mxu0 %v4661
    %5700 = vmatprep.subr.bf16.mxu0 %v4670
    %5701 = vmatpush1.bf16.msra.mxu0 %v4669
    %5702 = vmatprep.subr.bf16.mxu0 %v4678
    %5703 = vmatpush1.bf16.msra.mxu0 %v4677
    %5704 = vmatprep.subr.bf16.mxu0 %v4686
    %5705 = vmatpush1.bf16.msra.mxu0 %v4685
    %5706 = vmatprep.mubr.bf16.mxu0 %v2086
    %5707 = vmatmul.mubr.bf16.gmra.mrb[0].mxu0 %v2085
    %v5708 = vpop.f32.mrb[0].mxu0
    %v5709 = vadd.f32 %v5666, %v5708
    %v5710 = vpop.f32.mrb[0].mxu0
    %v5711 = vadd.f32 %v5668, %v5710
    %v5712 = vpop.f32.mrb[0].mxu0
    %v5713 = vadd.f32 %v5670, %v5712
    %v5714 = vpop.f32.mrb[0].mxu0
    %v5715 = vadd.f32 %v5672, %v5714
    %5716 = vdwg.mxu0
    %5717 = vmatprep.subr.bf16.mxu0 %v4184
    %5718 = vmatpush1.bf16.msra.mxu0 %v4183
    %5719 = vmatprep.subr.bf16.mxu0 %v4192
    %5720 = vmatpush1.bf16.msra.mxu0 %v4191
    %5721 = vmatprep.subr.bf16.mxu0 %v4200
    %5722 = vmatpush1.bf16.msra.mxu0 %v4199
    %5723 = vmatprep.subr.bf16.mxu0 %v4208
    %5724 = vmatpush1.bf16.msra.mxu0 %v4207
    %5725 = vmatprep.subr.bf16.mxu0 %v4216
    %5726 = vmatpush1.bf16.msra.mxu0 %v4215
    %5727 = vmatprep.subr.bf16.mxu0 %v4224
    %5728 = vmatpush1.bf16.msra.mxu0 %v4223
    %5729 = vmatprep.subr.bf16.mxu0 %v4232
    %5730 = vmatpush1.bf16.msra.mxu0 %v4231
    %5731 = vmatprep.subr.bf16.mxu0 %v4240
    %5732 = vmatpush1.bf16.msra.mxu0 %v4239
    %5733 = vmatprep.subr.bf16.mxu0 %v4248
    %5734 = vmatpush1.bf16.msra.mxu0 %v4247
    %5735 = vmatprep.subr.bf16.mxu0 %v4256
    %5736 = vmatpush1.bf16.msra.mxu0 %v4255
    %5737 = vmatprep.subr.bf16.mxu0 %v4264
    %5738 = vmatpush1.bf16.msra.mxu0 %v4263
    %5739 = vmatprep.subr.bf16.mxu0 %v4272
    %5740 = vmatpush1.bf16.msra.mxu0 %v4271
    %5741 = vmatprep.subr.bf16.mxu0 %v4280
    %5742 = vmatpush1.bf16.msra.mxu0 %v4279
    %5743 = vmatprep.subr.bf16.mxu0 %v4288
    %5744 = vmatpush1.bf16.msra.mxu0 %v4287
    %5745 = vmatprep.subr.bf16.mxu0 %v4296
    %5746 = vmatpush1.bf16.msra.mxu0 %v4295
    %5747 = vmatprep.subr.bf16.mxu0 %v4304
    %5748 = vmatpush1.bf16.msra.mxu0 %v4303
    %5749 = vmatprep.mubr.bf16.mxu0 %v2080
    %5750 = vmatmul.mubr.bf16.gmra.mrb[0].mxu0 %v2079
    %v5751 = vpop.f32.mrb[0].mxu0
    %v5752 = vadd.f32 %v2628, %v5751
    %v5753 = vpop.f32.mrb[0].mxu0
    %v5754 = vadd.f32 %v2632, %v5753
    %v5755 = vpop.f32.mrb[0].mxu0
    %v5756 = vadd.f32 %v2628, %v5755
    %v5757 = vpop.f32.mrb[0].mxu0
    %v5758 = vadd.f32 %v2632, %v5757
    %5759 = vdwg.mxu0
    %5760 = vmatprep.subr.bf16.mxu0 %v4312
    %5761 = vmatpush1.bf16.msra.mxu0 %v4311
    %5762 = vmatprep.subr.bf16.mxu0 %v4320
    %5763 = vmatpush1.bf16.msra.mxu0 %v4319
    %5764 = vmatprep.subr.bf16.mxu0 %v4328
    %5765 = vmatpush1.bf16.msra.mxu0 %v4327
    %5766 = vmatprep.subr.bf16.mxu0 %v4336
    %5767 = vmatpush1.bf16.msra.mxu0 %v4335
    %5768 = vmatprep.subr.bf16.mxu0 %v4344
    %5769 = vmatpush1.bf16.msra.mxu0 %v4343
    %5770 = vmatprep.subr.bf16.mxu0 %v4352
    %5771 = vmatpush1.bf16.msra.mxu0 %v4351
    %5772 = vmatprep.subr.bf16.mxu0 %v4360
    %5773 = vmatpush1.bf16.msra.mxu0 %v4359
    %5774 = vmatprep.subr.bf16.mxu0 %v4368
    %5775 = vmatpush1.bf16.msra.mxu0 %v4367
    %5776 = vmatprep.subr.bf16.mxu0 %v4376
    %5777 = vmatpush1.bf16.msra.mxu0 %v4375
    %5778 = vmatprep.subr.bf16.mxu0 %v4384
    %5779 = vmatpush1.bf16.msra.mxu0 %v4383
    %5780 = vmatprep.subr.bf16.mxu0 %v4392
    %5781 = vmatpush1.bf16.msra.mxu0 %v4391
    %5782 = vmatprep.subr.bf16.mxu0 %v4400
    %5783 = vmatpush1.bf16.msra.mxu0 %v4399
    %5784 = vmatprep.subr.bf16.mxu0 %v4408
    %5785 = vmatpush1.bf16.msra.mxu0 %v4407
    %5786 = vmatprep.subr.bf16.mxu0 %v4416
    %5787 = vmatpush1.bf16.msra.mxu0 %v4415
    %5788 = vmatprep.subr.bf16.mxu0 %v4424
    %5789 = vmatpush1.bf16.msra.mxu0 %v4423
    %5790 = vmatprep.subr.bf16.mxu0 %v4432
    %5791 = vmatpush1.bf16.msra.mxu0 %v4431
    %5792 = vmatprep.mubr.bf16.mxu0 %v2082
    %5793 = vmatmul.mubr.bf16.gmra.mrb[0].mxu0 %v2081
    %v5794 = vpop.f32.mrb[0].mxu0
    %v5795 = vadd.f32 %v5752, %v5794
    %v5796 = vpop.f32.mrb[0].mxu0
    %v5797 = vadd.f32 %v5754, %v5796
    %v5798 = vpop.f32.mrb[0].mxu0
    %v5799 = vadd.f32 %v5756, %v5798
    %v5800 = vpop.f32.mrb[0].mxu0
    %v5801 = vadd.f32 %v5758, %v5800
    %5802 = vdwg.mxu0
    %5803 = vmatprep.subr.bf16.mxu0 %v4440
    %5804 = vmatpush1.bf16.msra.mxu0 %v4439
    %5805 = vmatprep.subr.bf16.mxu0 %v4448
    %5806 = vmatpush1.bf16.msra.mxu0 %v4447
    %5807 = vmatprep.subr.bf16.mxu0 %v4456
    %5808 = vmatpush1.bf16.msra.mxu0 %v4455
    %5809 = vmatprep.subr.bf16.mxu0 %v4464
    %5810 = vmatpush1.bf16.msra.mxu0 %v4463
    %5811 = vmatprep.subr.bf16.mxu0 %v4472
    %5812 = vmatpush1.bf16.msra.mxu0 %v4471
    %5813 = vmatprep.subr.bf16.mxu0 %v4480
    %5814 = vmatpush1.bf16.msra.mxu0 %v4479
    %5815 = vmatprep.subr.bf16.mxu0 %v4488
    %5816 = vmatpush1.bf16.msra.mxu0 %v4487
    %5817 = vmatprep.subr.bf16.mxu0 %v4496
    %5818 = vmatpush1.bf16.msra.mxu0 %v4495
    %5819 = vmatprep.subr.bf16.mxu0 %v4504
    %5820 = vmatpush1.bf16.msra.mxu0 %v4503
    %5821 = vmatprep.subr.bf16.mxu0 %v4512
    %5822 = vmatpush1.bf16.msra.mxu0 %v4511
    %5823 = vmatprep.subr.bf16.mxu0 %v4520
    %5824 = vmatpush1.bf16.msra.mxu0 %v4519
    %5825 = vmatprep.subr.bf16.mxu0 %v4528
    %5826 = vmatpush1.bf16.msra.mxu0 %v4527
    %5827 = vmatprep.subr.bf16.mxu0 %v4536
    %5828 = vmatpush1.bf16.msra.mxu0 %v4535
    %5829 = vmatprep.subr.bf16.mxu0 %v4544
    %5830 = vmatpush1.bf16.msra.mxu0 %v4543
    %5831 = vmatprep.subr.bf16.mxu0 %v4552
    %5832 = vmatpush1.bf16.msra.mxu0 %v4551
    %5833 = vmatprep.subr.bf16.mxu0 %v4560
    %5834 = vmatpush1.bf16.msra.mxu0 %v4559
    %5835 = vmatprep.mubr.bf16.mxu0 %v2084
    %5836 = vmatmul.mubr.bf16.gmra.mrb[0].mxu0 %v2083
    %v5837 = vpop.f32.mrb[0].mxu0
    %v5838 = vadd.f32 %v5795, %v5837
    %v5839 = vpop.f32.mrb[0].mxu0
    %v5840 = vadd.f32 %v5797, %v5839
    %v5841 = vpop.f32.mrb[0].mxu0
    %v5842 = vadd.f32 %v5799, %v5841
    %v5843 = vpop.f32.mrb[0].mxu0
    %v5844 = vadd.f32 %v5801, %v5843
    %5845 = vdwg.mxu0
    %5846 = vmatprep.subr.bf16.mxu0 %v4568
    %5847 = vmatpush1.bf16.msra.mxu0 %v4567
    %5848 = vmatprep.subr.bf16.mxu0 %v4576
    %5849 = vmatpush1.bf16.msra.mxu0 %v4575
    %5850 = vmatprep.subr.bf16.mxu0 %v4584
    %5851 = vmatpush1.bf16.msra.mxu0 %v4583
    %5852 = vmatprep.subr.bf16.mxu0 %v4592
    %5853 = vmatpush1.bf16.msra.mxu0 %v4591
    %5854 = vmatprep.subr.bf16.mxu0 %v4600
    %5855 = vmatpush1.bf16.msra.mxu0 %v4599
    %5856 = vmatprep.subr.bf16.mxu0 %v4608
    %5857 = vmatpush1.bf16.msra.mxu0 %v4607
    %5858 = vmatprep.subr.bf16.mxu0 %v4616
    %5859 = vmatpush1.bf16.msra.mxu0 %v4615
    %5860 = vmatprep.subr.bf16.mxu0 %v4624
    %5861 = vmatpush1.bf16.msra.mxu0 %v4623
    %5862 = vmatprep.subr.bf16.mxu0 %v4632
    %5863 = vmatpush1.bf16.msra.mxu0 %v4631
    %5864 = vmatprep.subr.bf16.mxu0 %v4640
    %5865 = vmatpush1.bf16.msra.mxu0 %v4639
    %5866 = vmatprep.subr.bf16.mxu0 %v4648
    %5867 = vmatpush1.bf16.msra.mxu0 %v4647
    %5868 = vmatprep.subr.bf16.mxu0 %v4656
    %5869 = vmatpush1.bf16.msra.mxu0 %v4655
    %5870 = vmatprep.subr.bf16.mxu0 %v4664
    %5871 = vmatpush1.bf16.msra.mxu0 %v4663
    %5872 = vmatprep.subr.bf16.mxu0 %v4672
    %5873 = vmatpush1.bf16.msra.mxu0 %v4671
    %5874 = vmatprep.subr.bf16.mxu0 %v4680
    %5875 = vmatpush1.bf16.msra.mxu0 %v4679
    %5876 = vmatprep.subr.bf16.mxu0 %v4688
    %5877 = vmatpush1.bf16.msra.mxu0 %v4687
    %5878 = vmatprep.mubr.bf16.mxu0 %v2086
    %5879 = vmatmul.mubr.bf16.gmra.mrb[0].mxu0 %v2085
    %v5880 = vpop.f32.mrb[0].mxu0
    %v5881 = vadd.f32 %v5838, %v5880
    %v5882 = vpop.f32.mrb[0].mxu0
    %v5883 = vadd.f32 %v5840, %v5882
    %v5884 = vpop.f32.mrb[0].mxu0
    %v5885 = vadd.f32 %v5842, %v5884
    %v5886 = vpop.f32.mrb[0].mxu0
    %v5887 = vadd.f32 %v5844, %v5886
    %5888 = vdwg.mxu0
    %v5889 = vmax.f32 %v5365, 0.0
    %v5890 = vmax.f32 %v5367, 0.0
    %v5891 = vmax.f32 %v5537, 0.0
    %v5892 = vmax.f32 %v5539, 0.0
    %v5893 = vmax.f32 %v5709, 0.0
    %v5894 = vmax.f32 %v5711, 0.0
    %v5895 = vmax.f32 %v5881, 0.0
    %v5896 = vmax.f32 %v5883, 0.0
    %v5897 = vmax.f32 %v5369, 0.0
    %v5898 = vmax.f32 %v5371, 0.0
    %v5899 = vmax.f32 %v5541, 0.0
    %v5900 = vmax.f32 %v5543, 0.0
    %v5901 = vmax.f32 %v5713, 0.0
    %v5902 = vmax.f32 %v5715, 0.0
    %v5903 = vmax.f32 %v5885, 0.0
    %v5904 = vmax.f32 %v5887, 0.0
    %v5905 = vpack.c.bf16 %v5897, %v5889
    %v5906 = vpack.c.bf16 %v5898, %v5890
    %v5907 = vpack.c.bf16 %v5899, %v5891
    %v5908 = vpack.c.bf16 %v5900, %v5892
    %v5909 = vpack.c.bf16 %v5901, %v5893
    %v5910 = vpack.c.bf16 %v5902, %v5894
    %v5911 = vpack.c.bf16 %v5903, %v5895
    %v5912 = vpack.c.bf16 %v5904, %v5896
    %v5913 = vld [vmem:[#allocation11] sm:$0xf]
    %v5914 = vld [vmem:[#allocation11 + $0x4] sm:$0xf]
    %v5915 = vld [vmem:[#allocation11 + $0x8] sm:$0xf]
    %v5916 = vld [vmem:[#allocation11 + $0xc] sm:$0xf]
    %v5917 = vld [vmem:[#allocation11 + $0x10] sm:$0xf]
    %v5918 = vld [vmem:[#allocation11 + $0x14] sm:$0xf]
    %v5919 = vld [vmem:[#allocation11 + $0x18] sm:$0xf]
    %v5920 = vld [vmem:[#allocation11 + $0x1c] sm:$0xf]
    %v5921 = vld [vmem:[#allocation11 + $0x20] sm:$0xf]
    %v5922 = vld [vmem:[#allocation11 + $0x24] sm:$0xf]
    %v5923 = vld [vmem:[#allocation11 + $0x28] sm:$0xf]
    %v5924 = vld [vmem:[#allocation11 + $0x2c] sm:$0xf]
    %v5925 = vld [vmem:[#allocation11 + $0x30] sm:$0xf]
    %v5926 = vld [vmem:[#allocation11 + $0x34] sm:$0xf]
    %v5927 = vld [vmem:[#allocation11 + $0x38] sm:$0xf]
    %v5928 = vld [vmem:[#allocation11 + $0x3c] sm:$0xf]
    %v5929 = vld [vmem:[#allocation11 + $0x40] sm:$0xf]
    %v5930 = vld [vmem:[#allocation11 + $0x44] sm:$0xf]
    %v5931 = vld [vmem:[#allocation11 + $0x48] sm:$0xf]
    %v5932 = vld [vmem:[#allocation11 + $0x4c] sm:$0xf]
    %v5933 = vld [vmem:[#allocation11 + $0x50] sm:$0xf]
    %v5934 = vld [vmem:[#allocation11 + $0x54] sm:$0xf]
    %v5935 = vld [vmem:[#allocation11 + $0x58] sm:$0xf]
    %v5936 = vld [vmem:[#allocation11 + $0x5c] sm:$0xf]
    %v5937 = vld [vmem:[#allocation11 + $0x60] sm:$0xf]
    %v5938 = vld [vmem:[#allocation11 + $0x64] sm:$0xf]
    %v5939 = vld [vmem:[#allocation11 + $0x68] sm:$0xf]
    %v5940 = vld [vmem:[#allocation11 + $0x6c] sm:$0xf]
    %v5941 = vld [vmem:[#allocation11 + $0x70] sm:$0xf]
    %v5942 = vld [vmem:[#allocation11 + $0x74] sm:$0xf]
    %v5943 = vld [vmem:[#allocation11 + $0x78] sm:$0xf]
    %v5944 = vld [vmem:[#allocation11 + $0x7c] sm:$0xf]
    %v5945 = vld [vmem:[#allocation11 + $0x80] sm:$0xf]
    %v5946 = vld [vmem:[#allocation11 + $0x84] sm:$0xf]
    %v5947 = vld [vmem:[#allocation11 + $0x88] sm:$0xf]
    %v5948 = vld [vmem:[#allocation11 + $0x8c] sm:$0xf]
    %v5949 = vld [vmem:[#allocation11 + $0x90] sm:$0xf]
    %v5950 = vld [vmem:[#allocation11 + $0x94] sm:$0xf]
    %v5951 = vld [vmem:[#allocation11 + $0x98] sm:$0xf]
    %v5952 = vld [vmem:[#allocation11 + $0x9c] sm:$0xf]
    %v5953 = vld [vmem:[#allocation11 + $0xa0] sm:$0xf]
    %v5954 = vld [vmem:[#allocation11 + $0xa4] sm:$0xf]
    %v5955 = vld [vmem:[#allocation11 + $0xa8] sm:$0xf]
    %v5956 = vld [vmem:[#allocation11 + $0xac] sm:$0xf]
    %v5957 = vld [vmem:[#allocation11 + $0xb0] sm:$0xf]
    %v5958 = vld [vmem:[#allocation11 + $0xb4] sm:$0xf]
    %v5959 = vld [vmem:[#allocation11 + $0xb8] sm:$0xf]
    %v5960 = vld [vmem:[#allocation11 + $0xbc] sm:$0xf]
    %v5961 = vld [vmem:[#allocation11 + $0xc0] sm:$0xf]
    %v5962 = vld [vmem:[#allocation11 + $0xc4] sm:$0xf]
    %v5963 = vld [vmem:[#allocation11 + $0xc8] sm:$0xf]
    %v5964 = vld [vmem:[#allocation11 + $0xcc] sm:$0xf]
    %v5965 = vld [vmem:[#allocation11 + $0xd0] sm:$0xf]
    %v5966 = vld [vmem:[#allocation11 + $0xd4] sm:$0xf]
    %v5967 = vld [vmem:[#allocation11 + $0xd8] sm:$0xf]
    %v5968 = vld [vmem:[#allocation11 + $0xdc] sm:$0xf]
    %v5969 = vld [vmem:[#allocation11 + $0xe0] sm:$0xf]
    %v5970 = vld [vmem:[#allocation11 + $0xe4] sm:$0xf]
    %v5971 = vld [vmem:[#allocation11 + $0xe8] sm:$0xf]
    %v5972 = vld [vmem:[#allocation11 + $0xec] sm:$0xf]
    %v5973 = vld [vmem:[#allocation11 + $0xf0] sm:$0xf]
    %v5974 = vld [vmem:[#allocation11 + $0xf4] sm:$0xf]
    %v5975 = vld [vmem:[#allocation11 + $0xf8] sm:$0xf]
    %v5976 = vld [vmem:[#allocation11 + $0xfc] sm:$0xf]
    %v5977 = vld [vmem:[#allocation11 + $0x100] sm:$0xf]
    %v5978 = vld [vmem:[#allocation11 + $0x104] sm:$0xf]
    %v5979 = vld [vmem:[#allocation11 + $0x108] sm:$0xf]
    %v5980 = vld [vmem:[#allocation11 + $0x10c] sm:$0xf]
    %v5981 = vld [vmem:[#allocation11 + $0x110] sm:$0xf]
    %v5982 = vld [vmem:[#allocation11 + $0x114] sm:$0xf]
    %v5983 = vld [vmem:[#allocation11 + $0x118] sm:$0xf]
    %v5984 = vld [vmem:[#allocation11 + $0x11c] sm:$0xf]
    %v5985 = vld [vmem:[#allocation11 + $0x120] sm:$0xf]
    %v5986 = vld [vmem:[#allocation11 + $0x124] sm:$0xf]
    %v5987 = vld [vmem:[#allocation11 + $0x128] sm:$0xf]
    %v5988 = vld [vmem:[#allocation11 + $0x12c] sm:$0xf]
    %v5989 = vld [vmem:[#allocation11 + $0x130] sm:$0xf]
    %v5990 = vld [vmem:[#allocation11 + $0x134] sm:$0xf]
    %v5991 = vld [vmem:[#allocation11 + $0x138] sm:$0xf]
    %v5992 = vld [vmem:[#allocation11 + $0x13c] sm:$0xf]
    %v5993 = vld [vmem:[#allocation11 + $0x140] sm:$0xf]
    %v5994 = vld [vmem:[#allocation11 + $0x144] sm:$0xf]
    %v5995 = vld [vmem:[#allocation11 + $0x148] sm:$0xf]
    %v5996 = vld [vmem:[#allocation11 + $0x14c] sm:$0xf]
    %v5997 = vld [vmem:[#allocation11 + $0x150] sm:$0xf]
    %v5998 = vld [vmem:[#allocation11 + $0x154] sm:$0xf]
    %v5999 = vld [vmem:[#allocation11 + $0x158] sm:$0xf]
    %v6000 = vld [vmem:[#allocation11 + $0x15c] sm:$0xf]
    %v6001 = vld [vmem:[#allocation11 + $0x160] sm:$0xf]
    %v6002 = vld [vmem:[#allocation11 + $0x164] sm:$0xf]
    %v6003 = vld [vmem:[#allocation11 + $0x168] sm:$0xf]
    %v6004 = vld [vmem:[#allocation11 + $0x16c] sm:$0xf]
    %v6005 = vld [vmem:[#allocation11 + $0x170] sm:$0xf]
    %v6006 = vld [vmem:[#allocation11 + $0x174] sm:$0xf]
    %v6007 = vld [vmem:[#allocation11 + $0x178] sm:$0xf]
    %v6008 = vld [vmem:[#allocation11 + $0x17c] sm:$0xf]
    %v6009 = vld [vmem:[#allocation11 + $0x180] sm:$0xf]
    %v6010 = vld [vmem:[#allocation11 + $0x184] sm:$0xf]
    %v6011 = vld [vmem:[#allocation11 + $0x188] sm:$0xf]
    %v6012 = vld [vmem:[#allocation11 + $0x18c] sm:$0xf]
    %v6013 = vld [vmem:[#allocation11 + $0x190] sm:$0xf]
    %v6014 = vld [vmem:[#allocation11 + $0x194] sm:$0xf]
    %v6015 = vld [vmem:[#allocation11 + $0x198] sm:$0xf]
    %v6016 = vld [vmem:[#allocation11 + $0x19c] sm:$0xf]
    %v6017 = vld [vmem:[#allocation11 + $0x1a0] sm:$0xf]
    %v6018 = vld [vmem:[#allocation11 + $0x1a4] sm:$0xf]
    %v6019 = vld [vmem:[#allocation11 + $0x1a8] sm:$0xf]
    %v6020 = vld [vmem:[#allocation11 + $0x1ac] sm:$0xf]
    %v6021 = vld [vmem:[#allocation11 + $0x1b0] sm:$0xf]
    %v6022 = vld [vmem:[#allocation11 + $0x1b4] sm:$0xf]
    %v6023 = vld [vmem:[#allocation11 + $0x1b8] sm:$0xf]
    %v6024 = vld [vmem:[#allocation11 + $0x1bc] sm:$0xf]
    %v6025 = vld [vmem:[#allocation11 + $0x1c0] sm:$0xf]
    %v6026 = vld [vmem:[#allocation11 + $0x1c4] sm:$0xf]
    %v6027 = vld [vmem:[#allocation11 + $0x1c8] sm:$0xf]
    %v6028 = vld [vmem:[#allocation11 + $0x1cc] sm:$0xf]
    %v6029 = vld [vmem:[#allocation11 + $0x1d0] sm:$0xf]
    %v6030 = vld [vmem:[#allocation11 + $0x1d4] sm:$0xf]
    %v6031 = vld [vmem:[#allocation11 + $0x1d8] sm:$0xf]
    %v6032 = vld [vmem:[#allocation11 + $0x1dc] sm:$0xf]
    %v6033 = vld [vmem:[#allocation11 + $0x1e0] sm:$0xf]
    %v6034 = vld [vmem:[#allocation11 + $0x1e4] sm:$0xf]
    %v6035 = vld [vmem:[#allocation11 + $0x1e8] sm:$0xf]
    %v6036 = vld [vmem:[#allocation11 + $0x1ec] sm:$0xf]
    %v6037 = vld [vmem:[#allocation11 + $0x1f0] sm:$0xf]
    %v6038 = vld [vmem:[#allocation11 + $0x1f4] sm:$0xf]
    %v6039 = vld [vmem:[#allocation11 + $0x1f8] sm:$0xf]
    %v6040 = vld [vmem:[#allocation11 + $0x1fc] sm:$0xf]
    %v6041 = vld [vmem:[#allocation13] sm:$0x1]
    %v6043 = vlaneseq
    %v6044 = vshrl.u32 %v6043, 7
    %v6045 = vsub.s32 0, %v6044
    %v6046 = vrot.slane %v6041, %v6045
    %v6176 = vunpack.c.l.b16 %v5913
    %v6177 = vunpack.c.l.b16 %v5914
    %v6178 = vunpack.c.l.b16 %v5915
    %v6179 = vunpack.c.l.b16 %v5916
    %v6180 = vunpack.c.l.b16 %v5917
    %v6181 = vunpack.c.l.b16 %v5918
    %v6182 = vunpack.c.l.b16 %v5919
    %v6183 = vunpack.c.l.b16 %v5920
    %v6184 = vunpack.c.l.b16 %v5921
    %v6185 = vunpack.c.l.b16 %v5922
    %v6186 = vunpack.c.l.b16 %v5923
    %v6187 = vunpack.c.l.b16 %v5924
    %v6188 = vunpack.c.l.b16 %v5925
    %v6189 = vunpack.c.l.b16 %v5926
    %v6190 = vunpack.c.l.b16 %v5927
    %v6191 = vunpack.c.l.b16 %v5928
    %v6192 = vunpack.c.l.b16 %v5929
    %v6193 = vunpack.c.l.b16 %v5930
    %v6194 = vunpack.c.l.b16 %v5931
    %v6195 = vunpack.c.l.b16 %v5932
    %v6196 = vunpack.c.l.b16 %v5933
    %v6197 = vunpack.c.l.b16 %v5934
    %v6198 = vunpack.c.l.b16 %v5935
    %v6199 = vunpack.c.l.b16 %v5936
    %v6200 = vunpack.c.l.b16 %v5937
    %v6201 = vunpack.c.l.b16 %v5938
    %v6202 = vunpack.c.l.b16 %v5939
    %v6203 = vunpack.c.l.b16 %v5940
    %v6204 = vunpack.c.l.b16 %v5941
    %v6205 = vunpack.c.l.b16 %v5942
    %v6206 = vunpack.c.l.b16 %v5943
    %v6207 = vunpack.c.l.b16 %v5944
    %v6208 = vunpack.c.l.b16 %v5945
    %v6209 = vunpack.c.l.b16 %v5946
    %v6210 = vunpack.c.l.b16 %v5947
    %v6211 = vunpack.c.l.b16 %v5948
    %v6212 = vunpack.c.l.b16 %v5949
    %v6213 = vunpack.c.l.b16 %v5950
    %v6214 = vunpack.c.l.b16 %v5951
    %v6215 = vunpack.c.l.b16 %v5952
    %v6216 = vunpack.c.l.b16 %v5953
    %v6217 = vunpack.c.l.b16 %v5954
    %v6218 = vunpack.c.l.b16 %v5955
    %v6219 = vunpack.c.l.b16 %v5956
    %v6220 = vunpack.c.l.b16 %v5957
    %v6221 = vunpack.c.l.b16 %v5958
    %v6222 = vunpack.c.l.b16 %v5959
    %v6223 = vunpack.c.l.b16 %v5960
    %v6224 = vunpack.c.l.b16 %v5961
    %v6225 = vunpack.c.l.b16 %v5962
    %v6226 = vunpack.c.l.b16 %v5963
    %v6227 = vunpack.c.l.b16 %v5964
    %v6228 = vunpack.c.l.b16 %v5965
    %v6229 = vunpack.c.l.b16 %v5966
    %v6230 = vunpack.c.l.b16 %v5967
    %v6231 = vunpack.c.l.b16 %v5968
    %v6232 = vunpack.c.l.b16 %v5969
    %v6233 = vunpack.c.l.b16 %v5970
    %v6234 = vunpack.c.l.b16 %v5971
    %v6235 = vunpack.c.l.b16 %v5972
    %v6236 = vunpack.c.l.b16 %v5973
    %v6237 = vunpack.c.l.b16 %v5974
    %v6238 = vunpack.c.l.b16 %v5975
    %v6239 = vunpack.c.l.b16 %v5976
    %v6240 = vunpack.c.l.b16 %v5977
    %v6241 = vunpack.c.l.b16 %v5978
    %v6242 = vunpack.c.l.b16 %v5979
    %v6243 = vunpack.c.l.b16 %v5980
    %v6244 = vunpack.c.l.b16 %v5981
    %v6245 = vunpack.c.l.b16 %v5982
    %v6246 = vunpack.c.l.b16 %v5983
    %v6247 = vunpack.c.l.b16 %v5984
    %v6248 = vunpack.c.l.b16 %v5985
    %v6249 = vunpack.c.l.b16 %v5986
    %v6250 = vunpack.c.l.b16 %v5987
    %v6251 = vunpack.c.l.b16 %v5988
    %v6252 = vunpack.c.l.b16 %v5989
    %v6253 = vunpack.c.l.b16 %v5990
    %v6254 = vunpack.c.l.b16 %v5991
    %v6255 = vunpack.c.l.b16 %v5992
    %v6256 = vunpack.c.l.b16 %v5993
    %v6257 = vunpack.c.l.b16 %v5994
    %v6258 = vunpack.c.l.b16 %v5995
    %v6259 = vunpack.c.l.b16 %v5996
    %v6260 = vunpack.c.l.b16 %v5997
    %v6261 = vunpack.c.l.b16 %v5998
    %v6262 = vunpack.c.l.b16 %v5999
    %v6263 = vunpack.c.l.b16 %v6000
    %v6264 = vunpack.c.l.b16 %v6001
    %v6265 = vunpack.c.l.b16 %v6002
    %v6266 = vunpack.c.l.b16 %v6003
    %v6267 = vunpack.c.l.b16 %v6004
    %v6268 = vunpack.c.l.b16 %v6005
    %v6269 = vunpack.c.l.b16 %v6006
    %v6270 = vunpack.c.l.b16 %v6007
    %v6271 = vunpack.c.l.b16 %v6008
    %v6272 = vunpack.c.l.b16 %v6009
    %v6273 = vunpack.c.l.b16 %v6010
    %v6274 = vunpack.c.l.b16 %v6011
    %v6275 = vunpack.c.l.b16 %v6012
    %v6276 = vunpack.c.l.b16 %v6013
    %v6277 = vunpack.c.l.b16 %v6014
    %v6278 = vunpack.c.l.b16 %v6015
    %v6279 = vunpack.c.l.b16 %v6016
    %v6280 = vunpack.c.l.b16 %v6017
    %v6281 = vunpack.c.l.b16 %v6018
    %v6282 = vunpack.c.l.b16 %v6019
    %v6283 = vunpack.c.l.b16 %v6020
    %v6284 = vunpack.c.l.b16 %v6021
    %v6285 = vunpack.c.l.b16 %v6022
    %v6286 = vunpack.c.l.b16 %v6023
    %v6287 = vunpack.c.l.b16 %v6024
    %v6288 = vunpack.c.l.b16 %v6025
    %v6289 = vunpack.c.l.b16 %v6026
    %v6290 = vunpack.c.l.b16 %v6027
    %v6291 = vunpack.c.l.b16 %v6028
    %v6292 = vunpack.c.l.b16 %v6029
    %v6293 = vunpack.c.l.b16 %v6030
    %v6294 = vunpack.c.l.b16 %v6031
    %v6295 = vunpack.c.l.b16 %v6032
    %v6296 = vunpack.c.l.b16 %v6033
    %v6297 = vunpack.c.l.b16 %v6034
    %v6298 = vunpack.c.l.b16 %v6035
    %v6299 = vunpack.c.l.b16 %v6036
    %v6300 = vunpack.c.l.b16 %v6037
    %v6301 = vunpack.c.l.b16 %v6038
    %v6302 = vunpack.c.l.b16 %v6039
    %v6303 = vunpack.c.l.b16 %v6040
    %v6304 = vpack.c.b16 %v6177, %v6176
    %v6305 = vpack.c.b16 %v6179, %v6178
    %v6306 = vpack.c.b16 %v6181, %v6180
    %v6307 = vpack.c.b16 %v6183, %v6182
    %v6308 = vpack.c.b16 %v6185, %v6184
    %v6309 = vpack.c.b16 %v6187, %v6186
    %v6310 = vpack.c.b16 %v6189, %v6188
    %v6311 = vpack.c.b16 %v6191, %v6190
    %v6312 = vpack.c.b16 %v6193, %v6192
    %v6313 = vpack.c.b16 %v6195, %v6194
    %v6314 = vpack.c.b16 %v6197, %v6196
    %v6315 = vpack.c.b16 %v6199, %v6198
    %v6316 = vpack.c.b16 %v6201, %v6200
    %v6317 = vpack.c.b16 %v6203, %v6202
    %v6318 = vpack.c.b16 %v6205, %v6204
    %v6319 = vpack.c.b16 %v6207, %v6206
    %v6320 = vpack.c.b16 %v6209, %v6208
    %v6321 = vpack.c.b16 %v6211, %v6210
    %v6322 = vpack.c.b16 %v6213, %v6212
    %v6323 = vpack.c.b16 %v6215, %v6214
    %v6324 = vpack.c.b16 %v6217, %v6216
    %v6325 = vpack.c.b16 %v6219, %v6218
    %v6326 = vpack.c.b16 %v6221, %v6220
    %v6327 = vpack.c.b16 %v6223, %v6222
    %v6328 = vpack.c.b16 %v6225, %v6224
    %v6329 = vpack.c.b16 %v6227, %v6226
    %v6330 = vpack.c.b16 %v6229, %v6228
    %v6331 = vpack.c.b16 %v6231, %v6230
    %v6332 = vpack.c.b16 %v6233, %v6232
    %v6333 = vpack.c.b16 %v6235, %v6234
    %v6334 = vpack.c.b16 %v6237, %v6236
    %v6335 = vpack.c.b16 %v6239, %v6238
    %v6336 = vpack.c.b16 %v6241, %v6240
    %v6337 = vpack.c.b16 %v6243, %v6242
    %v6338 = vpack.c.b16 %v6245, %v6244
    %v6339 = vpack.c.b16 %v6247, %v6246
    %v6340 = vpack.c.b16 %v6249, %v6248
    %v6341 = vpack.c.b16 %v6251, %v6250
    %v6342 = vpack.c.b16 %v6253, %v6252
    %v6343 = vpack.c.b16 %v6255, %v6254
    %v6344 = vpack.c.b16 %v6257, %v6256
    %v6345 = vpack.c.b16 %v6259, %v6258
    %v6346 = vpack.c.b16 %v6261, %v6260
    %v6347 = vpack.c.b16 %v6263, %v6262
    %v6348 = vpack.c.b16 %v6265, %v6264
    %v6349 = vpack.c.b16 %v6267, %v6266
    %v6350 = vpack.c.b16 %v6269, %v6268
    %v6351 = vpack.c.b16 %v6271, %v6270
    %v6352 = vpack.c.b16 %v6273, %v6272
    %v6353 = vpack.c.b16 %v6275, %v6274
    %v6354 = vpack.c.b16 %v6277, %v6276
    %v6355 = vpack.c.b16 %v6279, %v6278
    %v6356 = vpack.c.b16 %v6281, %v6280
    %v6357 = vpack.c.b16 %v6283, %v6282
    %v6358 = vpack.c.b16 %v6285, %v6284
    %v6359 = vpack.c.b16 %v6287, %v6286
    %v6360 = vpack.c.b16 %v6289, %v6288
    %v6361 = vpack.c.b16 %v6291, %v6290
    %v6362 = vpack.c.b16 %v6293, %v6292
    %v6363 = vpack.c.b16 %v6295, %v6294
    %v6364 = vpack.c.b16 %v6297, %v6296
    %v6365 = vpack.c.b16 %v6299, %v6298
    %v6366 = vpack.c.b16 %v6301, %v6300
    %v6367 = vpack.c.b16 %v6303, %v6302
    %6432 = vmatprep.subr.bf16.mxu0 0
    %6433 = vmatpush1.bf16.msra.mxu0 %v6304
    %6434 = vmatprep.subr.bf16.mxu0 0
    %6435 = vmatpush1.bf16.msra.mxu0 %v6305
    %6436 = vmatprep.subr.bf16.mxu0 0
    %6437 = vmatpush1.bf16.msra.mxu0 %v6306
    %6438 = vmatprep.subr.bf16.mxu0 0
    %6439 = vmatpush1.bf16.msra.mxu0 %v6307
    %6440 = vmatprep.subr.bf16.mxu0 0
    %6441 = vmatpush1.bf16.msra.mxu0 %v6308
    %6442 = vmatprep.subr.bf16.mxu0 0
    %6443 = vmatpush1.bf16.msra.mxu0 %v6309
    %6444 = vmatprep.subr.bf16.mxu0 0
    %6445 = vmatpush1.bf16.msra.mxu0 %v6310
    %6446 = vmatprep.subr.bf16.mxu0 0
    %6447 = vmatpush1.bf16.msra.mxu0 %v6311
    %6448 = vmatprep.subr.bf16.mxu0 0
    %6449 = vmatpush1.bf16.msra.mxu0 %v6312
    %6450 = vmatprep.subr.bf16.mxu0 0
    %6451 = vmatpush1.bf16.msra.mxu0 %v6313
    %6452 = vmatprep.subr.bf16.mxu0 0
    %6453 = vmatpush1.bf16.msra.mxu0 %v6314
    %6454 = vmatprep.subr.bf16.mxu0 0
    %6455 = vmatpush1.bf16.msra.mxu0 %v6315
    %6456 = vmatprep.subr.bf16.mxu0 0
    %6457 = vmatpush1.bf16.msra.mxu0 %v6316
    %6458 = vmatprep.subr.bf16.mxu0 0
    %6459 = vmatpush1.bf16.msra.mxu0 %v6317
    %6460 = vmatprep.subr.bf16.mxu0 0
    %6461 = vmatpush1.bf16.msra.mxu0 %v6318
    %6462 = vmatprep.subr.bf16.mxu0 0
    %6463 = vmatpush1.bf16.msra.mxu0 %v6319
    %6464 = vmatprep.mubr.bf16.mxu0 %v5906
    %6465 = vmatmul.mubr.bf16.gmra.mrb[0].mxu0 %v5905
    %v6466 = vpop.f32.mrb[0].mxu0
    %v6467 = vadd.f32 %v6046, %v6466
    %v6468 = vpop.f32.mrb[0].mxu0
    %v6469 = vpop.f32.mrb[0].mxu0
    %v6470 = vadd.f32 %v6046, %v6469
    %v6471 = vpop.f32.mrb[0].mxu0
    %6472 = vdwg.mxu0
    %6473 = vmatprep.subr.bf16.mxu0 0
    %6474 = vmatpush1.bf16.msra.mxu0 %v6320
    %6475 = vmatprep.subr.bf16.mxu0 0
    %6476 = vmatpush1.bf16.msra.mxu0 %v6321
    %6477 = vmatprep.subr.bf16.mxu0 0
    %6478 = vmatpush1.bf16.msra.mxu0 %v6322
    %6479 = vmatprep.subr.bf16.mxu0 0
    %6480 = vmatpush1.bf16.msra.mxu0 %v6323
    %6481 = vmatprep.subr.bf16.mxu0 0
    %6482 = vmatpush1.bf16.msra.mxu0 %v6324
    %6483 = vmatprep.subr.bf16.mxu0 0
    %6484 = vmatpush1.bf16.msra.mxu0 %v6325
    %6485 = vmatprep.subr.bf16.mxu0 0
    %6486 = vmatpush1.bf16.msra.mxu0 %v6326
    %6487 = vmatprep.subr.bf16.mxu0 0
    %6488 = vmatpush1.bf16.msra.mxu0 %v6327
    %6489 = vmatprep.subr.bf16.mxu0 0
    %6490 = vmatpush1.bf16.msra.mxu0 %v6328
    %6491 = vmatprep.subr.bf16.mxu0 0
    %6492 = vmatpush1.bf16.msra.mxu0 %v6329
    %6493 = vmatprep.subr.bf16.mxu0 0
    %6494 = vmatpush1.bf16.msra.mxu0 %v6330
    %6495 = vmatprep.subr.bf16.mxu0 0
    %6496 = vmatpush1.bf16.msra.mxu0 %v6331
    %6497 = vmatprep.subr.bf16.mxu0 0
    %6498 = vmatpush1.bf16.msra.mxu0 %v6332
    %6499 = vmatprep.subr.bf16.mxu0 0
    %6500 = vmatpush1.bf16.msra.mxu0 %v6333
    %6501 = vmatprep.subr.bf16.mxu0 0
    %6502 = vmatpush1.bf16.msra.mxu0 %v6334
    %6503 = vmatprep.subr.bf16.mxu0 0
    %6504 = vmatpush1.bf16.msra.mxu0 %v6335
    %6505 = vmatprep.mubr.bf16.mxu0 %v5908
    %6506 = vmatmul.mubr.bf16.gmra.mrb[0].mxu0 %v5907
    %v6507 = vpop.f32.mrb[0].mxu0
    %v6508 = vadd.f32 %v6467, %v6507
    %v6509 = vpop.f32.mrb[0].mxu0
    %v6510 = vpop.f32.mrb[0].mxu0
    %v6511 = vadd.f32 %v6470, %v6510
    %v6512 = vpop.f32.mrb[0].mxu0
    %6513 = vdwg.mxu0
    %6514 = vmatprep.subr.bf16.mxu0 0
    %6515 = vmatpush1.bf16.msra.mxu0 %v6336
    %6516 = vmatprep.subr.bf16.mxu0 0
    %6517 = vmatpush1.bf16.msra.mxu0 %v6337
    %6518 = vmatprep.subr.bf16.mxu0 0
    %6519 = vmatpush1.bf16.msra.mxu0 %v6338
    %6520 = vmatprep.subr.bf16.mxu0 0
    %6521 = vmatpush1.bf16.msra.mxu0 %v6339
    %6522 = vmatprep.subr.bf16.mxu0 0
    %6523 = vmatpush1.bf16.msra.mxu0 %v6340
    %6524 = vmatprep.subr.bf16.mxu0 0
    %6525 = vmatpush1.bf16.msra.mxu0 %v6341
    %6526 = vmatprep.subr.bf16.mxu0 0
    %6527 = vmatpush1.bf16.msra.mxu0 %v6342
    %6528 = vmatprep.subr.bf16.mxu0 0
    %6529 = vmatpush1.bf16.msra.mxu0 %v6343
    %6530 = vmatprep.subr.bf16.mxu0 0
    %6531 = vmatpush1.bf16.msra.mxu0 %v6344
    %6532 = vmatprep.subr.bf16.mxu0 0
    %6533 = vmatpush1.bf16.msra.mxu0 %v6345
    %6534 = vmatprep.subr.bf16.mxu0 0
    %6535 = vmatpush1.bf16.msra.mxu0 %v6346
    %6536 = vmatprep.subr.bf16.mxu0 0
    %6537 = vmatpush1.bf16.msra.mxu0 %v6347
    %6538 = vmatprep.subr.bf16.mxu0 0
    %6539 = vmatpush1.bf16.msra.mxu0 %v6348
    %6540 = vmatprep.subr.bf16.mxu0 0
    %6541 = vmatpush1.bf16.msra.mxu0 %v6349
    %6542 = vmatprep.subr.bf16.mxu0 0
    %6543 = vmatpush1.bf16.msra.mxu0 %v6350
    %6544 = vmatprep.subr.bf16.mxu0 0
    %6545 = vmatpush1.bf16.msra.mxu0 %v6351
    %6546 = vmatprep.mubr.bf16.mxu0 %v5910
    %6547 = vmatmul.mubr.bf16.gmra.mrb[0].mxu0 %v5909
    %v6548 = vpop.f32.mrb[0].mxu0
    %v6549 = vadd.f32 %v6508, %v6548
    %v6550 = vpop.f32.mrb[0].mxu0
    %v6551 = vpop.f32.mrb[0].mxu0
    %v6552 = vadd.f32 %v6511, %v6551
    %v6553 = vpop.f32.mrb[0].mxu0
    %6554 = vdwg.mxu0
    %6555 = vmatprep.subr.bf16.mxu0 0
    %6556 = vmatpush1.bf16.msra.mxu0 %v6352
    %6557 = vmatprep.subr.bf16.mxu0 0
    %6558 = vmatpush1.bf16.msra.mxu0 %v6353
    %6559 = vmatprep.subr.bf16.mxu0 0
    %6560 = vmatpush1.bf16.msra.mxu0 %v6354
    %6561 = vmatprep.subr.bf16.mxu0 0
    %6562 = vmatpush1.bf16.msra.mxu0 %v6355
    %6563 = vmatprep.subr.bf16.mxu0 0
    %6564 = vmatpush1.bf16.msra.mxu0 %v6356
    %6565 = vmatprep.subr.bf16.mxu0 0
    %6566 = vmatpush1.bf16.msra.mxu0 %v6357
    %6567 = vmatprep.subr.bf16.mxu0 0
    %6568 = vmatpush1.bf16.msra.mxu0 %v6358
    %6569 = vmatprep.subr.bf16.mxu0 0
    %6570 = vmatpush1.bf16.msra.mxu0 %v6359
    %6571 = vmatprep.subr.bf16.mxu0 0
    %6572 = vmatpush1.bf16.msra.mxu0 %v6360
    %6573 = vmatprep.subr.bf16.mxu0 0
    %6574 = vmatpush1.bf16.msra.mxu0 %v6361
    %6575 = vmatprep.subr.bf16.mxu0 0
    %6576 = vmatpush1.bf16.msra.mxu0 %v6362
    %6577 = vmatprep.subr.bf16.mxu0 0
    %6578 = vmatpush1.bf16.msra.mxu0 %v6363
    %6579 = vmatprep.subr.bf16.mxu0 0
    %6580 = vmatpush1.bf16.msra.mxu0 %v6364
    %6581 = vmatprep.subr.bf16.mxu0 0
    %6582 = vmatpush1.bf16.msra.mxu0 %v6365
    %6583 = vmatprep.subr.bf16.mxu0 0
    %6584 = vmatpush1.bf16.msra.mxu0 %v6366
    %6585 = vmatprep.subr.bf16.mxu0 0
    %6586 = vmatpush1.bf16.msra.mxu0 %v6367
    %6587 = vmatprep.mubr.bf16.mxu0 %v5912
    %6588 = vmatmul.mubr.bf16.gmra.mrb[0].mxu0 %v5911
    %v6589 = vpop.f32.mrb[0].mxu0
    %v6590 = vadd.f32 %v6549, %v6589
    %v6591 = vpop.f32.mrb[0].mxu0
    %v6592 = vpop.f32.mrb[0].mxu0
    %v6593 = vadd.f32 %v6552, %v6592
    %v6594 = vpop.f32.mrb[0].mxu0
    %6595 = vdwg.mxu0
    %6596 = vst [vmem:[#allocation14] sm:$0xff] %v6590
    %6597 = vst [vmem:[#allocation14 + $0x8] sm:$0xff] %v6593
    // Predicated region
    $region58: #{tpu_custom_call.1} parent=1 // pred_check
      _
    $region59: #{tpu_custom_call.1} parent=1 // pred_check_branch
      %6599 = sbr.rel (0) target = $region61
    $region60: #{tpu_custom_call.1} parent=1 // pred_region
      %s6601 = ssub.s32 256, 256
      %6602 = vsyncadd [#allocation4], %s6601
      %s6603 = sshll.u32 [#allocation14], 4
      %s6604 = int_to_ptr.vmem [resolvable:$true] %s6603
      %6609 = dma.vmem_to_hbm [thread:$0]  %s6604, 256, %s7, [#allocation4], 128, 128, 8
    $region61: #{tpu_custom_call.1} parent=1 // pred_fallthru
      _
    // Predicated region
    $region62: #{tpu_custom_call.1} parent=1 // pred_check
      _
    $region63: #{tpu_custom_call.1} parent=1 // pred_check_branch
      %6611 = sbr.rel (0) target = $region65
    $region64: #{tpu_custom_call.1} parent=1 // pred_region
      %6612 = dma.done [#allocation4], 256
    $region65: #{tpu_custom_call.1} parent=1 // pred_fallthru
      _
    %6613 = vsyncpa [#allocation3], 1
    %6614 = vsyncpa [#allocation6], 1
    %6615 = vsyncpa [#allocation9], 1
    %6616 = vsyncpa [#allocation12], 1
    %6617 = vsyncpa [#allocation4], 1

</llo_original>
